<compile_context>
chip_gen: v6e
topology: v6e:2x2x1
jax: 0.10.0
libtpu: 0.0.40
codegen_flags: <defaults>
</compile_context>

<pallas_src>
import numpy as np
import jax
import jax.numpy as jnp
from jax.experimental import pallas as pl
from jax.experimental.pallas import tpu as pltpu

N_EDGE_TYPE = 7
AVG_DEGREE = 7
BN_EPS = 1e-5


# ----------------------------------------------------------------------------
# Pallas kernels
# ----------------------------------------------------------------------------
def _conv_bn_relu_pool_kernel(x_ref, w_ref, scale_ref, bias_ref, o_ref):
    """Fused GraphConv matmul + folded eval-BN + ReLU + 8-child maxpool.

    x_ref:  [8, tile_p, Kpad] bf16  child-major neighborhood features
    w_ref:  [Kpad, cout]      bf16
    scale/bias: [1, cout]     f32   (1/avg_degree and BN folded in)
    o_ref:  [tile_p, cout]    f32   (pooled over the 8 children)
    """
    w = w_ref[...]
    scale = scale_ref[...]
    bias = bias_ref[...]
    m = None
    for j in range(8):                      # statically unrolled over octree children
        y = jnp.dot(x_ref[j], w, preferred_element_type=jnp.float32)
        y = jnp.maximum(y * scale + bias, 0.0)
        m = y if m is None else jnp.maximum(m, y)
    o_ref[...] = m


def pallas_conv_bn_relu_pool(col_cm, w, scale, bias):
    """col_cm: [8, P, Kpad] bf16 -> pooled activations [P, cout] f32."""
    _, p_rows, kpad = col_cm.shape
    cout = w.shape[1]
    # 2 parallel row blocks: shards across both TensorCores on v7x; negligible extra
    # step overhead on the single-TC v5e/v6e.
    nblk = 2 if (p_rows % 16 == 0) else 1
    tile_p = p_rows // nblk
    return pl.pallas_call(
        _conv_bn_relu_pool_kernel,
        out_shape=jax.ShapeDtypeStruct((p_rows, cout), jnp.float32),
        grid_spec=pltpu.PrefetchScalarGridSpec(
            num_scalar_prefetch=0,
            grid=(nblk,),
            in_specs=[
                pl.BlockSpec((8, tile_p, kpad), lambda i: (0, i, 0)),
                pl.BlockSpec((kpad, cout), lambda i: (0, 0)),
                pl.BlockSpec((1, cout), lambda i: (0, 0)),
                pl.BlockSpec((1, cout), lambda i: (0, 0)),
            ],
            out_specs=pl.BlockSpec((tile_p, cout), lambda i: (i, 0)),
        ),
        compiler_params=pltpu.CompilerParams(
            dimension_semantics=("parallel",)),
    )(col_cm, w, scale, bias)


def _header_kernel(feat_ref, w1_ref, s_ref, b_ref, w2_ref, b2_ref, o_ref):
    """Fused FC head: fc1 matmul + folded eval-BN + ReLU, then fc2 matmul + bias."""
    h = jnp.dot(feat_ref[...], w1_ref[...], preferred_element_type=jnp.float32)
    h = jnp.maximum(h * s_ref[...] + b_ref[...], 0.0)
    o_ref[...] = jnp.dot(h, w2_ref[...], preferred_element_type=jnp.float32) + b2_ref[...]


def pallas_header(feat, w1, scale, bias, w2, b2):
    k = feat.shape[1]
    c2 = w1.shape[1]
    nout = w2.shape[1]
    return pl.pallas_call(
        _header_kernel,
        out_shape=jax.ShapeDtypeStruct((1, nout), jnp.float32),
        grid_spec=pltpu.PrefetchScalarGridSpec(
            num_scalar_prefetch=0,
            grid=(1,),
            in_specs=[
                pl.BlockSpec((1, k), lambda i: (0, 0)),
                pl.BlockSpec((k, c2), lambda i: (0, 0)),
                pl.BlockSpec((1, c2), lambda i: (0, 0)),
                pl.BlockSpec((1, c2), lambda i: (0, 0)),
                pl.BlockSpec((c2, nout), lambda i: (0, 0)),
                pl.BlockSpec((1, nout), lambda i: (0, 0)),
            ],
            out_specs=pl.BlockSpec((1, nout), lambda i: (0, 0)),
        ),
    )(feat, w1, scale, bias, w2, b2)


# ----------------------------------------------------------------------------
# Glue: dense neighbor gather (no scatter / segment_sum in the hot path)
# ----------------------------------------------------------------------------
def build_col_child_major(x_aug, neigh_cm, kpad):
    """x_aug: [N, cin_aug]; neigh_cm: [8, P, 7] int32 (-1 = missing edge).

    Returns child-major neighborhood features [8, P, kpad] in bf16, laid out so that
    col[j, p, t*cin_aug + c] == x_aug[neighbor_of(node 8p+j, edge type t), c]
    (zero where the edge does not exist) -- identical to the reference segment_sum
    layout since a full octree has at most one edge per (node, edge_type).
    """
    idx = jnp.maximum(neigh_cm, 0)
    g = x_aug[idx]                                      # [8, P, 7, cin_aug]  dense gather
    g = jnp.where((neigh_cm >= 0)[..., None], g, 0.0)
    col = g.reshape(8, g.shape[1], -1)                  # [8, P, 7*cin_aug]
    k = col.shape[-1]
    if kpad > k:
        col = jnp.pad(col, ((0, 0), (0, 0), (0, kpad - k)))
    return col.astype(jnp.bfloat16)


# ----------------------------------------------------------------------------
# Forward pass
# ----------------------------------------------------------------------------
def dual_graph_lenet_forward(prep, data, graphs, depth):
    x = data
    for i, d in enumerate(range(depth, 2, -1)):
        g = graphs[d]
        cp = prep["convs"][i]
        x_aug = x if g["one_hot"] is None else jnp.concatenate([x, g["one_hot"]], axis=1)
        col = build_col_child_major(x_aug, g["neigh_cm"], cp["kpad"])
        # Fused GraphConv + BN + ReLU + GraphMaxpool (full octree: lnum[d-1] == 0, so the
        # downsample is a pure 8-child max over consecutive Morton rows).
        # TODO(synk): the GraphMaxpool leaf-feature merge (lnum > 0) is never exercised by
        # the synthetic full octree and is not implemented.
        x = pallas_conv_bn_relu_pool(col, cp["weight"], cp["scale"], cp["bias"])
    # FullOctree2Voxel(2) + transpose + Flatten are folded into the fc1 weight rows at
    # prep time, so the runtime path is just a flat view of the [64, C3] activations.
    feat = x.reshape(1, -1).astype(jnp.bfloat16)
    hp = prep["header"]
    # Dropout(p=0.5) -> identity in eval mode (forward-pass semantics).
    return pallas_header(feat, hp["w1"], hp["scale"], hp["bias"], hp["w2"], hp["b2"])


# ----------------------------------------------------------------------------
# Pure-JAX reference (segment_sum based, f32) for correctness check
# ----------------------------------------------------------------------------
def ref_forward(params, data, graphs, depth, perm_xyz):
    x = data
    for i, d in enumerate(range(depth, 2, -1)):
        g = graphs[d]
        p = params["convs"][i]
        n_node_type = d - 1
        xx = x
        if n_node_type > 1:
            xx = jnp.concatenate(
                [x, jax.nn.one_hot(g["node_type"], n_node_type, dtype=x.dtype)], axis=1)
        seg = g["edge_idx"][0] * N_EDGE_TYPE + g["edge_type"]
        cd = jax.ops.segment_sum(xx[g["edge_idx"][1]], seg,
                                 num_segments=xx.shape[0] * N_EDGE_TYPE)
        y = cd.reshape(xx.shape[0], -1) @ p["weight"]
        y = y / AVG_DEGREE
        y = (y - p["bn_mean"]) / jnp.sqrt(p["bn_var"] + BN_EPS) * p["bn_gamma"] + p["bn_beta"]
        y = jnp.maximum(y, 0.0)
        x = jnp.max(y.reshape(-1, 8, y.shape[1]), axis=1)
    vox = x[perm_xyz]
    feat = vox.T.reshape(1, -1)
    hp = params["header"]
    h = feat @ hp["fc1_w"]
    h = (h - hp["bn_mean"]) / jnp.sqrt(hp["bn_var"] + BN_EPS) * hp["bn_gamma"] + hp["bn_beta"]
    h = jnp.maximum(h, 0.0)
    return h @ hp["fc2_w"] + hp["fc2_b"]


# ----------------------------------------------------------------------------
# Synthetic full-octree dual graph + deterministic parameters
# ----------------------------------------------------------------------------
def morton_encode(xyz, depth):
    key = np.zeros(xyz.shape[0], dtype=np.int64)
    for b in range(depth):
        key |= ((xyz[:, 0] >> b) & 1) << (3 * b + 2)
        key |= ((xyz[:, 1] >> b) & 1) << (3 * b + 1)
        key |= ((xyz[:, 2] >> b) & 1) << (3 * b + 0)
    return key


def grid_coords(d):
    s = 2 ** d
    ax = np.arange(s)
    return np.stack(np.meshgrid(ax, ax, ax, indexing="ij"), -1).reshape(-1, 3), s


def build_full_octree_graph(d):
    coords, s = grid_coords(d)
    key = morton_encode(coords, d)
    # 7 edge types: self (0) + 6 face-neighbour directions (1..6)
    dirs = [(0, 0, 0), (1, 0, 0), (-1, 0, 0), (0, 1, 0), (0, -1, 0), (0, 0, 1), (0, 0, -1)]
    rows, cols, types = [], [], []
    for t, off in enumerate(dirs):
        nb = coords + np.array(off)
        ok = np.all((nb >= 0) & (nb < s), axis=1)
        rows.append(key[ok])
        cols.append(morton_encode(nb[ok], d))
        types.append(np.full(int(ok.sum()), t, dtype=np.int64))
    edge_idx = np.stack([np.concatenate(rows), np.concatenate(cols)]).astype(np.int32)
    edge_type = np.concatenate(types).astype(np.int32)
    return edge_idx, edge_type


def prepare_graph(edge_idx, edge_type, node_type, n_node_type, n):
    """Dense neighbor table (at most one edge per (node, edge_type) in a full octree)."""
    neigh = np.full((n, N_EDGE_TYPE), -1, dtype=np.int32)
    neigh[edge_idx[0], edge_type] = edge_idx[1]
    # child-major: neigh_cm[j, p, t] = neighbor of Morton node 8p + j along edge type t
    neigh_cm = neigh.reshape(n // 8, 8, N_EDGE_TYPE).transpose(1, 0, 2)
    one_hot = None
    if n_node_type > 1:
        one_hot = jax.nn.one_hot(node_type, n_node_type, dtype=jnp.float32)
    return dict(neigh_cm=jnp.asarray(neigh_cm), one_hot=one_hot)


def init_params(key, depth, channel_in, nout):
    channels = [2 ** max(9 - i, 2) for i in range(depth + 1)]
    channels.append(channel_in)
    keys = iter(jax.random.split(key, 64))
    convs = []
    for d in range(depth, 2, -1):
        cin, cout = channels[d + 1], channels[d]
        n_node_type = d - 1
        node_ch = n_node_type if n_node_type > 1 else 0
        k = N_EDGE_TYPE * (cin + node_ch)
        convs.append(dict(
            weight=jax.random.normal(next(keys), (k, cout), jnp.float32) / np.sqrt(k),
            bn_gamma=1.0 + 0.1 * jax.random.normal(next(keys), (cout,), jnp.float32),
            bn_beta=0.1 * jax.random.normal(next(keys), (cout,), jnp.float32),
            bn_mean=0.05 * jax.random.normal(next(keys), (cout,), jnp.float32),
            bn_var=1.0 + 0.1 * jax.random.uniform(next(keys), (cout,), jnp.float32),
        ))
    c3, c2 = channels[3], channels[2]
    hdr = dict(
        fc1_w=jax.random.normal(next(keys), (c3 * 64, c2), jnp.float32) / np.sqrt(c3 * 64),
        bn_gamma=1.0 + 0.1 * jax.random.normal(next(keys), (c2,), jnp.float32),
        bn_beta=0.1 * jax.random.normal(next(keys), (c2,), jnp.float32),
        bn_mean=0.05 * jax.random.normal(next(keys), (c2,), jnp.float32),
        bn_var=1.0 + 0.1 * jax.random.uniform(next(keys), (c2,), jnp.float32),
        fc2_w=jax.random.normal(next(keys), (c2, nout), jnp.float32) / np.sqrt(c2),
        fc2_b=0.1 * jax.random.normal(next(keys), (nout,), jnp.float32),
    )
    return dict(convs=convs, header=hdr)


def prepare_params(params, depth, perm_xyz):
    """Fold BN/avg_degree into scale/bias, pad K, cast MXU operands to bf16, and fold the
    FullOctree2Voxel permutation + transpose into the fc1 weight rows (one-time prep)."""
    convs = []
    for i, _d in enumerate(range(depth, 2, -1)):
        p = params["convs"][i]
        k = p["weight"].shape[0]
        kpad = ((k + 7) // 8) * 8                      # 49 -> 56, 238 -> 240
        w = jnp.pad(p["weight"], ((0, kpad - k), (0, 0))).astype(jnp.bfloat16)
        inv_std = 1.0 / jnp.sqrt(p["bn_var"] + BN_EPS)
        scale = (p["bn_gamma"] * inv_std / AVG_DEGREE).reshape(1, -1)
        bias = (p["bn_beta"] - p["bn_mean"] * p["bn_gamma"] * inv_std).reshape(1, -1)
        convs.append(dict(weight=w, scale=scale, bias=bias, kpad=kpad))

    hp = params["header"]
    v = int(perm_xyz.shape[0])                         # 64 voxels
    c = hp["fc1_w"].shape[0] // v                      # channels at depth 3
    perm = np.asarray(perm_xyz)                        # perm[v] = Morton node of voxel v
    inv = np.empty_like(perm)
    inv[perm] = np.arange(v)
    mm, cc = np.meshgrid(np.arange(v), np.arange(c), indexing="ij")
    idx = (cc * v + inv[mm]).reshape(-1)               # row m*C + c <- row c*V + inv[m]
    w1 = jnp.asarray(np.asarray(hp["fc1_w"])[idx]).astype(jnp.bfloat16)
    inv_std = 1.0 / jnp.sqrt(hp["bn_var"] + BN_EPS)
    scale = (hp["bn_gamma"] * inv_std).reshape(1, -1)
    bias = (hp["bn_beta"] - hp["bn_mean"] * hp["bn_gamma"] * inv_std).reshape(1, -1)
    hdr = dict(w1=w1, scale=scale, bias=bias,
               w2=hp["fc2_w"], b2=hp["fc2_b"].reshape(1, -1))
    return dict(convs=convs, header=hdr)


# ----------------------------------------------------------------------------
if __name__ == "__main__":
    depth, channel_in, nout = 4, 4, 8   # channels -> [512, 256, 128, 64, 32, 4]

    key = jax.random.PRNGKey(0)
    k_data, k_param = jax.random.split(key)

    # Input features of the finest dual-graph level (full octree -> 8^depth nodes).
    n_nodes = 8 ** depth
    data = jax.random.normal(k_data, (n_nodes, channel_in), jnp.float32)

    # Synthetic DualOctree graphs for d = depth .. 3.
    graphs = {}
    for d in range(depth, 2, -1):
        edge_idx, edge_type = build_full_octree_graph(d)
        node_type = jnp.full((8 ** d,), d - 2, jnp.int32)   # all nodes at depth d
        g = dict(edge_idx=jnp.asarray(edge_idx, jnp.int32),
                 edge_type=jnp.asarray(edge_type, jnp.int32),
                 node_type=node_type)
        g.update(prepare_graph(edge_idx, edge_type, node_type, d - 1, 8 ** d))
        graphs[d] = g

    # FullOctree2Voxel(2): z-order (Morton) node index for each (x, y, z) voxel.
    coords2, _ = grid_coords(2)
    perm_xyz = jnp.asarray(morton_encode(coords2, 2), jnp.int32)

    params = init_params(k_param, depth, channel_in, nout)
    prep = prepare_params(params, depth, perm_xyz)

    out = dual_graph_lenet_forward(prep, data, graphs, depth)
    out = jax.block_until_ready(out)
    assert out.shape == (1, nout), out.shape

    ref = jax.block_until_ready(ref_forward(params, data, graphs, depth, perm_xyz))
    np.testing.assert_allclose(np.asarray(out), np.asarray(ref), rtol=5e-2, atol=5e-2)

    print("KERNEL_OK")
</pallas_src>

<mosaic_0001>
module attributes {stable_mosaic.version = 11 : i64} {
  func.func @_conv_bn_relu_pool_kernel(%arg0: i32, %arg1: memref<8x256x56xbf16, #tpu.memory_space<vmem>>, %arg2: memref<56x32xbf16, #tpu.memory_space<vmem>>, %arg3: memref<1x32xf32, #tpu.memory_space<vmem>>, %arg4: memref<1x32xf32, #tpu.memory_space<vmem>>, %arg5: memref<256x32xf32, #tpu.memory_space<vmem>>) attributes {dimension_semantics = [#tpu.dimension_semantics<parallel>], iteration_bounds = array<i64: 2>, scalar_prefetch = 0 : i64, scratch_operands = 0 : i64, tpu.core_type = #tpu.core_type<tc>, window_params = [{transform_indices = @transform_0, window_bounds = array<i64: 8, 256, 56>}, {pipeline_mode = #tpu.pipeline_mode<synchronous>, transform_indices = @transform_1, window_bounds = array<i64: 56, 32>}, {pipeline_mode = #tpu.pipeline_mode<synchronous>, transform_indices = @transform_2, window_bounds = array<i64: 1, 32>}, {pipeline_mode = #tpu.pipeline_mode<synchronous>, transform_indices = @transform_3, window_bounds = array<i64: 1, 32>}, {transform_indices = @transform_4, window_bounds = array<i64: 256, 32>}]} {
    %c0 = arith.constant 0 : index
    %c0_0 = arith.constant 0 : index
    %0 = vector.load %arg2[%c0, %c0_0] : memref<56x32xbf16, #tpu.memory_space<vmem>>, vector<56x32xbf16>
    %c0_1 = arith.constant 0 : index
    %c0_2 = arith.constant 0 : index
    %1 = vector.load %arg3[%c0_1, %c0_2] : memref<1x32xf32, #tpu.memory_space<vmem>>, vector<1x32xf32>
    %c0_3 = arith.constant 0 : index
    %c0_4 = arith.constant 0 : index
    %2 = vector.load %arg4[%c0_3, %c0_4] : memref<1x32xf32, #tpu.memory_space<vmem>>, vector<1x32xf32>
    %c0_5 = arith.constant 0 : index
    %c0_6 = arith.constant 0 : index
    %c0_7 = arith.constant 0 : index
    %3 = vector.load %arg1[%c0_5, %c0_6, %c0_7] : memref<8x256x56xbf16, #tpu.memory_space<vmem>>, vector<1x256x56xbf16>
    %4 = vector.shape_cast %3 : vector<1x256x56xbf16> to vector<256x56xbf16>
    %cst = arith.constant dense<0.000000e+00> : vector<256x32xf32>
    %5 = tpu.matmul %4, %0, %cst {dimension_numbers = #tpu.dot_dimension_numbers<[1], [0], [0], [1], [0, 0, 1, 1], [], []>} : vector<256x56xbf16>, vector<56x32xbf16>, vector<256x32xf32> -> vector<256x32xf32>
    %6 = vector.broadcast %1 : vector<1x32xf32> to vector<256x32xf32>
    %7 = arith.mulf %5, %6 : vector<256x32xf32>
    %8 = vector.broadcast %2 : vector<1x32xf32> to vector<256x32xf32>
    %9 = arith.addf %7, %8 : vector<256x32xf32>
    %cst_8 = arith.constant 0.000000e+00 : f32
    %10 = vector.broadcast %cst_8 : f32 to vector<256x32xf32>
    %11 = arith.maximumf %9, %10 : vector<256x32xf32>
    %c1 = arith.constant 1 : index
    %c0_9 = arith.constant 0 : index
    %c0_10 = arith.constant 0 : index
    %12 = vector.load %arg1[%c1, %c0_9, %c0_10] : memref<8x256x56xbf16, #tpu.memory_space<vmem>>, vector<1x256x56xbf16>
    %13 = vector.shape_cast %12 : vector<1x256x56xbf16> to vector<256x56xbf16>
    %cst_11 = arith.constant dense<0.000000e+00> : vector<256x32xf32>
    %14 = tpu.matmul %13, %0, %cst_11 {dimension_numbers = #tpu.dot_dimension_numbers<[1], [0], [0], [1], [0, 0, 1, 1], [], []>} : vector<256x56xbf16>, vector<56x32xbf16>, vector<256x32xf32> -> vector<256x32xf32>
    %15 = vector.broadcast %1 : vector<1x32xf32> to vector<256x32xf32>
    %16 = arith.mulf %14, %15 : vector<256x32xf32>
    %17 = vector.broadcast %2 : vector<1x32xf32> to vector<256x32xf32>
    %18 = arith.addf %16, %17 : vector<256x32xf32>
    %cst_12 = arith.constant 0.000000e+00 : f32
    %19 = vector.broadcast %cst_12 : f32 to vector<256x32xf32>
    %20 = arith.maximumf %18, %19 : vector<256x32xf32>
    %21 = arith.maximumf %11, %20 : vector<256x32xf32>
    %c2 = arith.constant 2 : index
    %c0_13 = arith.constant 0 : index
    %c0_14 = arith.constant 0 : index
    %22 = vector.load %arg1[%c2, %c0_13, %c0_14] : memref<8x256x56xbf16, #tpu.memory_space<vmem>>, vector<1x256x56xbf16>
    %23 = vector.shape_cast %22 : vector<1x256x56xbf16> to vector<256x56xbf16>
    %cst_15 = arith.constant dense<0.000000e+00> : vector<256x32xf32>
    %24 = tpu.matmul %23, %0, %cst_15 {dimension_numbers = #tpu.dot_dimension_numbers<[1], [0], [0], [1], [0, 0, 1, 1], [], []>} : vector<256x56xbf16>, vector<56x32xbf16>, vector<256x32xf32> -> vector<256x32xf32>
    %25 = vector.broadcast %1 : vector<1x32xf32> to vector<256x32xf32>
    %26 = arith.mulf %24, %25 : vector<256x32xf32>
    %27 = vector.broadcast %2 : vector<1x32xf32> to vector<256x32xf32>
    %28 = arith.addf %26, %27 : vector<256x32xf32>
    %cst_16 = arith.constant 0.000000e+00 : f32
    %29 = vector.broadcast %cst_16 : f32 to vector<256x32xf32>
    %30 = arith.maximumf %28, %29 : vector<256x32xf32>
    %31 = arith.maximumf %21, %30 : vector<256x32xf32>
    %c3 = arith.constant 3 : index
    %c0_17 = arith.constant 0 : index
    %c0_18 = arith.constant 0 : index
    %32 = vector.load %arg1[%c3, %c0_17, %c0_18] : memref<8x256x56xbf16, #tpu.memory_space<vmem>>, vector<1x256x56xbf16>
    %33 = vector.shape_cast %32 : vector<1x256x56xbf16> to vector<256x56xbf16>
    %cst_19 = arith.constant dense<0.000000e+00> : vector<256x32xf32>
    %34 = tpu.matmul %33, %0, %cst_19 {dimension_numbers = #tpu.dot_dimension_numbers<[1], [0], [0], [1], [0, 0, 1, 1], [], []>} : vector<256x56xbf16>, vector<56x32xbf16>, vector<256x32xf32> -> vector<256x32xf32>
    %35 = vector.broadcast %1 : vector<1x32xf32> to vector<256x32xf32>
    %36 = arith.mulf %34, %35 : vector<256x32xf32>
    %37 = vector.broadcast %2 : vector<1x32xf32> to vector<256x32xf32>
    %38 = arith.addf %36, %37 : vector<256x32xf32>
    %cst_20 = arith.constant 0.000000e+00 : f32
    %39 = vector.broadcast %cst_20 : f32 to vector<256x32xf32>
    %40 = arith.maximumf %38, %39 : vector<256x32xf32>
    %41 = arith.maximumf %31, %40 : vector<256x32xf32>
    %c4 = arith.constant 4 : index
    %c0_21 = arith.constant 0 : index
    %c0_22 = arith.constant 0 : index
    %42 = vector.load %arg1[%c4, %c0_21, %c0_22] : memref<8x256x56xbf16, #tpu.memory_space<vmem>>, vector<1x256x56xbf16>
    %43 = vector.shape_cast %42 : vector<1x256x56xbf16> to vector<256x56xbf16>
    %cst_23 = arith.constant dense<0.000000e+00> : vector<256x32xf32>
    %44 = tpu.matmul %43, %0, %cst_23 {dimension_numbers = #tpu.dot_dimension_numbers<[1], [0], [0], [1], [0, 0, 1, 1], [], []>} : vector<256x56xbf16>, vector<56x32xbf16>, vector<256x32xf32> -> vector<256x32xf32>
    %45 = vector.broadcast %1 : vector<1x32xf32> to vector<256x32xf32>
    %46 = arith.mulf %44, %45 : vector<256x32xf32>
    %47 = vector.broadcast %2 : vector<1x32xf32> to vector<256x32xf32>
    %48 = arith.addf %46, %47 : vector<256x32xf32>
    %cst_24 = arith.constant 0.000000e+00 : f32
    %49 = vector.broadcast %cst_24 : f32 to vector<256x32xf32>
    %50 = arith.maximumf %48, %49 : vector<256x32xf32>
    %51 = arith.maximumf %41, %50 : vector<256x32xf32>
    %c5 = arith.constant 5 : index
    %c0_25 = arith.constant 0 : index
    %c0_26 = arith.constant 0 : index
    %52 = vector.load %arg1[%c5, %c0_25, %c0_26] : memref<8x256x56xbf16, #tpu.memory_space<vmem>>, vector<1x256x56xbf16>
    %53 = vector.shape_cast %52 : vector<1x256x56xbf16> to vector<256x56xbf16>
    %cst_27 = arith.constant dense<0.000000e+00> : vector<256x32xf32>
    %54 = tpu.matmul %53, %0, %cst_27 {dimension_numbers = #tpu.dot_dimension_numbers<[1], [0], [0], [1], [0, 0, 1, 1], [], []>} : vector<256x56xbf16>, vector<56x32xbf16>, vector<256x32xf32> -> vector<256x32xf32>
    %55 = vector.broadcast %1 : vector<1x32xf32> to vector<256x32xf32>
    %56 = arith.mulf %54, %55 : vector<256x32xf32>
    %57 = vector.broadcast %2 : vector<1x32xf32> to vector<256x32xf32>
    %58 = arith.addf %56, %57 : vector<256x32xf32>
    %cst_28 = arith.constant 0.000000e+00 : f32
    %59 = vector.broadcast %cst_28 : f32 to vector<256x32xf32>
    %60 = arith.maximumf %58, %59 : vector<256x32xf32>
    %61 = arith.maximumf %51, %60 : vector<256x32xf32>
    %c6 = arith.constant 6 : index
    %c0_29 = arith.constant 0 : index
    %c0_30 = arith.constant 0 : index
    %62 = vector.load %arg1[%c6, %c0_29, %c0_30] : memref<8x256x56xbf16, #tpu.memory_space<vmem>>, vector<1x256x56xbf16>
    %63 = vector.shape_cast %62 : vector<1x256x56xbf16> to vector<256x56xbf16>
    %cst_31 = arith.constant dense<0.000000e+00> : vector<256x32xf32>
    %64 = tpu.matmul %63, %0, %cst_31 {dimension_numbers = #tpu.dot_dimension_numbers<[1], [0], [0], [1], [0, 0, 1, 1], [], []>} : vector<256x56xbf16>, vector<56x32xbf16>, vector<256x32xf32> -> vector<256x32xf32>
    %65 = vector.broadcast %1 : vector<1x32xf32> to vector<256x32xf32>
    %66 = arith.mulf %64, %65 : vector<256x32xf32>
    %67 = vector.broadcast %2 : vector<1x32xf32> to vector<256x32xf32>
    %68 = arith.addf %66, %67 : vector<256x32xf32>
    %cst_32 = arith.constant 0.000000e+00 : f32
    %69 = vector.broadcast %cst_32 : f32 to vector<256x32xf32>
    %70 = arith.maximumf %68, %69 : vector<256x32xf32>
    %71 = arith.maximumf %61, %70 : vector<256x32xf32>
    %c7 = arith.constant 7 : index
    %c0_33 = arith.constant 0 : index
    %c0_34 = arith.constant 0 : index
    %72 = vector.load %arg1[%c7, %c0_33, %c0_34] : memref<8x256x56xbf16, #tpu.memory_space<vmem>>, vector<1x256x56xbf16>
    %73 = vector.shape_cast %72 : vector<1x256x56xbf16> to vector<256x56xbf16>
    %cst_35 = arith.constant dense<0.000000e+00> : vector<256x32xf32>
    %74 = tpu.matmul %73, %0, %cst_35 {dimension_numbers = #tpu.dot_dimension_numbers<[1], [0], [0], [1], [0, 0, 1, 1], [], []>} : vector<256x56xbf16>, vector<56x32xbf16>, vector<256x32xf32> -> vector<256x32xf32>
    %75 = vector.broadcast %1 : vector<1x32xf32> to vector<256x32xf32>
    %76 = arith.mulf %74, %75 : vector<256x32xf32>
    %77 = vector.broadcast %2 : vector<1x32xf32> to vector<256x32xf32>
    %78 = arith.addf %76, %77 : vector<256x32xf32>
    %cst_36 = arith.constant 0.000000e+00 : f32
    %79 = vector.broadcast %cst_36 : f32 to vector<256x32xf32>
    %80 = arith.maximumf %78, %79 : vector<256x32xf32>
    %81 = arith.maximumf %71, %80 : vector<256x32xf32>
    %c0_37 = arith.constant 0 : index
    %c0_38 = arith.constant 0 : index
    %82 = vector.load %arg5[%c0_37, %c0_38] : memref<256x32xf32, #tpu.memory_space<vmem>>, vector<256x32xf32>
    tpu.vector_store %arg5[%c0_37, %c0_38], %81 {strides = array<i32>} : memref<256x32xf32, #tpu.memory_space<vmem>>, vector<256x32xf32>,
    return
  }
  func.func @transform_0(%arg0: i32) -> (i32, i32, i32) {
    %c0_i32 = arith.constant 0 : i32
    %c0_i32_0 = arith.constant 0 : i32
    %c0_i32_1 = arith.constant 0 : i32
    return %c0_i32, %arg0, %c0_i32_0 : i32, i32, i32
  }
  func.func @transform_1(%arg0: i32) -> (i32, i32) {
    %c0_i32 = arith.constant 0 : i32
    %c0_i32_0 = arith.constant 0 : i32
    %c0_i32_1 = arith.constant 0 : i32
    return %c0_i32, %c0_i32_0 : i32, i32
  }
  func.func @transform_2(%arg0: i32) -> (i32, i32) {
    %c0_i32 = arith.constant 0 : i32
    %c0_i32_0 = arith.constant 0 : i32
    %c0_i32_1 = arith.constant 0 : i32
    return %c0_i32, %c0_i32_0 : i32, i32
  }
  func.func @transform_3(%arg0: i32) -> (i32, i32) {
    %c0_i32 = arith.constant 0 : i32
    %c0_i32_0 = arith.constant 0 : i32
    %c0_i32_1 = arith.constant 0 : i32
    return %c0_i32, %c0_i32_0 : i32, i32
  }
  func.func @transform_4(%arg0: i32) -> (i32, i32) {
    %c0_i32 = arith.constant 0 : i32
    %c0_i32_0 = arith.constant 0 : i32
    return %arg0, %c0_i32 : i32, i32
  }
}

</mosaic_0001>

<llo_original>
// kernel: tpu_custom_call.1
$region0: #{tpu_custom_call.1}
  #allocation0 [shape = 'u32[]', space=smem, size = 0x4, offset = 0x4, fixed_abs, tag = 'smem constant byte address 0x4 - core index']
  #allocation1 [shape = 'u32[144,128]{1,0:T(1,128)}', space=vmem, size = 0x12000, scoped, tag = 'internal scratch']
  %s0 = inlined_call_operand.vmem [shape: bf16[8,512,56], index: 0, kind: input, shape index: {}]
  %s1 = inlined_call_operand.vmem [shape: bf16[56,32], index: 1, kind: input, shape index: {}]
  %s2 = inlined_call_operand.vmem [shape: f32[1,32], index: 2, kind: input, shape index: {}]
  %s3 = inlined_call_operand.vmem [shape: f32[1,32], index: 3, kind: input, shape index: {}]
  %s4 = inlined_call_operand.vmem [shape: f32[512,32], index: 4, kind: output, shape index: {}]
  %s5 = sld [smem:[#allocation0]]
  $region90: #{tpu_custom_call.1} parent=0
    _
  %s7 = ssub.s32 1, %s5
  %s8 = scalar_select 0, %s7, %s5
  $region1: #{tpu_custom_call.1} parent=0
    #allocation2 [shape = 'u8[1048576]{0}', space=vmem, size = 0x100000, scoped, tag = 'input window, operand 0']
    loop: start=0, step=1, limit=4
    $region2: #{tpu_custom_call.1} parent=1 // loop_pre_header
      _
    $region3: #{tpu_custom_call.1} parent=1 // loop_header
      %s10 = sphi 0, %s14
      %p11 = scmp.ge.s32.totalorder %s10, 4
      %s20 = sphi 0, %s22
      %s23 = sphi 0, %s20
      %s24 = sphi 0, %s23
      %s40 = sphi 0, %s24
      %s44 = sphi 0, %s44
      %s46 = sphi 0, %s44
      %s47 = sphi 0, %s46
      %s61 = sphi 0, %s47
      %s65 = sphi 0, %s65
      %s67 = sphi 0, %s65
      %s68 = sphi 0, %s67
      %s82 = sphi 0, %s68
      %s86 = sphi 0, %s86
      %s88 = sphi 0, %s86
      %s89 = sphi 0, %s88
      %s103 = sphi 0, %s89
      %s109 = sphi 0, %s111
      %s112 = sphi 0, %s109
      %s113 = sphi 0, %s112
      %s129 = sphi 0, %s113
    $region4: #{tpu_custom_call.1} parent=1 // loop_header_branch
      %13 = sbr.rel (%p11) target = $region8
    $region5: #{tpu_custom_call.1} parent=1 // loop_body
      %s15 = ssub.s32 %s10, 1
      %s16 = ssub.s32 %s10, 2
      %s17 = sadd.s32 %s10, 1
      %s18 = ssub.s32 %s10, %s17
      %p19 = scmp.eq.s32.totalorder %s18, 0
      %s21 = sadd.s32 %s20, 1
      %s22 = scalar_select %p19, %s20, %s21
      %p25 = pneg %p19
      %p26 = scmp.eq.s32.totalorder %s10, 1
      %p27 = por %p25, %p26
      %p28 = scmp.ne.s32.totalorder %s20, %s23
      %p29 = scmp.eq.s32.totalorder %s10, 0
      %p30 = por %p28, %p29
      %p31 = scmp.ne.s32.totalorder %s20, %s23
      %p32 = scmp.eq.s32.totalorder %s15, 1
      %p33 = por %p31, %p32
      %p34 = scmp.ne.s32.totalorder %s23, %s24
      %p35 = scmp.eq.s32.totalorder %s15, 0
      %p36 = por %p34, %p35
      %p37 = scmp.ne.s32.totalorder %s23, %s24
      %p38 = scmp.eq.s32.totalorder %s16, 1
      %p39 = por %p37, %p38
      %p41 = scmp.ne.s32.totalorder %s24, %s40
      %p42 = scmp.eq.s32.totalorder %s16, 0
      %p43 = por %p41, %p42
      %s45 = sadd.s32 %s44, 1
      %p48 = scmp.eq.s32.totalorder %s10, 1
      %p49 = scmp.ne.s32.totalorder %s44, %s46
      %p50 = scmp.eq.s32.totalorder %s10, 0
      %p51 = por %p49, %p50
      %p52 = scmp.ne.s32.totalorder %s44, %s46
      %p53 = scmp.eq.s32.totalorder %s15, 1
      %p54 = por %p52, %p53
      %p55 = scmp.ne.s32.totalorder %s46, %s47
      %p56 = scmp.eq.s32.totalorder %s15, 0
      %p57 = por %p55, %p56
      %p58 = scmp.ne.s32.totalorder %s46, %s47
      %p59 = scmp.eq.s32.totalorder %s16, 1
      %p60 = por %p58, %p59
      %p62 = scmp.ne.s32.totalorder %s47, %s61
      %p63 = scmp.eq.s32.totalorder %s16, 0
      %p64 = por %p62, %p63
      %s66 = sadd.s32 %s65, 1
      %p69 = scmp.eq.s32.totalorder %s10, 1
      %p70 = scmp.ne.s32.totalorder %s65, %s67
      %p71 = scmp.eq.s32.totalorder %s10, 0
      %p72 = por %p70, %p71
      %p73 = scmp.ne.s32.totalorder %s65, %s67
      %p74 = scmp.eq.s32.totalorder %s15, 1
      %p75 = por %p73, %p74
      %p76 = scmp.ne.s32.totalorder %s67, %s68
      %p77 = scmp.eq.s32.totalorder %s15, 0
      %p78 = por %p76, %p77
      %p79 = scmp.ne.s32.totalorder %s67, %s68
      %p80 = scmp.eq.s32.totalorder %s16, 1
      %p81 = por %p79, %p80
      %p83 = scmp.ne.s32.totalorder %s68, %s82
      %p84 = scmp.eq.s32.totalorder %s16, 0
      %p85 = por %p83, %p84
      %s87 = sadd.s32 %s86, 1
      %p90 = scmp.eq.s32.totalorder %s10, 1
      %p91 = scmp.ne.s32.totalorder %s86, %s88
      %p92 = scmp.eq.s32.totalorder %s10, 0
      %p93 = por %p91, %p92
      %p94 = scmp.ne.s32.totalorder %s86, %s88
      %p95 = scmp.eq.s32.totalorder %s15, 1
      %p96 = por %p94, %p95
      %p97 = scmp.ne.s32.totalorder %s88, %s89
      %p98 = scmp.eq.s32.totalorder %s15, 0
      %p99 = por %p97, %p98
      %p100 = scmp.ne.s32.totalorder %s88, %s89
      %p101 = scmp.eq.s32.totalorder %s16, 1
      %p102 = por %p100, %p101
      %p104 = scmp.ne.s32.totalorder %s89, %s103
      %p105 = scmp.eq.s32.totalorder %s16, 0
      %p106 = por %p104, %p105
      %s107 = ssub.s32 %s10, %s17
      %p108 = scmp.eq.s32.totalorder %s107, 0
      %s110 = sadd.s32 %s109, 1
      %s111 = scalar_select %p108, %s109, %s110
      %p114 = pneg %p108
      %p115 = scmp.eq.s32.totalorder %s10, 1
      %p116 = por %p114, %p115
      %p117 = scmp.ne.s32.totalorder %s109, %s112
      %p118 = scmp.eq.s32.totalorder %s10, 0
      %p119 = por %p117, %p118
      %p120 = scmp.ne.s32.totalorder %s109, %s112
      %p121 = scmp.eq.s32.totalorder %s15, 1
      %p122 = por %p120, %p121
      %p123 = scmp.ne.s32.totalorder %s112, %s113
      %p124 = scmp.eq.s32.totalorder %s15, 0
      %p125 = por %p123, %p124
      %p126 = scmp.ne.s32.totalorder %s112, %s113
      %p127 = scmp.eq.s32.totalorder %s16, 1
      %p128 = por %p126, %p127
      %p130 = scmp.ne.s32.totalorder %s113, %s129
      %p131 = scmp.eq.s32.totalorder %s16, 0
      %p132 = por %p130, %p131
      %p133 = scmp.le.s32.totalorder 1, %s10
      %p134 = scmp.lt.s32.totalorder %s10, 3
      %p135 = pnand %p133, %p134
      %p136 = pneg %p135
      // Predicated region
      $region9: #{tpu_custom_call.1} parent=5 // pred_check
        _
      $region10: #{tpu_custom_call.1} parent=5 // pred_check_branch
        %138 = sbr.rel (%p135) target = $region12
      $region11: #{tpu_custom_call.1} parent=5 // pred_region
        %s139 = ssub.s32 %s10, 1
        // Predicated region
        $region13: #{tpu_custom_call.1} parent=11 // pred_check
          %p140 = pneg %p57
        $region14: #{tpu_custom_call.1} parent=11 // pred_check_branch
          %142 = sbr.rel (%p140) target = $region16
        $region15: #{tpu_custom_call.1} parent=11 // pred_region
          _
        $region16: #{tpu_custom_call.1} parent=11 // pred_fallthru
          _
        // Predicated region
        $region17: #{tpu_custom_call.1} parent=11 // pred_check
          %p143 = pneg %p78
        $region18: #{tpu_custom_call.1} parent=11 // pred_check_branch
          %145 = sbr.rel (%p143) target = $region20
        $region19: #{tpu_custom_call.1} parent=11 // pred_region
          _
        $region20: #{tpu_custom_call.1} parent=11 // pred_fallthru
          _
        // Predicated region
        $region21: #{tpu_custom_call.1} parent=11 // pred_check
          %p146 = pneg %p99
        $region22: #{tpu_custom_call.1} parent=11 // pred_check_branch
          %148 = sbr.rel (%p146) target = $region24
        $region23: #{tpu_custom_call.1} parent=11 // pred_region
          _
        $region24: #{tpu_custom_call.1} parent=11 // pred_fallthru
          _
      $region12: #{tpu_custom_call.1} parent=5 // pred_fallthru
        _
      %p149 = scmp.lt.s32.totalorder %s10, 2
      // Predicated region
      $region25: #{tpu_custom_call.1} parent=5 // pred_check
        %p150 = pneg %p149
      $region26: #{tpu_custom_call.1} parent=5 // pred_check_branch
        %152 = sbr.rel (%p150) target = $region28
      $region27: #{tpu_custom_call.1} parent=5 // pred_region
        // Predicated region
        $region29: #{tpu_custom_call.1} parent=27 // pred_check
          %p153 = pneg %p30
        $region30: #{tpu_custom_call.1} parent=27 // pred_check_branch
          %155 = sbr.rel (%p153) target = $region32
        $region31: #{tpu_custom_call.1} parent=27 // pred_region
          %s156 = sand.u32 %s20, 1
          %s157 = sand.u32 %s20, 1
          %s158 = smul.addr %s157, 1024
          %s159 = scalar_lea.vmem [#allocation2], %s158
          %s160 = smul.u32 32, %s10
          %s161 = smul.addr %s160, 4
          %s162 = scalar_lea.vmem %s0, %s161
          // Predicated region
          $region33: #{tpu_custom_call.1} parent=31 // pred_check
            _
          $region34: #{tpu_custom_call.1} parent=31 // pred_check_branch
            %164 = sbr.rel (0) target = $region36
          $region35: #{tpu_custom_call.1} parent=31 // pred_region
            // Predicated region
            $region37: #{tpu_custom_call.1} parent=35 // pred_check
              _
            $region38: #{tpu_custom_call.1} parent=35 // pred_check_branch
              %166 = sbr.rel target = $region40
            $region39: #{tpu_custom_call.1} parent=35 // pred_region
              // Predicated region
              $region52: #{tpu_custom_call.1} parent=39 // pred_check
                _
              $region53: #{tpu_custom_call.1} parent=39 // pred_check_branch
                %692 = sbr.rel (0) target = $region55
              $region54: #{tpu_custom_call.1} parent=39 // pred_region
                loop: start=0, step=1, limit=1
                $region56: #{tpu_custom_call.1} parent=54 // loop_pre_header
                  _
                $region57: #{tpu_custom_call.1} parent=54 // loop_header
                  %s694 = sphi 0, %s698
                  %p695 = scmp.ge.s32.totalorder %s694, 1
                  %s699 = sphi %s162, %s162
                  %s700 = sphi %s159, %s159
                $region58: #{tpu_custom_call.1} parent=54 // loop_header_branch
                  %697 = sbr.rel (%p695) target = $region62
                $region59: #{tpu_custom_call.1} parent=54 // loop_body
                  _
                $region60: #{tpu_custom_call.1} parent=54 // loop_footer
                  %s698 = sadd.s32 1, %s694
                $region61: #{tpu_custom_call.1} parent=54 // loop_footer_branch
                  %693 = sbr.rel target = $region57
                $region62: #{tpu_custom_call.1} parent=54 // loop_exit
                  _
                %s702 = ssub.s32 16, 1
                loop: start=0, step=1, limit=1
                $region63: #{tpu_custom_call.1} parent=54 // loop_pre_header
                  _
                $region64: #{tpu_custom_call.1} parent=54 // loop_header
                  %s704 = sphi 0, %s708
                  %p705 = scmp.ge.s32.totalorder %s704, 1
                  %s709 = sphi %s162, %s162
                  %s710 = sphi %s159, %s159
                $region65: #{tpu_custom_call.1} parent=54 // loop_header_branch
                  %707 = sbr.rel (%p705) target = $region69
                $region66: #{tpu_custom_call.1} parent=54 // loop_body
                  %v711 = vld [vmem:[%s709] sm:%s702]
                  %712 = vst [vmem:[%s710] sm:%s702] %v711
                  %v713 = vld [vmem:[%s709 + $0x4] sm:%s702]
                  %714 = vst [vmem:[%s710 + $0x4] sm:%s702] %v713
                  %v715 = vld [vmem:[%s709 + $0x8] sm:%s702]
                  %716 = vst [vmem:[%s710 + $0x8] sm:%s702] %v715
                  %v717 = vld [vmem:[%s709 + $0xc] sm:%s702]
                  %718 = vst [vmem:[%s710 + $0xc] sm:%s702] %v717
                  %v719 = vld [vmem:[%s709 + $0x10] sm:%s702]
                  %720 = vst [vmem:[%s710 + $0x10] sm:%s702] %v719
                  %v721 = vld [vmem:[%s709 + $0x14] sm:%s702]
                  %722 = vst [vmem:[%s710 + $0x14] sm:%s702] %v721
                  %v723 = vld [vmem:[%s709 + $0x18] sm:%s702]
                  %724 = vst [vmem:[%s710 + $0x18] sm:%s702] %v723
                  %v725 = vld [vmem:[%s709 + $0x1c] sm:%s702]
                  %726 = vst [vmem:[%s710 + $0x1c] sm:%s702] %v725
                  %v727 = vld [vmem:[%s709 + $0x20] sm:%s702]
                  %728 = vst [vmem:[%s710 + $0x20] sm:%s702] %v727
                  %v729 = vld [vmem:[%s709 + $0x24] sm:%s702]
                  %730 = vst [vmem:[%s710 + $0x24] sm:%s702] %v729
                  %v731 = vld [vmem:[%s709 + $0x28] sm:%s702]
                  %732 = vst [vmem:[%s710 + $0x28] sm:%s702] %v731
                  %v733 = vld [vmem:[%s709 + $0x2c] sm:%s702]
                  %734 = vst [vmem:[%s710 + $0x2c] sm:%s702] %v733
                  %v735 = vld [vmem:[%s709 + $0x30] sm:%s702]
                  %736 = vst [vmem:[%s710 + $0x30] sm:%s702] %v735
                  %v737 = vld [vmem:[%s709 + $0x34] sm:%s702]
                  %738 = vst [vmem:[%s710 + $0x34] sm:%s702] %v737
                  %v739 = vld [vmem:[%s709 + $0x38] sm:%s702]
                  %740 = vst [vmem:[%s710 + $0x38] sm:%s702] %v739
                  %v741 = vld [vmem:[%s709 + $0x3c] sm:%s702]
                  %742 = vst [vmem:[%s710 + $0x3c] sm:%s702] %v741
                  %v743 = vld [vmem:[%s709 + $0x40] sm:%s702]
                  %744 = vst [vmem:[%s710 + $0x40] sm:%s702] %v743
                  %v745 = vld [vmem:[%s709 + $0x44] sm:%s702]
                  %746 = vst [vmem:[%s710 + $0x44] sm:%s702] %v745
                  %v747 = vld [vmem:[%s709 + $0x48] sm:%s702]
                  %748 = vst [vmem:[%s710 + $0x48] sm:%s702] %v747
                  %v749 = vld [vmem:[%s709 + $0x4c] sm:%s702]
                  %750 = vst [vmem:[%s710 + $0x4c] sm:%s702] %v749
                  %v751 = vld [vmem:[%s709 + $0x50] sm:%s702]
                  %752 = vst [vmem:[%s710 + $0x50] sm:%s702] %v751
                  %v753 = vld [vmem:[%s709 + $0x54] sm:%s702]
                  %754 = vst [vmem:[%s710 + $0x54] sm:%s702] %v753
                  %v755 = vld [vmem:[%s709 + $0x58] sm:%s702]
                  %756 = vst [vmem:[%s710 + $0x58] sm:%s702] %v755
                  %v757 = vld [vmem:[%s709 + $0x5c] sm:%s702]
                  %758 = vst [vmem:[%s710 + $0x5c] sm:%s702] %v757
                  %v759 = vld [vmem:[%s709 + $0x60] sm:%s702]
                  %760 = vst [vmem:[%s710 + $0x60] sm:%s702] %v759
                  %v761 = vld [vmem:[%s709 + $0x64] sm:%s702]
                  %762 = vst [vmem:[%s710 + $0x64] sm:%s702] %v761
                  %v763 = vld [vmem:[%s709 + $0x68] sm:%s702]
                  %764 = vst [vmem:[%s710 + $0x68] sm:%s702] %v763
                  %v765 = vld [vmem:[%s709 + $0x6c] sm:%s702]
                  %766 = vst [vmem:[%s710 + $0x6c] sm:%s702] %v765
                  %v767 = vld [vmem:[%s709 + $0x70] sm:%s702]
                  %768 = vst [vmem:[%s710 + $0x70] sm:%s702] %v767
                  %v769 = vld [vmem:[%s709 + $0x74] sm:%s702]
                  %770 = vst [vmem:[%s710 + $0x74] sm:%s702] %v769
                  %v771 = vld [vmem:[%s709 + $0x78] sm:%s702]
                  %772 = vst [vmem:[%s710 + $0x78] sm:%s702] %v771
                  %v773 = vld [vmem:[%s709 + $0x7c] sm:%s702]
                  %774 = vst [vmem:[%s710 + $0x7c] sm:%s702] %v773
                  %v775 = vld [vmem:[%s709 + $0x100] sm:%s702]
                  %776 = vst [vmem:[%s710 + $0x80] sm:%s702] %v775
                  %v777 = vld [vmem:[%s709 + $0x104] sm:%s702]
                  %778 = vst [vmem:[%s710 + $0x84] sm:%s702] %v777
                  %v779 = vld [vmem:[%s709 + $0x108] sm:%s702]
                  %780 = vst [vmem:[%s710 + $0x88] sm:%s702] %v779
                  %v781 = vld [vmem:[%s709 + $0x10c] sm:%s702]
                  %782 = vst [vmem:[%s710 + $0x8c] sm:%s702] %v781
                  %v783 = vld [vmem:[%s709 + $0x110] sm:%s702]
                  %784 = vst [vmem:[%s710 + $0x90] sm:%s702] %v783
                  %v785 = vld [vmem:[%s709 + $0x114] sm:%s702]
                  %786 = vst [vmem:[%s710 + $0x94] sm:%s702] %v785
                  %v787 = vld [vmem:[%s709 + $0x118] sm:%s702]
                  %788 = vst [vmem:[%s710 + $0x98] sm:%s702] %v787
                  %v789 = vld [vmem:[%s709 + $0x11c] sm:%s702]
                  %790 = vst [vmem:[%s710 + $0x9c] sm:%s702] %v789
                  %v791 = vld [vmem:[%s709 + $0x120] sm:%s702]
                  %792 = vst [vmem:[%s710 + $0xa0] sm:%s702] %v791
                  %v793 = vld [vmem:[%s709 + $0x124] sm:%s702]
                  %794 = vst [vmem:[%s710 + $0xa4] sm:%s702] %v793
                  %v795 = vld [vmem:[%s709 + $0x128] sm:%s702]
                  %796 = vst [vmem:[%s710 + $0xa8] sm:%s702] %v795
                  %v797 = vld [vmem:[%s709 + $0x12c] sm:%s702]
                  %798 = vst [vmem:[%s710 + $0xac] sm:%s702] %v797
                  %v799 = vld [vmem:[%s709 + $0x130] sm:%s702]
                  %800 = vst [vmem:[%s710 + $0xb0] sm:%s702] %v799
                  %v801 = vld [vmem:[%s709 + $0x134] sm:%s702]
                  %802 = vst [vmem:[%s710 + $0xb4] sm:%s702] %v801
                  %v803 = vld [vmem:[%s709 + $0x138] sm:%s702]
                  %804 = vst [vmem:[%s710 + $0xb8] sm:%s702] %v803
                  %v805 = vld [vmem:[%s709 + $0x13c] sm:%s702]
                  %806 = vst [vmem:[%s710 + $0xbc] sm:%s702] %v805
                  %v807 = vld [vmem:[%s709 + $0x140] sm:%s702]
                  %808 = vst [vmem:[%s710 + $0xc0] sm:%s702] %v807
                  %v809 = vld [vmem:[%s709 + $0x144] sm:%s702]
                  %810 = vst [vmem:[%s710 + $0xc4] sm:%s702] %v809
                  %v811 = vld [vmem:[%s709 + $0x148] sm:%s702]
                  %812 = vst [vmem:[%s710 + $0xc8] sm:%s702] %v811
                  %v813 = vld [vmem:[%s709 + $0x14c] sm:%s702]
                  %814 = vst [vmem:[%s710 + $0xcc] sm:%s702] %v813
                  %v815 = vld [vmem:[%s709 + $0x150] sm:%s702]
                  %816 = vst [vmem:[%s710 + $0xd0] sm:%s702] %v815
                  %v817 = vld [vmem:[%s709 + $0x154] sm:%s702]
                  %818 = vst [vmem:[%s710 + $0xd4] sm:%s702] %v817
                  %v819 = vld [vmem:[%s709 + $0x158] sm:%s702]
                  %820 = vst [vmem:[%s710 + $0xd8] sm:%s702] %v819
                  %v821 = vld [vmem:[%s709 + $0x15c] sm:%s702]
                  %822 = vst [vmem:[%s710 + $0xdc] sm:%s702] %v821
                  %v823 = vld [vmem:[%s709 + $0x160] sm:%s702]
                  %824 = vst [vmem:[%s710 + $0xe0] sm:%s702] %v823
                  %v825 = vld [vmem:[%s709 + $0x164] sm:%s702]
                  %826 = vst [vmem:[%s710 + $0xe4] sm:%s702] %v825
                  %v827 = vld [vmem:[%s709 + $0x168] sm:%s702]
                  %828 = vst [vmem:[%s710 + $0xe8] sm:%s702] %v827
                  %v829 = vld [vmem:[%s709 + $0x16c] sm:%s702]
                  %830 = vst [vmem:[%s710 + $0xec] sm:%s702] %v829
                  %v831 = vld [vmem:[%s709 + $0x170] sm:%s702]
                  %832 = vst [vmem:[%s710 + $0xf0] sm:%s702] %v831
                  %v833 = vld [vmem:[%s709 + $0x174] sm:%s702]
                  %834 = vst [vmem:[%s710 + $0xf4] sm:%s702] %v833
                  %v835 = vld [vmem:[%s709 + $0x178] sm:%s702]
                  %836 = vst [vmem:[%s710 + $0xf8] sm:%s702] %v835
                  %v837 = vld [vmem:[%s709 + $0x17c] sm:%s702]
                  %838 = vst [vmem:[%s710 + $0xfc] sm:%s702] %v837
                  %v839 = vld [vmem:[%s709 + $0x200] sm:%s702]
                  %840 = vst [vmem:[%s710 + $0x100] sm:%s702] %v839
                  %v841 = vld [vmem:[%s709 + $0x204] sm:%s702]
                  %842 = vst [vmem:[%s710 + $0x104] sm:%s702] %v841
                  %v843 = vld [vmem:[%s709 + $0x208] sm:%s702]
                  %844 = vst [vmem:[%s710 + $0x108] sm:%s702] %v843
                  %v845 = vld [vmem:[%s709 + $0x20c] sm:%s702]
                  %846 = vst [vmem:[%s710 + $0x10c] sm:%s702] %v845
                  %v847 = vld [vmem:[%s709 + $0x210] sm:%s702]
                  %848 = vst [vmem:[%s710 + $0x110] sm:%s702] %v847
                  %v849 = vld [vmem:[%s709 + $0x214] sm:%s702]
                  %850 = vst [vmem:[%s710 + $0x114] sm:%s702] %v849
                  %v851 = vld [vmem:[%s709 + $0x218] sm:%s702]
                  %852 = vst [vmem:[%s710 + $0x118] sm:%s702] %v851
                  %v853 = vld [vmem:[%s709 + $0x21c] sm:%s702]
                  %854 = vst [vmem:[%s710 + $0x11c] sm:%s702] %v853
                  %v855 = vld [vmem:[%s709 + $0x220] sm:%s702]
                  %856 = vst [vmem:[%s710 + $0x120] sm:%s702] %v855
                  %v857 = vld [vmem:[%s709 + $0x224] sm:%s702]
                  %858 = vst [vmem:[%s710 + $0x124] sm:%s702] %v857
                  %v859 = vld [vmem:[%s709 + $0x228] sm:%s702]
                  %860 = vst [vmem:[%s710 + $0x128] sm:%s702] %v859
                  %v861 = vld [vmem:[%s709 + $0x22c] sm:%s702]
                  %862 = vst [vmem:[%s710 + $0x12c] sm:%s702] %v861
                  %v863 = vld [vmem:[%s709 + $0x230] sm:%s702]
                  %864 = vst [vmem:[%s710 + $0x130] sm:%s702] %v863
                  %v865 = vld [vmem:[%s709 + $0x234] sm:%s702]
                  %866 = vst [vmem:[%s710 + $0x134] sm:%s702] %v865
                  %v867 = vld [vmem:[%s709 + $0x238] sm:%s702]
                  %868 = vst [vmem:[%s710 + $0x138] sm:%s702] %v867
                  %v869 = vld [vmem:[%s709 + $0x23c] sm:%s702]
                  %870 = vst [vmem:[%s710 + $0x13c] sm:%s702] %v869
                  %v871 = vld [vmem:[%s709 + $0x240] sm:%s702]
                  %872 = vst [vmem:[%s710 + $0x140] sm:%s702] %v871
                  %v873 = vld [vmem:[%s709 + $0x244] sm:%s702]
                  %874 = vst [vmem:[%s710 + $0x144] sm:%s702] %v873
                  %v875 = vld [vmem:[%s709 + $0x248] sm:%s702]
                  %876 = vst [vmem:[%s710 + $0x148] sm:%s702] %v875
                  %v877 = vld [vmem:[%s709 + $0x24c] sm:%s702]
                  %878 = vst [vmem:[%s710 + $0x14c] sm:%s702] %v877
                  %v879 = vld [vmem:[%s709 + $0x250] sm:%s702]
                  %880 = vst [vmem:[%s710 + $0x150] sm:%s702] %v879
                  %v881 = vld [vmem:[%s709 + $0x254] sm:%s702]
                  %882 = vst [vmem:[%s710 + $0x154] sm:%s702] %v881
                  %v883 = vld [vmem:[%s709 + $0x258] sm:%s702]
                  %884 = vst [vmem:[%s710 + $0x158] sm:%s702] %v883
                  %v885 = vld [vmem:[%s709 + $0x25c] sm:%s702]
                  %886 = vst [vmem:[%s710 + $0x15c] sm:%s702] %v885
                  %v887 = vld [vmem:[%s709 + $0x260] sm:%s702]
                  %888 = vst [vmem:[%s710 + $0x160] sm:%s702] %v887
                  %v889 = vld [vmem:[%s709 + $0x264] sm:%s702]
                  %890 = vst [vmem:[%s710 + $0x164] sm:%s702] %v889
                  %v891 = vld [vmem:[%s709 + $0x268] sm:%s702]
                  %892 = vst [vmem:[%s710 + $0x168] sm:%s702] %v891
                  %v893 = vld [vmem:[%s709 + $0x26c] sm:%s702]
                  %894 = vst [vmem:[%s710 + $0x16c] sm:%s702] %v893
                  %v895 = vld [vmem:[%s709 + $0x270] sm:%s702]
                  %896 = vst [vmem:[%s710 + $0x170] sm:%s702] %v895
                  %v897 = vld [vmem:[%s709 + $0x274] sm:%s702]
                  %898 = vst [vmem:[%s710 + $0x174] sm:%s702] %v897
                  %v899 = vld [vmem:[%s709 + $0x278] sm:%s702]
                  %900 = vst [vmem:[%s710 + $0x178] sm:%s702] %v899
                  %v901 = vld [vmem:[%s709 + $0x27c] sm:%s702]
                  %902 = vst [vmem:[%s710 + $0x17c] sm:%s702] %v901
                  %v903 = vld [vmem:[%s709 + $0x300] sm:%s702]
                  %904 = vst [vmem:[%s710 + $0x180] sm:%s702] %v903
                  %v905 = vld [vmem:[%s709 + $0x304] sm:%s702]
                  %906 = vst [vmem:[%s710 + $0x184] sm:%s702] %v905
                  %v907 = vld [vmem:[%s709 + $0x308] sm:%s702]
                  %908 = vst [vmem:[%s710 + $0x188] sm:%s702] %v907
                  %v909 = vld [vmem:[%s709 + $0x30c] sm:%s702]
                  %910 = vst [vmem:[%s710 + $0x18c] sm:%s702] %v909
                  %v911 = vld [vmem:[%s709 + $0x310] sm:%s702]
                  %912 = vst [vmem:[%s710 + $0x190] sm:%s702] %v911
                  %v913 = vld [vmem:[%s709 + $0x314] sm:%s702]
                  %914 = vst [vmem:[%s710 + $0x194] sm:%s702] %v913
                  %v915 = vld [vmem:[%s709 + $0x318] sm:%s702]
                  %916 = vst [vmem:[%s710 + $0x198] sm:%s702] %v915
                  %v917 = vld [vmem:[%s709 + $0x31c] sm:%s702]
                  %918 = vst [vmem:[%s710 + $0x19c] sm:%s702] %v917
                  %v919 = vld [vmem:[%s709 + $0x320] sm:%s702]
                  %920 = vst [vmem:[%s710 + $0x1a0] sm:%s702] %v919
                  %v921 = vld [vmem:[%s709 + $0x324] sm:%s702]
                  %922 = vst [vmem:[%s710 + $0x1a4] sm:%s702] %v921
                  %v923 = vld [vmem:[%s709 + $0x328] sm:%s702]
                  %924 = vst [vmem:[%s710 + $0x1a8] sm:%s702] %v923
                  %v925 = vld [vmem:[%s709 + $0x32c] sm:%s702]
                  %926 = vst [vmem:[%s710 + $0x1ac] sm:%s702] %v925
                  %v927 = vld [vmem:[%s709 + $0x330] sm:%s702]
                  %928 = vst [vmem:[%s710 + $0x1b0] sm:%s702] %v927
                  %v929 = vld [vmem:[%s709 + $0x334] sm:%s702]
                  %930 = vst [vmem:[%s710 + $0x1b4] sm:%s702] %v929
                  %v931 = vld [vmem:[%s709 + $0x338] sm:%s702]
                  %932 = vst [vmem:[%s710 + $0x1b8] sm:%s702] %v931
                  %v933 = vld [vmem:[%s709 + $0x33c] sm:%s702]
                  %934 = vst [vmem:[%s710 + $0x1bc] sm:%s702] %v933
                  %v935 = vld [vmem:[%s709 + $0x340] sm:%s702]
                  %936 = vst [vmem:[%s710 + $0x1c0] sm:%s702] %v935
                  %v937 = vld [vmem:[%s709 + $0x344] sm:%s702]
                  %938 = vst [vmem:[%s710 + $0x1c4] sm:%s702] %v937
                  %v939 = vld [vmem:[%s709 + $0x348] sm:%s702]
                  %940 = vst [vmem:[%s710 + $0x1c8] sm:%s702] %v939
                  %v941 = vld [vmem:[%s709 + $0x34c] sm:%s702]
                  %942 = vst [vmem:[%s710 + $0x1cc] sm:%s702] %v941
                  %v943 = vld [vmem:[%s709 + $0x350] sm:%s702]
                  %944 = vst [vmem:[%s710 + $0x1d0] sm:%s702] %v943
                  %v945 = vld [vmem:[%s709 + $0x354] sm:%s702]
                  %946 = vst [vmem:[%s710 + $0x1d4] sm:%s702] %v945
                  %v947 = vld [vmem:[%s709 + $0x358] sm:%s702]
                  %948 = vst [vmem:[%s710 + $0x1d8] sm:%s702] %v947
                  %v949 = vld [vmem:[%s709 + $0x35c] sm:%s702]
                  %950 = vst [vmem:[%s710 + $0x1dc] sm:%s702] %v949
                  %v951 = vld [vmem:[%s709 + $0x360] sm:%s702]
                  %952 = vst [vmem:[%s710 + $0x1e0] sm:%s702] %v951
                  %v953 = vld [vmem:[%s709 + $0x364] sm:%s702]
                  %954 = vst [vmem:[%s710 + $0x1e4] sm:%s702] %v953
                  %v955 = vld [vmem:[%s709 + $0x368] sm:%s702]
                  %956 = vst [vmem:[%s710 + $0x1e8] sm:%s702] %v955
                  %v957 = vld [vmem:[%s709 + $0x36c] sm:%s702]
                  %958 = vst [vmem:[%s710 + $0x1ec] sm:%s702] %v957
                  %v959 = vld [vmem:[%s709 + $0x370] sm:%s702]
                  %960 = vst [vmem:[%s710 + $0x1f0] sm:%s702] %v959
                  %v961 = vld [vmem:[%s709 + $0x374] sm:%s702]
                  %962 = vst [vmem:[%s710 + $0x1f4] sm:%s702] %v961
                  %v963 = vld [vmem:[%s709 + $0x378] sm:%s702]
                  %964 = vst [vmem:[%s710 + $0x1f8] sm:%s702] %v963
                  %v965 = vld [vmem:[%s709 + $0x37c] sm:%s702]
                  %966 = vst [vmem:[%s710 + $0x1fc] sm:%s702] %v965
                  %v967 = vld [vmem:[%s709 + $0x400] sm:%s702]
                  %968 = vst [vmem:[%s710 + $0x200] sm:%s702] %v967
                  %v969 = vld [vmem:[%s709 + $0x404] sm:%s702]
                  %970 = vst [vmem:[%s710 + $0x204] sm:%s702] %v969
                  %v971 = vld [vmem:[%s709 + $0x408] sm:%s702]
                  %972 = vst [vmem:[%s710 + $0x208] sm:%s702] %v971
                  %v973 = vld [vmem:[%s709 + $0x40c] sm:%s702]
                  %974 = vst [vmem:[%s710 + $0x20c] sm:%s702] %v973
                  %v975 = vld [vmem:[%s709 + $0x410] sm:%s702]
                  %976 = vst [vmem:[%s710 + $0x210] sm:%s702] %v975
                  %v977 = vld [vmem:[%s709 + $0x414] sm:%s702]
                  %978 = vst [vmem:[%s710 + $0x214] sm:%s702] %v977
                  %v979 = vld [vmem:[%s709 + $0x418] sm:%s702]
                  %980 = vst [vmem:[%s710 + $0x218] sm:%s702] %v979
                  %v981 = vld [vmem:[%s709 + $0x41c] sm:%s702]
                  %982 = vst [vmem:[%s710 + $0x21c] sm:%s702] %v981
                  %v983 = vld [vmem:[%s709 + $0x420] sm:%s702]
                  %984 = vst [vmem:[%s710 + $0x220] sm:%s702] %v983
                  %v985 = vld [vmem:[%s709 + $0x424] sm:%s702]
                  %986 = vst [vmem:[%s710 + $0x224] sm:%s702] %v985
                  %v987 = vld [vmem:[%s709 + $0x428] sm:%s702]
                  %988 = vst [vmem:[%s710 + $0x228] sm:%s702] %v987
                  %v989 = vld [vmem:[%s709 + $0x42c] sm:%s702]
                  %990 = vst [vmem:[%s710 + $0x22c] sm:%s702] %v989
                  %v991 = vld [vmem:[%s709 + $0x430] sm:%s702]
                  %992 = vst [vmem:[%s710 + $0x230] sm:%s702] %v991
                  %v993 = vld [vmem:[%s709 + $0x434] sm:%s702]
                  %994 = vst [vmem:[%s710 + $0x234] sm:%s702] %v993
                  %v995 = vld [vmem:[%s709 + $0x438] sm:%s702]
                  %996 = vst [vmem:[%s710 + $0x238] sm:%s702] %v995
                  %v997 = vld [vmem:[%s709 + $0x43c] sm:%s702]
                  %998 = vst [vmem:[%s710 + $0x23c] sm:%s702] %v997
                  %v999 = vld [vmem:[%s709 + $0x440] sm:%s702]
                  %1000 = vst [vmem:[%s710 + $0x240] sm:%s702] %v999
                  %v1001 = vld [vmem:[%s709 + $0x444] sm:%s702]
                  %1002 = vst [vmem:[%s710 + $0x244] sm:%s702] %v1001
                  %v1003 = vld [vmem:[%s709 + $0x448] sm:%s702]
                  %1004 = vst [vmem:[%s710 + $0x248] sm:%s702] %v1003
                  %v1005 = vld [vmem:[%s709 + $0x44c] sm:%s702]
                  %1006 = vst [vmem:[%s710 + $0x24c] sm:%s702] %v1005
                  %v1007 = vld [vmem:[%s709 + $0x450] sm:%s702]
                  %1008 = vst [vmem:[%s710 + $0x250] sm:%s702] %v1007
                  %v1009 = vld [vmem:[%s709 + $0x454] sm:%s702]
                  %1010 = vst [vmem:[%s710 + $0x254] sm:%s702] %v1009
                  %v1011 = vld [vmem:[%s709 + $0x458] sm:%s702]
                  %1012 = vst [vmem:[%s710 + $0x258] sm:%s702] %v1011
                  %v1013 = vld [vmem:[%s709 + $0x45c] sm:%s702]
                  %1014 = vst [vmem:[%s710 + $0x25c] sm:%s702] %v1013
                  %v1015 = vld [vmem:[%s709 + $0x460] sm:%s702]
                  %1016 = vst [vmem:[%s710 + $0x260] sm:%s702] %v1015
                  %v1017 = vld [vmem:[%s709 + $0x464] sm:%s702]
                  %1018 = vst [vmem:[%s710 + $0x264] sm:%s702] %v1017
                  %v1019 = vld [vmem:[%s709 + $0x468] sm:%s702]
                  %1020 = vst [vmem:[%s710 + $0x268] sm:%s702] %v1019
                  %v1021 = vld [vmem:[%s709 + $0x46c] sm:%s702]
                  %1022 = vst [vmem:[%s710 + $0x26c] sm:%s702] %v1021
                  %v1023 = vld [vmem:[%s709 + $0x470] sm:%s702]
                  %1024 = vst [vmem:[%s710 + $0x270] sm:%s702] %v1023
                  %v1025 = vld [vmem:[%s709 + $0x474] sm:%s702]
                  %1026 = vst [vmem:[%s710 + $0x274] sm:%s702] %v1025
                  %v1027 = vld [vmem:[%s709 + $0x478] sm:%s702]
                  %1028 = vst [vmem:[%s710 + $0x278] sm:%s702] %v1027
                  %v1029 = vld [vmem:[%s709 + $0x47c] sm:%s702]
                  %1030 = vst [vmem:[%s710 + $0x27c] sm:%s702] %v1029
                  %v1031 = vld [vmem:[%s709 + $0x500] sm:%s702]
                  %1032 = vst [vmem:[%s710 + $0x280] sm:%s702] %v1031
                  %v1033 = vld [vmem:[%s709 + $0x504] sm:%s702]
                  %1034 = vst [vmem:[%s710 + $0x284] sm:%s702] %v1033
                  %v1035 = vld [vmem:[%s709 + $0x508] sm:%s702]
                  %1036 = vst [vmem:[%s710 + $0x288] sm:%s702] %v1035
                  %v1037 = vld [vmem:[%s709 + $0x50c] sm:%s702]
                  %1038 = vst [vmem:[%s710 + $0x28c] sm:%s702] %v1037
                  %v1039 = vld [vmem:[%s709 + $0x510] sm:%s702]
                  %1040 = vst [vmem:[%s710 + $0x290] sm:%s702] %v1039
                  %v1041 = vld [vmem:[%s709 + $0x514] sm:%s702]
                  %1042 = vst [vmem:[%s710 + $0x294] sm:%s702] %v1041
                  %v1043 = vld [vmem:[%s709 + $0x518] sm:%s702]
                  %1044 = vst [vmem:[%s710 + $0x298] sm:%s702] %v1043
                  %v1045 = vld [vmem:[%s709 + $0x51c] sm:%s702]
                  %1046 = vst [vmem:[%s710 + $0x29c] sm:%s702] %v1045
                  %v1047 = vld [vmem:[%s709 + $0x520] sm:%s702]
                  %1048 = vst [vmem:[%s710 + $0x2a0] sm:%s702] %v1047
                  %v1049 = vld [vmem:[%s709 + $0x524] sm:%s702]
                  %1050 = vst [vmem:[%s710 + $0x2a4] sm:%s702] %v1049
                  %v1051 = vld [vmem:[%s709 + $0x528] sm:%s702]
                  %1052 = vst [vmem:[%s710 + $0x2a8] sm:%s702] %v1051
                  %v1053 = vld [vmem:[%s709 + $0x52c] sm:%s702]
                  %1054 = vst [vmem:[%s710 + $0x2ac] sm:%s702] %v1053
                  %v1055 = vld [vmem:[%s709 + $0x530] sm:%s702]
                  %1056 = vst [vmem:[%s710 + $0x2b0] sm:%s702] %v1055
                  %v1057 = vld [vmem:[%s709 + $0x534] sm:%s702]
                  %1058 = vst [vmem:[%s710 + $0x2b4] sm:%s702] %v1057
                  %v1059 = vld [vmem:[%s709 + $0x538] sm:%s702]
                  %1060 = vst [vmem:[%s710 + $0x2b8] sm:%s702] %v1059
                  %v1061 = vld [vmem:[%s709 + $0x53c] sm:%s702]
                  %1062 = vst [vmem:[%s710 + $0x2bc] sm:%s702] %v1061
                  %v1063 = vld [vmem:[%s709 + $0x540] sm:%s702]
                  %1064 = vst [vmem:[%s710 + $0x2c0] sm:%s702] %v1063
                  %v1065 = vld [vmem:[%s709 + $0x544] sm:%s702]
                  %1066 = vst [vmem:[%s710 + $0x2c4] sm:%s702] %v1065
                  %v1067 = vld [vmem:[%s709 + $0x548] sm:%s702]
                  %1068 = vst [vmem:[%s710 + $0x2c8] sm:%s702] %v1067
                  %v1069 = vld [vmem:[%s709 + $0x54c] sm:%s702]
                  %1070 = vst [vmem:[%s710 + $0x2cc] sm:%s702] %v1069
                  %v1071 = vld [vmem:[%s709 + $0x550] sm:%s702]
                  %1072 = vst [vmem:[%s710 + $0x2d0] sm:%s702] %v1071
                  %v1073 = vld [vmem:[%s709 + $0x554] sm:%s702]
                  %1074 = vst [vmem:[%s710 + $0x2d4] sm:%s702] %v1073
                  %v1075 = vld [vmem:[%s709 + $0x558] sm:%s702]
                  %1076 = vst [vmem:[%s710 + $0x2d8] sm:%s702] %v1075
                  %v1077 = vld [vmem:[%s709 + $0x55c] sm:%s702]
                  %1078 = vst [vmem:[%s710 + $0x2dc] sm:%s702] %v1077
                  %v1079 = vld [vmem:[%s709 + $0x560] sm:%s702]
                  %1080 = vst [vmem:[%s710 + $0x2e0] sm:%s702] %v1079
                  %v1081 = vld [vmem:[%s709 + $0x564] sm:%s702]
                  %1082 = vst [vmem:[%s710 + $0x2e4] sm:%s702] %v1081
                  %v1083 = vld [vmem:[%s709 + $0x568] sm:%s702]
                  %1084 = vst [vmem:[%s710 + $0x2e8] sm:%s702] %v1083
                  %v1085 = vld [vmem:[%s709 + $0x56c] sm:%s702]
                  %1086 = vst [vmem:[%s710 + $0x2ec] sm:%s702] %v1085
                  %v1087 = vld [vmem:[%s709 + $0x570] sm:%s702]
                  %1088 = vst [vmem:[%s710 + $0x2f0] sm:%s702] %v1087
                  %v1089 = vld [vmem:[%s709 + $0x574] sm:%s702]
                  %1090 = vst [vmem:[%s710 + $0x2f4] sm:%s702] %v1089
                  %v1091 = vld [vmem:[%s709 + $0x578] sm:%s702]
                  %1092 = vst [vmem:[%s710 + $0x2f8] sm:%s702] %v1091
                  %v1093 = vld [vmem:[%s709 + $0x57c] sm:%s702]
                  %1094 = vst [vmem:[%s710 + $0x2fc] sm:%s702] %v1093
                  %v1095 = vld [vmem:[%s709 + $0x600] sm:%s702]
                  %1096 = vst [vmem:[%s710 + $0x300] sm:%s702] %v1095
                  %v1097 = vld [vmem:[%s709 + $0x604] sm:%s702]
                  %1098 = vst [vmem:[%s710 + $0x304] sm:%s702] %v1097
                  %v1099 = vld [vmem:[%s709 + $0x608] sm:%s702]
                  %1100 = vst [vmem:[%s710 + $0x308] sm:%s702] %v1099
                  %v1101 = vld [vmem:[%s709 + $0x60c] sm:%s702]
                  %1102 = vst [vmem:[%s710 + $0x30c] sm:%s702] %v1101
                  %v1103 = vld [vmem:[%s709 + $0x610] sm:%s702]
                  %1104 = vst [vmem:[%s710 + $0x310] sm:%s702] %v1103
                  %v1105 = vld [vmem:[%s709 + $0x614] sm:%s702]
                  %1106 = vst [vmem:[%s710 + $0x314] sm:%s702] %v1105
                  %v1107 = vld [vmem:[%s709 + $0x618] sm:%s702]
                  %1108 = vst [vmem:[%s710 + $0x318] sm:%s702] %v1107
                  %v1109 = vld [vmem:[%s709 + $0x61c] sm:%s702]
                  %1110 = vst [vmem:[%s710 + $0x31c] sm:%s702] %v1109
                  %v1111 = vld [vmem:[%s709 + $0x620] sm:%s702]
                  %1112 = vst [vmem:[%s710 + $0x320] sm:%s702] %v1111
                  %v1113 = vld [vmem:[%s709 + $0x624] sm:%s702]
                  %1114 = vst [vmem:[%s710 + $0x324] sm:%s702] %v1113
                  %v1115 = vld [vmem:[%s709 + $0x628] sm:%s702]
                  %1116 = vst [vmem:[%s710 + $0x328] sm:%s702] %v1115
                  %v1117 = vld [vmem:[%s709 + $0x62c] sm:%s702]
                  %1118 = vst [vmem:[%s710 + $0x32c] sm:%s702] %v1117
                  %v1119 = vld [vmem:[%s709 + $0x630] sm:%s702]
                  %1120 = vst [vmem:[%s710 + $0x330] sm:%s702] %v1119
                  %v1121 = vld [vmem:[%s709 + $0x634] sm:%s702]
                  %1122 = vst [vmem:[%s710 + $0x334] sm:%s702] %v1121
                  %v1123 = vld [vmem:[%s709 + $0x638] sm:%s702]
                  %1124 = vst [vmem:[%s710 + $0x338] sm:%s702] %v1123
                  %v1125 = vld [vmem:[%s709 + $0x63c] sm:%s702]
                  %1126 = vst [vmem:[%s710 + $0x33c] sm:%s702] %v1125
                  %v1127 = vld [vmem:[%s709 + $0x640] sm:%s702]
                  %1128 = vst [vmem:[%s710 + $0x340] sm:%s702] %v1127
                  %v1129 = vld [vmem:[%s709 + $0x644] sm:%s702]
                  %1130 = vst [vmem:[%s710 + $0x344] sm:%s702] %v1129
                  %v1131 = vld [vmem:[%s709 + $0x648] sm:%s702]
                  %1132 = vst [vmem:[%s710 + $0x348] sm:%s702] %v1131
                  %v1133 = vld [vmem:[%s709 + $0x64c] sm:%s702]
                  %1134 = vst [vmem:[%s710 + $0x34c] sm:%s702] %v1133
                  %v1135 = vld [vmem:[%s709 + $0x650] sm:%s702]
                  %1136 = vst [vmem:[%s710 + $0x350] sm:%s702] %v1135
                  %v1137 = vld [vmem:[%s709 + $0x654] sm:%s702]
                  %1138 = vst [vmem:[%s710 + $0x354] sm:%s702] %v1137
                  %v1139 = vld [vmem:[%s709 + $0x658] sm:%s702]
                  %1140 = vst [vmem:[%s710 + $0x358] sm:%s702] %v1139
                  %v1141 = vld [vmem:[%s709 + $0x65c] sm:%s702]
                  %1142 = vst [vmem:[%s710 + $0x35c] sm:%s702] %v1141
                  %v1143 = vld [vmem:[%s709 + $0x660] sm:%s702]
                  %1144 = vst [vmem:[%s710 + $0x360] sm:%s702] %v1143
                  %v1145 = vld [vmem:[%s709 + $0x664] sm:%s702]
                  %1146 = vst [vmem:[%s710 + $0x364] sm:%s702] %v1145
                  %v1147 = vld [vmem:[%s709 + $0x668] sm:%s702]
                  %1148 = vst [vmem:[%s710 + $0x368] sm:%s702] %v1147
                  %v1149 = vld [vmem:[%s709 + $0x66c] sm:%s702]
                  %1150 = vst [vmem:[%s710 + $0x36c] sm:%s702] %v1149
                  %v1151 = vld [vmem:[%s709 + $0x670] sm:%s702]
                  %1152 = vst [vmem:[%s710 + $0x370] sm:%s702] %v1151
                  %v1153 = vld [vmem:[%s709 + $0x674] sm:%s702]
                  %1154 = vst [vmem:[%s710 + $0x374] sm:%s702] %v1153
                  %v1155 = vld [vmem:[%s709 + $0x678] sm:%s702]
                  %1156 = vst [vmem:[%s710 + $0x378] sm:%s702] %v1155
                  %v1157 = vld [vmem:[%s709 + $0x67c] sm:%s702]
                  %1158 = vst [vmem:[%s710 + $0x37c] sm:%s702] %v1157
                  %v1159 = vld [vmem:[%s709 + $0x700] sm:%s702]
                  %1160 = vst [vmem:[%s710 + $0x380] sm:%s702] %v1159
                  %v1161 = vld [vmem:[%s709 + $0x704] sm:%s702]
                  %1162 = vst [vmem:[%s710 + $0x384] sm:%s702] %v1161
                  %v1163 = vld [vmem:[%s709 + $0x708] sm:%s702]
                  %1164 = vst [vmem:[%s710 + $0x388] sm:%s702] %v1163
                  %v1165 = vld [vmem:[%s709 + $0x70c] sm:%s702]
                  %1166 = vst [vmem:[%s710 + $0x38c] sm:%s702] %v1165
                  %v1167 = vld [vmem:[%s709 + $0x710] sm:%s702]
                  %1168 = vst [vmem:[%s710 + $0x390] sm:%s702] %v1167
                  %v1169 = vld [vmem:[%s709 + $0x714] sm:%s702]
                  %1170 = vst [vmem:[%s710 + $0x394] sm:%s702] %v1169
                  %v1171 = vld [vmem:[%s709 + $0x718] sm:%s702]
                  %1172 = vst [vmem:[%s710 + $0x398] sm:%s702] %v1171
                  %v1173 = vld [vmem:[%s709 + $0x71c] sm:%s702]
                  %1174 = vst [vmem:[%s710 + $0x39c] sm:%s702] %v1173
                  %v1175 = vld [vmem:[%s709 + $0x720] sm:%s702]
                  %1176 = vst [vmem:[%s710 + $0x3a0] sm:%s702] %v1175
                  %v1177 = vld [vmem:[%s709 + $0x724] sm:%s702]
                  %1178 = vst [vmem:[%s710 + $0x3a4] sm:%s702] %v1177
                  %v1179 = vld [vmem:[%s709 + $0x728] sm:%s702]
                  %1180 = vst [vmem:[%s710 + $0x3a8] sm:%s702] %v1179
                  %v1181 = vld [vmem:[%s709 + $0x72c] sm:%s702]
                  %1182 = vst [vmem:[%s710 + $0x3ac] sm:%s702] %v1181
                  %v1183 = vld [vmem:[%s709 + $0x730] sm:%s702]
                  %1184 = vst [vmem:[%s710 + $0x3b0] sm:%s702] %v1183
                  %v1185 = vld [vmem:[%s709 + $0x734] sm:%s702]
                  %1186 = vst [vmem:[%s710 + $0x3b4] sm:%s702] %v1185
                  %v1187 = vld [vmem:[%s709 + $0x738] sm:%s702]
                  %1188 = vst [vmem:[%s710 + $0x3b8] sm:%s702] %v1187
                  %v1189 = vld [vmem:[%s709 + $0x73c] sm:%s702]
                  %1190 = vst [vmem:[%s710 + $0x3bc] sm:%s702] %v1189
                  %v1191 = vld [vmem:[%s709 + $0x740] sm:%s702]
                  %1192 = vst [vmem:[%s710 + $0x3c0] sm:%s702] %v1191
                  %v1193 = vld [vmem:[%s709 + $0x744] sm:%s702]
                  %1194 = vst [vmem:[%s710 + $0x3c4] sm:%s702] %v1193
                  %v1195 = vld [vmem:[%s709 + $0x748] sm:%s702]
                  %1196 = vst [vmem:[%s710 + $0x3c8] sm:%s702] %v1195
                  %v1197 = vld [vmem:[%s709 + $0x74c] sm:%s702]
                  %1198 = vst [vmem:[%s710 + $0x3cc] sm:%s702] %v1197
                  %v1199 = vld [vmem:[%s709 + $0x750] sm:%s702]
                  %1200 = vst [vmem:[%s710 + $0x3d0] sm:%s702] %v1199
                  %v1201 = vld [vmem:[%s709 + $0x754] sm:%s702]
                  %1202 = vst [vmem:[%s710 + $0x3d4] sm:%s702] %v1201
                  %v1203 = vld [vmem:[%s709 + $0x758] sm:%s702]
                  %1204 = vst [vmem:[%s710 + $0x3d8] sm:%s702] %v1203
                  %v1205 = vld [vmem:[%s709 + $0x75c] sm:%s702]
                  %1206 = vst [vmem:[%s710 + $0x3dc] sm:%s702] %v1205
                  %v1207 = vld [vmem:[%s709 + $0x760] sm:%s702]
                  %1208 = vst [vmem:[%s710 + $0x3e0] sm:%s702] %v1207
                  %v1209 = vld [vmem:[%s709 + $0x764] sm:%s702]
                  %1210 = vst [vmem:[%s710 + $0x3e4] sm:%s702] %v1209
                  %v1211 = vld [vmem:[%s709 + $0x768] sm:%s702]
                  %1212 = vst [vmem:[%s710 + $0x3e8] sm:%s702] %v1211
                  %v1213 = vld [vmem:[%s709 + $0x76c] sm:%s702]
                  %1214 = vst [vmem:[%s710 + $0x3ec] sm:%s702] %v1213
                  %v1215 = vld [vmem:[%s709 + $0x770] sm:%s702]
                  %1216 = vst [vmem:[%s710 + $0x3f0] sm:%s702] %v1215
                  %v1217 = vld [vmem:[%s709 + $0x774] sm:%s702]
                  %1218 = vst [vmem:[%s710 + $0x3f4] sm:%s702] %v1217
                  %v1219 = vld [vmem:[%s709 + $0x778] sm:%s702]
                  %1220 = vst [vmem:[%s710 + $0x3f8] sm:%s702] %v1219
                  %v1221 = vld [vmem:[%s709 + $0x77c] sm:%s702]
                  %1222 = vst [vmem:[%s710 + $0x3fc] sm:%s702] %v1221
                $region67: #{tpu_custom_call.1} parent=54 // loop_footer
                  %s708 = sadd.s32 1, %s704
                $region68: #{tpu_custom_call.1} parent=54 // loop_footer_branch
                  %703 = sbr.rel target = $region64
                $region69: #{tpu_custom_call.1} parent=54 // loop_exit
                  _
              $region55: #{tpu_custom_call.1} parent=39 // pred_fallthru
                _
            $region40: #{tpu_custom_call.1} parent=35 // pred_fallthru
              _
            // Predicated region
            $region41: #{tpu_custom_call.1} parent=35 // pred_check
              _
            $region42: #{tpu_custom_call.1} parent=35 // pred_check_branch
              %168 = sbr.rel (0) target = $region44
            $region43: #{tpu_custom_call.1} parent=35 // pred_region
              %s170 = ssub.s32 16, 1
              loop: start=0, step=1, limit=1
              $region45: #{tpu_custom_call.1} parent=43 // loop_pre_header
                _
              $region46: #{tpu_custom_call.1} parent=43 // loop_header
                %s172 = sphi 0, %s176
                %p173 = scmp.ge.s32.totalorder %s172, 1
                %s177 = sphi %s162, %s162
                %s178 = sphi %s159, %s159
              $region47: #{tpu_custom_call.1} parent=43 // loop_header_branch
                %175 = sbr.rel (%p173) target = $region51
              $region48: #{tpu_custom_call.1} parent=43 // loop_body
                %v179 = vld [vmem:[%s177] sm:%s170]
                %180 = vst [vmem:[%s178] sm:%s170] %v179
                %v181 = vld [vmem:[%s177 + $0x4] sm:%s170]
                %182 = vst [vmem:[%s178 + $0x4] sm:%s170] %v181
                %v183 = vld [vmem:[%s177 + $0x8] sm:%s170]
                %184 = vst [vmem:[%s178 + $0x8] sm:%s170] %v183
                %v185 = vld [vmem:[%s177 + $0xc] sm:%s170]
                %186 = vst [vmem:[%s178 + $0xc] sm:%s170] %v185
                %v187 = vld [vmem:[%s177 + $0x10] sm:%s170]
                %188 = vst [vmem:[%s178 + $0x10] sm:%s170] %v187
                %v189 = vld [vmem:[%s177 + $0x14] sm:%s170]
                %190 = vst [vmem:[%s178 + $0x14] sm:%s170] %v189
                %v191 = vld [vmem:[%s177 + $0x18] sm:%s170]
                %192 = vst [vmem:[%s178 + $0x18] sm:%s170] %v191
                %v193 = vld [vmem:[%s177 + $0x1c] sm:%s170]
                %194 = vst [vmem:[%s178 + $0x1c] sm:%s170] %v193
                %v195 = vld [vmem:[%s177 + $0x20] sm:%s170]
                %196 = vst [vmem:[%s178 + $0x20] sm:%s170] %v195
                %v197 = vld [vmem:[%s177 + $0x24] sm:%s170]
                %198 = vst [vmem:[%s178 + $0x24] sm:%s170] %v197
                %v199 = vld [vmem:[%s177 + $0x28] sm:%s170]
                %200 = vst [vmem:[%s178 + $0x28] sm:%s170] %v199
                %v201 = vld [vmem:[%s177 + $0x2c] sm:%s170]
                %202 = vst [vmem:[%s178 + $0x2c] sm:%s170] %v201
                %v203 = vld [vmem:[%s177 + $0x30] sm:%s170]
                %204 = vst [vmem:[%s178 + $0x30] sm:%s170] %v203
                %v205 = vld [vmem:[%s177 + $0x34] sm:%s170]
                %206 = vst [vmem:[%s178 + $0x34] sm:%s170] %v205
                %v207 = vld [vmem:[%s177 + $0x38] sm:%s170]
                %208 = vst [vmem:[%s178 + $0x38] sm:%s170] %v207
                %v209 = vld [vmem:[%s177 + $0x3c] sm:%s170]
                %210 = vst [vmem:[%s178 + $0x3c] sm:%s170] %v209
                %v211 = vld [vmem:[%s177 + $0x40] sm:%s170]
                %212 = vst [vmem:[%s178 + $0x40] sm:%s170] %v211
                %v213 = vld [vmem:[%s177 + $0x44] sm:%s170]
                %214 = vst [vmem:[%s178 + $0x44] sm:%s170] %v213
                %v215 = vld [vmem:[%s177 + $0x48] sm:%s170]
                %216 = vst [vmem:[%s178 + $0x48] sm:%s170] %v215
                %v217 = vld [vmem:[%s177 + $0x4c] sm:%s170]
                %218 = vst [vmem:[%s178 + $0x4c] sm:%s170] %v217
                %v219 = vld [vmem:[%s177 + $0x50] sm:%s170]
                %220 = vst [vmem:[%s178 + $0x50] sm:%s170] %v219
                %v221 = vld [vmem:[%s177 + $0x54] sm:%s170]
                %222 = vst [vmem:[%s178 + $0x54] sm:%s170] %v221
                %v223 = vld [vmem:[%s177 + $0x58] sm:%s170]
                %224 = vst [vmem:[%s178 + $0x58] sm:%s170] %v223
                %v225 = vld [vmem:[%s177 + $0x5c] sm:%s170]
                %226 = vst [vmem:[%s178 + $0x5c] sm:%s170] %v225
                %v227 = vld [vmem:[%s177 + $0x60] sm:%s170]
                %228 = vst [vmem:[%s178 + $0x60] sm:%s170] %v227
                %v229 = vld [vmem:[%s177 + $0x64] sm:%s170]
                %230 = vst [vmem:[%s178 + $0x64] sm:%s170] %v229
                %v231 = vld [vmem:[%s177 + $0x68] sm:%s170]
                %232 = vst [vmem:[%s178 + $0x68] sm:%s170] %v231
                %v233 = vld [vmem:[%s177 + $0x6c] sm:%s170]
                %234 = vst [vmem:[%s178 + $0x6c] sm:%s170] %v233
                %v235 = vld [vmem:[%s177 + $0x70] sm:%s170]
                %236 = vst [vmem:[%s178 + $0x70] sm:%s170] %v235
                %v237 = vld [vmem:[%s177 + $0x74] sm:%s170]
                %238 = vst [vmem:[%s178 + $0x74] sm:%s170] %v237
                %v239 = vld [vmem:[%s177 + $0x78] sm:%s170]
                %240 = vst [vmem:[%s178 + $0x78] sm:%s170] %v239
                %v241 = vld [vmem:[%s177 + $0x7c] sm:%s170]
                %242 = vst [vmem:[%s178 + $0x7c] sm:%s170] %v241
                %v243 = vld [vmem:[%s177 + $0x100] sm:%s170]
                %244 = vst [vmem:[%s178 + $0x80] sm:%s170] %v243
                %v245 = vld [vmem:[%s177 + $0x104] sm:%s170]
                %246 = vst [vmem:[%s178 + $0x84] sm:%s170] %v245
                %v247 = vld [vmem:[%s177 + $0x108] sm:%s170]
                %248 = vst [vmem:[%s178 + $0x88] sm:%s170] %v247
                %v249 = vld [vmem:[%s177 + $0x10c] sm:%s170]
                %250 = vst [vmem:[%s178 + $0x8c] sm:%s170] %v249
                %v251 = vld [vmem:[%s177 + $0x110] sm:%s170]
                %252 = vst [vmem:[%s178 + $0x90] sm:%s170] %v251
                %v253 = vld [vmem:[%s177 + $0x114] sm:%s170]
                %254 = vst [vmem:[%s178 + $0x94] sm:%s170] %v253
                %v255 = vld [vmem:[%s177 + $0x118] sm:%s170]
                %256 = vst [vmem:[%s178 + $0x98] sm:%s170] %v255
                %v257 = vld [vmem:[%s177 + $0x11c] sm:%s170]
                %258 = vst [vmem:[%s178 + $0x9c] sm:%s170] %v257
                %v259 = vld [vmem:[%s177 + $0x120] sm:%s170]
                %260 = vst [vmem:[%s178 + $0xa0] sm:%s170] %v259
                %v261 = vld [vmem:[%s177 + $0x124] sm:%s170]
                %262 = vst [vmem:[%s178 + $0xa4] sm:%s170] %v261
                %v263 = vld [vmem:[%s177 + $0x128] sm:%s170]
                %264 = vst [vmem:[%s178 + $0xa8] sm:%s170] %v263
                %v265 = vld [vmem:[%s177 + $0x12c] sm:%s170]
                %266 = vst [vmem:[%s178 + $0xac] sm:%s170] %v265
                %v267 = vld [vmem:[%s177 + $0x130] sm:%s170]
                %268 = vst [vmem:[%s178 + $0xb0] sm:%s170] %v267
                %v269 = vld [vmem:[%s177 + $0x134] sm:%s170]
                %270 = vst [vmem:[%s178 + $0xb4] sm:%s170] %v269
                %v271 = vld [vmem:[%s177 + $0x138] sm:%s170]
                %272 = vst [vmem:[%s178 + $0xb8] sm:%s170] %v271
                %v273 = vld [vmem:[%s177 + $0x13c] sm:%s170]
                %274 = vst [vmem:[%s178 + $0xbc] sm:%s170] %v273
                %v275 = vld [vmem:[%s177 + $0x140] sm:%s170]
                %276 = vst [vmem:[%s178 + $0xc0] sm:%s170] %v275
                %v277 = vld [vmem:[%s177 + $0x144] sm:%s170]
                %278 = vst [vmem:[%s178 + $0xc4] sm:%s170] %v277
                %v279 = vld [vmem:[%s177 + $0x148] sm:%s170]
                %280 = vst [vmem:[%s178 + $0xc8] sm:%s170] %v279
                %v281 = vld [vmem:[%s177 + $0x14c] sm:%s170]
                %282 = vst [vmem:[%s178 + $0xcc] sm:%s170] %v281
                %v283 = vld [vmem:[%s177 + $0x150] sm:%s170]
                %284 = vst [vmem:[%s178 + $0xd0] sm:%s170] %v283
                %v285 = vld [vmem:[%s177 + $0x154] sm:%s170]
                %286 = vst [vmem:[%s178 + $0xd4] sm:%s170] %v285
                %v287 = vld [vmem:[%s177 + $0x158] sm:%s170]
                %288 = vst [vmem:[%s178 + $0xd8] sm:%s170] %v287
                %v289 = vld [vmem:[%s177 + $0x15c] sm:%s170]
                %290 = vst [vmem:[%s178 + $0xdc] sm:%s170] %v289
                %v291 = vld [vmem:[%s177 + $0x160] sm:%s170]
                %292 = vst [vmem:[%s178 + $0xe0] sm:%s170] %v291
                %v293 = vld [vmem:[%s177 + $0x164] sm:%s170]
                %294 = vst [vmem:[%s178 + $0xe4] sm:%s170] %v293
                %v295 = vld [vmem:[%s177 + $0x168] sm:%s170]
                %296 = vst [vmem:[%s178 + $0xe8] sm:%s170] %v295
                %v297 = vld [vmem:[%s177 + $0x16c] sm:%s170]
                %298 = vst [vmem:[%s178 + $0xec] sm:%s170] %v297
                %v299 = vld [vmem:[%s177 + $0x170] sm:%s170]
                %300 = vst [vmem:[%s178 + $0xf0] sm:%s170] %v299
                %v301 = vld [vmem:[%s177 + $0x174] sm:%s170]
                %302 = vst [vmem:[%s178 + $0xf4] sm:%s170] %v301
                %v303 = vld [vmem:[%s177 + $0x178] sm:%s170]
                %304 = vst [vmem:[%s178 + $0xf8] sm:%s170] %v303
                %v305 = vld [vmem:[%s177 + $0x17c] sm:%s170]
                %306 = vst [vmem:[%s178 + $0xfc] sm:%s170] %v305
                %v307 = vld [vmem:[%s177 + $0x200] sm:%s170]
                %308 = vst [vmem:[%s178 + $0x100] sm:%s170] %v307
                %v309 = vld [vmem:[%s177 + $0x204] sm:%s170]
                %310 = vst [vmem:[%s178 + $0x104] sm:%s170] %v309
                %v311 = vld [vmem:[%s177 + $0x208] sm:%s170]
                %312 = vst [vmem:[%s178 + $0x108] sm:%s170] %v311
                %v313 = vld [vmem:[%s177 + $0x20c] sm:%s170]
                %314 = vst [vmem:[%s178 + $0x10c] sm:%s170] %v313
                %v315 = vld [vmem:[%s177 + $0x210] sm:%s170]
                %316 = vst [vmem:[%s178 + $0x110] sm:%s170] %v315
                %v317 = vld [vmem:[%s177 + $0x214] sm:%s170]
                %318 = vst [vmem:[%s178 + $0x114] sm:%s170] %v317
                %v319 = vld [vmem:[%s177 + $0x218] sm:%s170]
                %320 = vst [vmem:[%s178 + $0x118] sm:%s170] %v319
                %v321 = vld [vmem:[%s177 + $0x21c] sm:%s170]
                %322 = vst [vmem:[%s178 + $0x11c] sm:%s170] %v321
                %v323 = vld [vmem:[%s177 + $0x220] sm:%s170]
                %324 = vst [vmem:[%s178 + $0x120] sm:%s170] %v323
                %v325 = vld [vmem:[%s177 + $0x224] sm:%s170]
                %326 = vst [vmem:[%s178 + $0x124] sm:%s170] %v325
                %v327 = vld [vmem:[%s177 + $0x228] sm:%s170]
                %328 = vst [vmem:[%s178 + $0x128] sm:%s170] %v327
                %v329 = vld [vmem:[%s177 + $0x22c] sm:%s170]
                %330 = vst [vmem:[%s178 + $0x12c] sm:%s170] %v329
                %v331 = vld [vmem:[%s177 + $0x230] sm:%s170]
                %332 = vst [vmem:[%s178 + $0x130] sm:%s170] %v331
                %v333 = vld [vmem:[%s177 + $0x234] sm:%s170]
                %334 = vst [vmem:[%s178 + $0x134] sm:%s170] %v333
                %v335 = vld [vmem:[%s177 + $0x238] sm:%s170]
                %336 = vst [vmem:[%s178 + $0x138] sm:%s170] %v335
                %v337 = vld [vmem:[%s177 + $0x23c] sm:%s170]
                %338 = vst [vmem:[%s178 + $0x13c] sm:%s170] %v337
                %v339 = vld [vmem:[%s177 + $0x240] sm:%s170]
                %340 = vst [vmem:[%s178 + $0x140] sm:%s170] %v339
                %v341 = vld [vmem:[%s177 + $0x244] sm:%s170]
                %342 = vst [vmem:[%s178 + $0x144] sm:%s170] %v341
                %v343 = vld [vmem:[%s177 + $0x248] sm:%s170]
                %344 = vst [vmem:[%s178 + $0x148] sm:%s170] %v343
                %v345 = vld [vmem:[%s177 + $0x24c] sm:%s170]
                %346 = vst [vmem:[%s178 + $0x14c] sm:%s170] %v345
                %v347 = vld [vmem:[%s177 + $0x250] sm:%s170]
                %348 = vst [vmem:[%s178 + $0x150] sm:%s170] %v347
                %v349 = vld [vmem:[%s177 + $0x254] sm:%s170]
                %350 = vst [vmem:[%s178 + $0x154] sm:%s170] %v349
                %v351 = vld [vmem:[%s177 + $0x258] sm:%s170]
                %352 = vst [vmem:[%s178 + $0x158] sm:%s170] %v351
                %v353 = vld [vmem:[%s177 + $0x25c] sm:%s170]
                %354 = vst [vmem:[%s178 + $0x15c] sm:%s170] %v353
                %v355 = vld [vmem:[%s177 + $0x260] sm:%s170]
                %356 = vst [vmem:[%s178 + $0x160] sm:%s170] %v355
                %v357 = vld [vmem:[%s177 + $0x264] sm:%s170]
                %358 = vst [vmem:[%s178 + $0x164] sm:%s170] %v357
                %v359 = vld [vmem:[%s177 + $0x268] sm:%s170]
                %360 = vst [vmem:[%s178 + $0x168] sm:%s170] %v359
                %v361 = vld [vmem:[%s177 + $0x26c] sm:%s170]
                %362 = vst [vmem:[%s178 + $0x16c] sm:%s170] %v361
                %v363 = vld [vmem:[%s177 + $0x270] sm:%s170]
                %364 = vst [vmem:[%s178 + $0x170] sm:%s170] %v363
                %v365 = vld [vmem:[%s177 + $0x274] sm:%s170]
                %366 = vst [vmem:[%s178 + $0x174] sm:%s170] %v365
                %v367 = vld [vmem:[%s177 + $0x278] sm:%s170]
                %368 = vst [vmem:[%s178 + $0x178] sm:%s170] %v367
                %v369 = vld [vmem:[%s177 + $0x27c] sm:%s170]
                %370 = vst [vmem:[%s178 + $0x17c] sm:%s170] %v369
                %v371 = vld [vmem:[%s177 + $0x300] sm:%s170]
                %372 = vst [vmem:[%s178 + $0x180] sm:%s170] %v371
                %v373 = vld [vmem:[%s177 + $0x304] sm:%s170]
                %374 = vst [vmem:[%s178 + $0x184] sm:%s170] %v373
                %v375 = vld [vmem:[%s177 + $0x308] sm:%s170]
                %376 = vst [vmem:[%s178 + $0x188] sm:%s170] %v375
                %v377 = vld [vmem:[%s177 + $0x30c] sm:%s170]
                %378 = vst [vmem:[%s178 + $0x18c] sm:%s170] %v377
                %v379 = vld [vmem:[%s177 + $0x310] sm:%s170]
                %380 = vst [vmem:[%s178 + $0x190] sm:%s170] %v379
                %v381 = vld [vmem:[%s177 + $0x314] sm:%s170]
                %382 = vst [vmem:[%s178 + $0x194] sm:%s170] %v381
                %v383 = vld [vmem:[%s177 + $0x318] sm:%s170]
                %384 = vst [vmem:[%s178 + $0x198] sm:%s170] %v383
                %v385 = vld [vmem:[%s177 + $0x31c] sm:%s170]
                %386 = vst [vmem:[%s178 + $0x19c] sm:%s170] %v385
                %v387 = vld [vmem:[%s177 + $0x320] sm:%s170]
                %388 = vst [vmem:[%s178 + $0x1a0] sm:%s170] %v387
                %v389 = vld [vmem:[%s177 + $0x324] sm:%s170]
                %390 = vst [vmem:[%s178 + $0x1a4] sm:%s170] %v389
                %v391 = vld [vmem:[%s177 + $0x328] sm:%s170]
                %392 = vst [vmem:[%s178 + $0x1a8] sm:%s170] %v391
                %v393 = vld [vmem:[%s177 + $0x32c] sm:%s170]
                %394 = vst [vmem:[%s178 + $0x1ac] sm:%s170] %v393
                %v395 = vld [vmem:[%s177 + $0x330] sm:%s170]
                %396 = vst [vmem:[%s178 + $0x1b0] sm:%s170] %v395
                %v397 = vld [vmem:[%s177 + $0x334] sm:%s170]
                %398 = vst [vmem:[%s178 + $0x1b4] sm:%s170] %v397
                %v399 = vld [vmem:[%s177 + $0x338] sm:%s170]
                %400 = vst [vmem:[%s178 + $0x1b8] sm:%s170] %v399
                %v401 = vld [vmem:[%s177 + $0x33c] sm:%s170]
                %402 = vst [vmem:[%s178 + $0x1bc] sm:%s170] %v401
                %v403 = vld [vmem:[%s177 + $0x340] sm:%s170]
                %404 = vst [vmem:[%s178 + $0x1c0] sm:%s170] %v403
                %v405 = vld [vmem:[%s177 + $0x344] sm:%s170]
                %406 = vst [vmem:[%s178 + $0x1c4] sm:%s170] %v405
                %v407 = vld [vmem:[%s177 + $0x348] sm:%s170]
                %408 = vst [vmem:[%s178 + $0x1c8] sm:%s170] %v407
                %v409 = vld [vmem:[%s177 + $0x34c] sm:%s170]
                %410 = vst [vmem:[%s178 + $0x1cc] sm:%s170] %v409
                %v411 = vld [vmem:[%s177 + $0x350] sm:%s170]
                %412 = vst [vmem:[%s178 + $0x1d0] sm:%s170] %v411
                %v413 = vld [vmem:[%s177 + $0x354] sm:%s170]
                %414 = vst [vmem:[%s178 + $0x1d4] sm:%s170] %v413
                %v415 = vld [vmem:[%s177 + $0x358] sm:%s170]
                %416 = vst [vmem:[%s178 + $0x1d8] sm:%s170] %v415
                %v417 = vld [vmem:[%s177 + $0x35c] sm:%s170]
                %418 = vst [vmem:[%s178 + $0x1dc] sm:%s170] %v417
                %v419 = vld [vmem:[%s177 + $0x360] sm:%s170]
                %420 = vst [vmem:[%s178 + $0x1e0] sm:%s170] %v419
                %v421 = vld [vmem:[%s177 + $0x364] sm:%s170]
                %422 = vst [vmem:[%s178 + $0x1e4] sm:%s170] %v421
                %v423 = vld [vmem:[%s177 + $0x368] sm:%s170]
                %424 = vst [vmem:[%s178 + $0x1e8] sm:%s170] %v423
                %v425 = vld [vmem:[%s177 + $0x36c] sm:%s170]
                %426 = vst [vmem:[%s178 + $0x1ec] sm:%s170] %v425
                %v427 = vld [vmem:[%s177 + $0x370] sm:%s170]
                %428 = vst [vmem:[%s178 + $0x1f0] sm:%s170] %v427
                %v429 = vld [vmem:[%s177 + $0x374] sm:%s170]
                %430 = vst [vmem:[%s178 + $0x1f4] sm:%s170] %v429
                %v431 = vld [vmem:[%s177 + $0x378] sm:%s170]
                %432 = vst [vmem:[%s178 + $0x1f8] sm:%s170] %v431
                %v433 = vld [vmem:[%s177 + $0x37c] sm:%s170]
                %434 = vst [vmem:[%s178 + $0x1fc] sm:%s170] %v433
                %v435 = vld [vmem:[%s177 + $0x400] sm:%s170]
                %436 = vst [vmem:[%s178 + $0x200] sm:%s170] %v435
                %v437 = vld [vmem:[%s177 + $0x404] sm:%s170]
                %438 = vst [vmem:[%s178 + $0x204] sm:%s170] %v437
                %v439 = vld [vmem:[%s177 + $0x408] sm:%s170]
                %440 = vst [vmem:[%s178 + $0x208] sm:%s170] %v439
                %v441 = vld [vmem:[%s177 + $0x40c] sm:%s170]
                %442 = vst [vmem:[%s178 + $0x20c] sm:%s170] %v441
                %v443 = vld [vmem:[%s177 + $0x410] sm:%s170]
                %444 = vst [vmem:[%s178 + $0x210] sm:%s170] %v443
                %v445 = vld [vmem:[%s177 + $0x414] sm:%s170]
                %446 = vst [vmem:[%s178 + $0x214] sm:%s170] %v445
                %v447 = vld [vmem:[%s177 + $0x418] sm:%s170]
                %448 = vst [vmem:[%s178 + $0x218] sm:%s170] %v447
                %v449 = vld [vmem:[%s177 + $0x41c] sm:%s170]
                %450 = vst [vmem:[%s178 + $0x21c] sm:%s170] %v449
                %v451 = vld [vmem:[%s177 + $0x420] sm:%s170]
                %452 = vst [vmem:[%s178 + $0x220] sm:%s170] %v451
                %v453 = vld [vmem:[%s177 + $0x424] sm:%s170]
                %454 = vst [vmem:[%s178 + $0x224] sm:%s170] %v453
                %v455 = vld [vmem:[%s177 + $0x428] sm:%s170]
                %456 = vst [vmem:[%s178 + $0x228] sm:%s170] %v455
                %v457 = vld [vmem:[%s177 + $0x42c] sm:%s170]
                %458 = vst [vmem:[%s178 + $0x22c] sm:%s170] %v457
                %v459 = vld [vmem:[%s177 + $0x430] sm:%s170]
                %460 = vst [vmem:[%s178 + $0x230] sm:%s170] %v459
                %v461 = vld [vmem:[%s177 + $0x434] sm:%s170]
                %462 = vst [vmem:[%s178 + $0x234] sm:%s170] %v461
                %v463 = vld [vmem:[%s177 + $0x438] sm:%s170]
                %464 = vst [vmem:[%s178 + $0x238] sm:%s170] %v463
                %v465 = vld [vmem:[%s177 + $0x43c] sm:%s170]
                %466 = vst [vmem:[%s178 + $0x23c] sm:%s170] %v465
                %v467 = vld [vmem:[%s177 + $0x440] sm:%s170]
                %468 = vst [vmem:[%s178 + $0x240] sm:%s170] %v467
                %v469 = vld [vmem:[%s177 + $0x444] sm:%s170]
                %470 = vst [vmem:[%s178 + $0x244] sm:%s170] %v469
                %v471 = vld [vmem:[%s177 + $0x448] sm:%s170]
                %472 = vst [vmem:[%s178 + $0x248] sm:%s170] %v471
                %v473 = vld [vmem:[%s177 + $0x44c] sm:%s170]
                %474 = vst [vmem:[%s178 + $0x24c] sm:%s170] %v473
                %v475 = vld [vmem:[%s177 + $0x450] sm:%s170]
                %476 = vst [vmem:[%s178 + $0x250] sm:%s170] %v475
                %v477 = vld [vmem:[%s177 + $0x454] sm:%s170]
                %478 = vst [vmem:[%s178 + $0x254] sm:%s170] %v477
                %v479 = vld [vmem:[%s177 + $0x458] sm:%s170]
                %480 = vst [vmem:[%s178 + $0x258] sm:%s170] %v479
                %v481 = vld [vmem:[%s177 + $0x45c] sm:%s170]
                %482 = vst [vmem:[%s178 + $0x25c] sm:%s170] %v481
                %v483 = vld [vmem:[%s177 + $0x460] sm:%s170]
                %484 = vst [vmem:[%s178 + $0x260] sm:%s170] %v483
                %v485 = vld [vmem:[%s177 + $0x464] sm:%s170]
                %486 = vst [vmem:[%s178 + $0x264] sm:%s170] %v485
                %v487 = vld [vmem:[%s177 + $0x468] sm:%s170]
                %488 = vst [vmem:[%s178 + $0x268] sm:%s170] %v487
                %v489 = vld [vmem:[%s177 + $0x46c] sm:%s170]
                %490 = vst [vmem:[%s178 + $0x26c] sm:%s170] %v489
                %v491 = vld [vmem:[%s177 + $0x470] sm:%s170]
                %492 = vst [vmem:[%s178 + $0x270] sm:%s170] %v491
                %v493 = vld [vmem:[%s177 + $0x474] sm:%s170]
                %494 = vst [vmem:[%s178 + $0x274] sm:%s170] %v493
                %v495 = vld [vmem:[%s177 + $0x478] sm:%s170]
                %496 = vst [vmem:[%s178 + $0x278] sm:%s170] %v495
                %v497 = vld [vmem:[%s177 + $0x47c] sm:%s170]
                %498 = vst [vmem:[%s178 + $0x27c] sm:%s170] %v497
                %v499 = vld [vmem:[%s177 + $0x500] sm:%s170]
                %500 = vst [vmem:[%s178 + $0x280] sm:%s170] %v499
                %v501 = vld [vmem:[%s177 + $0x504] sm:%s170]
                %502 = vst [vmem:[%s178 + $0x284] sm:%s170] %v501
                %v503 = vld [vmem:[%s177 + $0x508] sm:%s170]
                %504 = vst [vmem:[%s178 + $0x288] sm:%s170] %v503
                %v505 = vld [vmem:[%s177 + $0x50c] sm:%s170]
                %506 = vst [vmem:[%s178 + $0x28c] sm:%s170] %v505
                %v507 = vld [vmem:[%s177 + $0x510] sm:%s170]
                %508 = vst [vmem:[%s178 + $0x290] sm:%s170] %v507
                %v509 = vld [vmem:[%s177 + $0x514] sm:%s170]
                %510 = vst [vmem:[%s178 + $0x294] sm:%s170] %v509
                %v511 = vld [vmem:[%s177 + $0x518] sm:%s170]
                %512 = vst [vmem:[%s178 + $0x298] sm:%s170] %v511
                %v513 = vld [vmem:[%s177 + $0x51c] sm:%s170]
                %514 = vst [vmem:[%s178 + $0x29c] sm:%s170] %v513
                %v515 = vld [vmem:[%s177 + $0x520] sm:%s170]
                %516 = vst [vmem:[%s178 + $0x2a0] sm:%s170] %v515
                %v517 = vld [vmem:[%s177 + $0x524] sm:%s170]
                %518 = vst [vmem:[%s178 + $0x2a4] sm:%s170] %v517
                %v519 = vld [vmem:[%s177 + $0x528] sm:%s170]
                %520 = vst [vmem:[%s178 + $0x2a8] sm:%s170] %v519
                %v521 = vld [vmem:[%s177 + $0x52c] sm:%s170]
                %522 = vst [vmem:[%s178 + $0x2ac] sm:%s170] %v521
                %v523 = vld [vmem:[%s177 + $0x530] sm:%s170]
                %524 = vst [vmem:[%s178 + $0x2b0] sm:%s170] %v523
                %v525 = vld [vmem:[%s177 + $0x534] sm:%s170]
                %526 = vst [vmem:[%s178 + $0x2b4] sm:%s170] %v525
                %v527 = vld [vmem:[%s177 + $0x538] sm:%s170]
                %528 = vst [vmem:[%s178 + $0x2b8] sm:%s170] %v527
                %v529 = vld [vmem:[%s177 + $0x53c] sm:%s170]
                %530 = vst [vmem:[%s178 + $0x2bc] sm:%s170] %v529
                %v531 = vld [vmem:[%s177 + $0x540] sm:%s170]
                %532 = vst [vmem:[%s178 + $0x2c0] sm:%s170] %v531
                %v533 = vld [vmem:[%s177 + $0x544] sm:%s170]
                %534 = vst [vmem:[%s178 + $0x2c4] sm:%s170] %v533
                %v535 = vld [vmem:[%s177 + $0x548] sm:%s170]
                %536 = vst [vmem:[%s178 + $0x2c8] sm:%s170] %v535
                %v537 = vld [vmem:[%s177 + $0x54c] sm:%s170]
                %538 = vst [vmem:[%s178 + $0x2cc] sm:%s170] %v537
                %v539 = vld [vmem:[%s177 + $0x550] sm:%s170]
                %540 = vst [vmem:[%s178 + $0x2d0] sm:%s170] %v539
                %v541 = vld [vmem:[%s177 + $0x554] sm:%s170]
                %542 = vst [vmem:[%s178 + $0x2d4] sm:%s170] %v541
                %v543 = vld [vmem:[%s177 + $0x558] sm:%s170]
                %544 = vst [vmem:[%s178 + $0x2d8] sm:%s170] %v543
                %v545 = vld [vmem:[%s177 + $0x55c] sm:%s170]
                %546 = vst [vmem:[%s178 + $0x2dc] sm:%s170] %v545
                %v547 = vld [vmem:[%s177 + $0x560] sm:%s170]
                %548 = vst [vmem:[%s178 + $0x2e0] sm:%s170] %v547
                %v549 = vld [vmem:[%s177 + $0x564] sm:%s170]
                %550 = vst [vmem:[%s178 + $0x2e4] sm:%s170] %v549
                %v551 = vld [vmem:[%s177 + $0x568] sm:%s170]
                %552 = vst [vmem:[%s178 + $0x2e8] sm:%s170] %v551
                %v553 = vld [vmem:[%s177 + $0x56c] sm:%s170]
                %554 = vst [vmem:[%s178 + $0x2ec] sm:%s170] %v553
                %v555 = vld [vmem:[%s177 + $0x570] sm:%s170]
                %556 = vst [vmem:[%s178 + $0x2f0] sm:%s170] %v555
                %v557 = vld [vmem:[%s177 + $0x574] sm:%s170]
                %558 = vst [vmem:[%s178 + $0x2f4] sm:%s170] %v557
                %v559 = vld [vmem:[%s177 + $0x578] sm:%s170]
                %560 = vst [vmem:[%s178 + $0x2f8] sm:%s170] %v559
                %v561 = vld [vmem:[%s177 + $0x57c] sm:%s170]
                %562 = vst [vmem:[%s178 + $0x2fc] sm:%s170] %v561
                %v563 = vld [vmem:[%s177 + $0x600] sm:%s170]
                %564 = vst [vmem:[%s178 + $0x300] sm:%s170] %v563
                %v565 = vld [vmem:[%s177 + $0x604] sm:%s170]
                %566 = vst [vmem:[%s178 + $0x304] sm:%s170] %v565
                %v567 = vld [vmem:[%s177 + $0x608] sm:%s170]
                %568 = vst [vmem:[%s178 + $0x308] sm:%s170] %v567
                %v569 = vld [vmem:[%s177 + $0x60c] sm:%s170]
                %570 = vst [vmem:[%s178 + $0x30c] sm:%s170] %v569
                %v571 = vld [vmem:[%s177 + $0x610] sm:%s170]
                %572 = vst [vmem:[%s178 + $0x310] sm:%s170] %v571
                %v573 = vld [vmem:[%s177 + $0x614] sm:%s170]
                %574 = vst [vmem:[%s178 + $0x314] sm:%s170] %v573
                %v575 = vld [vmem:[%s177 + $0x618] sm:%s170]
                %576 = vst [vmem:[%s178 + $0x318] sm:%s170] %v575
                %v577 = vld [vmem:[%s177 + $0x61c] sm:%s170]
                %578 = vst [vmem:[%s178 + $0x31c] sm:%s170] %v577
                %v579 = vld [vmem:[%s177 + $0x620] sm:%s170]
                %580 = vst [vmem:[%s178 + $0x320] sm:%s170] %v579
                %v581 = vld [vmem:[%s177 + $0x624] sm:%s170]
                %582 = vst [vmem:[%s178 + $0x324] sm:%s170] %v581
                %v583 = vld [vmem:[%s177 + $0x628] sm:%s170]
                %584 = vst [vmem:[%s178 + $0x328] sm:%s170] %v583
                %v585 = vld [vmem:[%s177 + $0x62c] sm:%s170]
                %586 = vst [vmem:[%s178 + $0x32c] sm:%s170] %v585
                %v587 = vld [vmem:[%s177 + $0x630] sm:%s170]
                %588 = vst [vmem:[%s178 + $0x330] sm:%s170] %v587
                %v589 = vld [vmem:[%s177 + $0x634] sm:%s170]
                %590 = vst [vmem:[%s178 + $0x334] sm:%s170] %v589
                %v591 = vld [vmem:[%s177 + $0x638] sm:%s170]
                %592 = vst [vmem:[%s178 + $0x338] sm:%s170] %v591
                %v593 = vld [vmem:[%s177 + $0x63c] sm:%s170]
                %594 = vst [vmem:[%s178 + $0x33c] sm:%s170] %v593
                %v595 = vld [vmem:[%s177 + $0x640] sm:%s170]
                %596 = vst [vmem:[%s178 + $0x340] sm:%s170] %v595
                %v597 = vld [vmem:[%s177 + $0x644] sm:%s170]
                %598 = vst [vmem:[%s178 + $0x344] sm:%s170] %v597
                %v599 = vld [vmem:[%s177 + $0x648] sm:%s170]
                %600 = vst [vmem:[%s178 + $0x348] sm:%s170] %v599
                %v601 = vld [vmem:[%s177 + $0x64c] sm:%s170]
                %602 = vst [vmem:[%s178 + $0x34c] sm:%s170] %v601
                %v603 = vld [vmem:[%s177 + $0x650] sm:%s170]
                %604 = vst [vmem:[%s178 + $0x350] sm:%s170] %v603
                %v605 = vld [vmem:[%s177 + $0x654] sm:%s170]
                %606 = vst [vmem:[%s178 + $0x354] sm:%s170] %v605
                %v607 = vld [vmem:[%s177 + $0x658] sm:%s170]
                %608 = vst [vmem:[%s178 + $0x358] sm:%s170] %v607
                %v609 = vld [vmem:[%s177 + $0x65c] sm:%s170]
                %610 = vst [vmem:[%s178 + $0x35c] sm:%s170] %v609
                %v611 = vld [vmem:[%s177 + $0x660] sm:%s170]
                %612 = vst [vmem:[%s178 + $0x360] sm:%s170] %v611
                %v613 = vld [vmem:[%s177 + $0x664] sm:%s170]
                %614 = vst [vmem:[%s178 + $0x364] sm:%s170] %v613
                %v615 = vld [vmem:[%s177 + $0x668] sm:%s170]
                %616 = vst [vmem:[%s178 + $0x368] sm:%s170] %v615
                %v617 = vld [vmem:[%s177 + $0x66c] sm:%s170]
                %618 = vst [vmem:[%s178 + $0x36c] sm:%s170] %v617
                %v619 = vld [vmem:[%s177 + $0x670] sm:%s170]
                %620 = vst [vmem:[%s178 + $0x370] sm:%s170] %v619
                %v621 = vld [vmem:[%s177 + $0x674] sm:%s170]
                %622 = vst [vmem:[%s178 + $0x374] sm:%s170] %v621
                %v623 = vld [vmem:[%s177 + $0x678] sm:%s170]
                %624 = vst [vmem:[%s178 + $0x378] sm:%s170] %v623
                %v625 = vld [vmem:[%s177 + $0x67c] sm:%s170]
                %626 = vst [vmem:[%s178 + $0x37c] sm:%s170] %v625
                %v627 = vld [vmem:[%s177 + $0x700] sm:%s170]
                %628 = vst [vmem:[%s178 + $0x380] sm:%s170] %v627
                %v629 = vld [vmem:[%s177 + $0x704] sm:%s170]
                %630 = vst [vmem:[%s178 + $0x384] sm:%s170] %v629
                %v631 = vld [vmem:[%s177 + $0x708] sm:%s170]
                %632 = vst [vmem:[%s178 + $0x388] sm:%s170] %v631
                %v633 = vld [vmem:[%s177 + $0x70c] sm:%s170]
                %634 = vst [vmem:[%s178 + $0x38c] sm:%s170] %v633
                %v635 = vld [vmem:[%s177 + $0x710] sm:%s170]
                %636 = vst [vmem:[%s178 + $0x390] sm:%s170] %v635
                %v637 = vld [vmem:[%s177 + $0x714] sm:%s170]
                %638 = vst [vmem:[%s178 + $0x394] sm:%s170] %v637
                %v639 = vld [vmem:[%s177 + $0x718] sm:%s170]
                %640 = vst [vmem:[%s178 + $0x398] sm:%s170] %v639
                %v641 = vld [vmem:[%s177 + $0x71c] sm:%s170]
                %642 = vst [vmem:[%s178 + $0x39c] sm:%s170] %v641
                %v643 = vld [vmem:[%s177 + $0x720] sm:%s170]
                %644 = vst [vmem:[%s178 + $0x3a0] sm:%s170] %v643
                %v645 = vld [vmem:[%s177 + $0x724] sm:%s170]
                %646 = vst [vmem:[%s178 + $0x3a4] sm:%s170] %v645
                %v647 = vld [vmem:[%s177 + $0x728] sm:%s170]
                %648 = vst [vmem:[%s178 + $0x3a8] sm:%s170] %v647
                %v649 = vld [vmem:[%s177 + $0x72c] sm:%s170]
                %650 = vst [vmem:[%s178 + $0x3ac] sm:%s170] %v649
                %v651 = vld [vmem:[%s177 + $0x730] sm:%s170]
                %652 = vst [vmem:[%s178 + $0x3b0] sm:%s170] %v651
                %v653 = vld [vmem:[%s177 + $0x734] sm:%s170]
                %654 = vst [vmem:[%s178 + $0x3b4] sm:%s170] %v653
                %v655 = vld [vmem:[%s177 + $0x738] sm:%s170]
                %656 = vst [vmem:[%s178 + $0x3b8] sm:%s170] %v655
                %v657 = vld [vmem:[%s177 + $0x73c] sm:%s170]
                %658 = vst [vmem:[%s178 + $0x3bc] sm:%s170] %v657
                %v659 = vld [vmem:[%s177 + $0x740] sm:%s170]
                %660 = vst [vmem:[%s178 + $0x3c0] sm:%s170] %v659
                %v661 = vld [vmem:[%s177 + $0x744] sm:%s170]
                %662 = vst [vmem:[%s178 + $0x3c4] sm:%s170] %v661
                %v663 = vld [vmem:[%s177 + $0x748] sm:%s170]
                %664 = vst [vmem:[%s178 + $0x3c8] sm:%s170] %v663
                %v665 = vld [vmem:[%s177 + $0x74c] sm:%s170]
                %666 = vst [vmem:[%s178 + $0x3cc] sm:%s170] %v665
                %v667 = vld [vmem:[%s177 + $0x750] sm:%s170]
                %668 = vst [vmem:[%s178 + $0x3d0] sm:%s170] %v667
                %v669 = vld [vmem:[%s177 + $0x754] sm:%s170]
                %670 = vst [vmem:[%s178 + $0x3d4] sm:%s170] %v669
                %v671 = vld [vmem:[%s177 + $0x758] sm:%s170]
                %672 = vst [vmem:[%s178 + $0x3d8] sm:%s170] %v671
                %v673 = vld [vmem:[%s177 + $0x75c] sm:%s170]
                %674 = vst [vmem:[%s178 + $0x3dc] sm:%s170] %v673
                %v675 = vld [vmem:[%s177 + $0x760] sm:%s170]
                %676 = vst [vmem:[%s178 + $0x3e0] sm:%s170] %v675
                %v677 = vld [vmem:[%s177 + $0x764] sm:%s170]
                %678 = vst [vmem:[%s178 + $0x3e4] sm:%s170] %v677
                %v679 = vld [vmem:[%s177 + $0x768] sm:%s170]
                %680 = vst [vmem:[%s178 + $0x3e8] sm:%s170] %v679
                %v681 = vld [vmem:[%s177 + $0x76c] sm:%s170]
                %682 = vst [vmem:[%s178 + $0x3ec] sm:%s170] %v681
                %v683 = vld [vmem:[%s177 + $0x770] sm:%s170]
                %684 = vst [vmem:[%s178 + $0x3f0] sm:%s170] %v683
                %v685 = vld [vmem:[%s177 + $0x774] sm:%s170]
                %686 = vst [vmem:[%s178 + $0x3f4] sm:%s170] %v685
                %v687 = vld [vmem:[%s177 + $0x778] sm:%s170]
                %688 = vst [vmem:[%s178 + $0x3f8] sm:%s170] %v687
                %v689 = vld [vmem:[%s177 + $0x77c] sm:%s170]
                %690 = vst [vmem:[%s178 + $0x3fc] sm:%s170] %v689
              $region49: #{tpu_custom_call.1} parent=43 // loop_footer
                %s176 = sadd.s32 1, %s172
              $region50: #{tpu_custom_call.1} parent=43 // loop_footer_branch
                %171 = sbr.rel target = $region46
              $region51: #{tpu_custom_call.1} parent=43 // loop_exit
                _
            $region44: #{tpu_custom_call.1} parent=35 // pred_fallthru
              _
          $region36: #{tpu_custom_call.1} parent=31 // pred_fallthru
            _
          %1223 = vnop
        $region32: #{tpu_custom_call.1} parent=27 // pred_fallthru
          _
      $region28: #{tpu_custom_call.1} parent=5 // pred_fallthru
        _
      %p1224 = scmp.le.s32.totalorder 1, %s10
      %p1225 = scmp.lt.s32.totalorder %s10, 3
      %p1226 = pnand %p1224, %p1225
      %p1227 = pneg %p1226
      // Predicated region
      $region70: #{tpu_custom_call.1} parent=5 // pred_check
        _
      $region71: #{tpu_custom_call.1} parent=5 // pred_check_branch
        %1229 = sbr.rel (%p1226) target = $region73
      $region72: #{tpu_custom_call.1} parent=5 // pred_region
        %s1230 = ssub.s32 %s10, 1
        %s1231 = sand.u32 %s23, 1
        %s1232 = sand.u32 %s23, 1
        %s1233 = smul.addr %s1232, 1024
        %s1234 = scalar_lea.vmem [#allocation2], %s1233
        // Predicated region
        $region74: #{tpu_custom_call.1} parent=72 // pred_check
          %p1235 = pneg %p36
        $region75: #{tpu_custom_call.1} parent=72 // pred_check_branch
          %1237 = sbr.rel (%p1235) target = $region77
        $region76: #{tpu_custom_call.1} parent=72 // pred_region
          _
        $region77: #{tpu_custom_call.1} parent=72 // pred_fallthru
          _
        %s1238 = sand.u32 %s23, 1
        %s1239 = sand.u32 %s23, 1
        %s1240 = smul.addr %s1239, 1024
        %s1241 = scalar_lea.vmem [#allocation2], %s1240
        %p1242 = pneg %p36
        %p1243 = pneg %p33
        %p1244 = pneg %p57
        %p1245 = pneg %p54
        %p1246 = pneg %p78
        %p1247 = pneg %p75
        %p1248 = pneg %p99
        %p1249 = pneg %p96
        %p1250 = pneg %p125
        %p1251 = pneg %p122
        %s1252 = smul.u32 32, %s15
        %p1253 = scmp.lt.s32.totalorder %s1252, 63
        %s1254 = scalar_select %p1253, %s1252, 63
        %s1255 = smul.addr %s1254, 8
        %s1256 = scalar_lea.vmem %s4, %s1255
        %s1257 = smul.u32 32, %s15
        %s1258 = smul.u32 32, %s15
        %p1259 = scmp.lt.s32.totalorder %s1258, 63
        %s1260 = scalar_select %p1259, %s1258, 63
        %s1261 = smul.addr %s1260, 8
        %s1262 = scalar_lea.vmem %s4, %s1261
        %s1263 = smul.u32 32, %s15
        %v1265 = vld [vmem:[%s1] sm:$0xf]
        %v1266 = vld [vmem:[%s1 + $0x4] sm:$0xf]
        %v1267 = vld [vmem:[%s1 + $0x8] sm:$0xf]
        %v1268 = vld [vmem:[%s1 + $0xc] sm:$0xf]
        %v1269 = vld [vmem:[%s1 + $0x10] sm:$0xf]
        %v1270 = vld [vmem:[%s1 + $0x14] sm:$0xf]
        %v1271 = vld [vmem:[%s1 + $0x18] sm:$0xf]
        %v1272 = vld [vmem:[%s2] sm:$0x1]
        %v1273 = vld [vmem:[%s3] sm:$0x1]
        %v1274 = vld [vmem:[%s1234] sm:$0xf]
        %v1275 = vld [vmem:[%s1234 + $0x4] sm:$0xf]
        %v1276 = vld [vmem:[%s1234 + $0x8] sm:$0xf]
        %v1277 = vld [vmem:[%s1234 + $0xc] sm:$0xf]
        %v1278 = vld [vmem:[%s1234 + $0x10] sm:$0xf]
        %v1279 = vld [vmem:[%s1234 + $0x14] sm:$0xf]
        %v1280 = vld [vmem:[%s1234 + $0x18] sm:$0xf]
        %v1281 = vld [vmem:[%s1234 + $0x1c] sm:$0xf]
        %v1282 = vld [vmem:[%s1234 + $0x20] sm:$0xf]
        %v1283 = vld [vmem:[%s1234 + $0x24] sm:$0xf]
        %v1284 = vld [vmem:[%s1234 + $0x28] sm:$0xf]
        %v1285 = vld [vmem:[%s1234 + $0x2c] sm:$0xf]
        %v1286 = vld [vmem:[%s1234 + $0x30] sm:$0xf]
        %v1287 = vld [vmem:[%s1234 + $0x34] sm:$0xf]
        %v1288 = vld [vmem:[%s1234 + $0x38] sm:$0xf]
        %v1289 = vld [vmem:[%s1234 + $0x3c] sm:$0xf]
        %v1290 = vld [vmem:[%s1234 + $0x40] sm:$0xf]
        %v1291 = vld [vmem:[%s1234 + $0x44] sm:$0xf]
        %v1292 = vld [vmem:[%s1234 + $0x48] sm:$0xf]
        %v1293 = vld [vmem:[%s1234 + $0x4c] sm:$0xf]
        %v1294 = vld [vmem:[%s1234 + $0x50] sm:$0xf]
        %v1295 = vld [vmem:[%s1234 + $0x54] sm:$0xf]
        %v1296 = vld [vmem:[%s1234 + $0x58] sm:$0xf]
        %v1297 = vld [vmem:[%s1234 + $0x5c] sm:$0xf]
        %v1298 = vld [vmem:[%s1234 + $0x60] sm:$0xf]
        %v1299 = vld [vmem:[%s1234 + $0x64] sm:$0xf]
        %v1300 = vld [vmem:[%s1234 + $0x68] sm:$0xf]
        %v1301 = vld [vmem:[%s1234 + $0x6c] sm:$0xf]
        %v1302 = vld [vmem:[%s1234 + $0x70] sm:$0xf]
        %v1303 = vld [vmem:[%s1234 + $0x74] sm:$0xf]
        %v1304 = vld [vmem:[%s1234 + $0x78] sm:$0xf]
        %v1305 = vld [vmem:[%s1234 + $0x7c] sm:$0xf]
        %v1338 = vunpack.c.l.b16 %v1274
        %v1339 = vunpack.c.l.b16 %v1275
        %v1340 = vunpack.c.l.b16 %v1276
        %v1341 = vunpack.c.l.b16 %v1277
        %v1342 = vunpack.c.l.b16 %v1278
        %v1343 = vunpack.c.l.b16 %v1279
        %v1344 = vunpack.c.l.b16 %v1280
        %v1345 = vunpack.c.l.b16 %v1281
        %v1346 = vunpack.c.l.b16 %v1282
        %v1347 = vunpack.c.l.b16 %v1283
        %v1348 = vunpack.c.l.b16 %v1284
        %v1349 = vunpack.c.l.b16 %v1285
        %v1350 = vunpack.c.l.b16 %v1286
        %v1351 = vunpack.c.l.b16 %v1287
        %v1352 = vunpack.c.l.b16 %v1288
        %v1353 = vunpack.c.l.b16 %v1289
        %v1354 = vunpack.c.l.b16 %v1290
        %v1355 = vunpack.c.l.b16 %v1291
        %v1356 = vunpack.c.l.b16 %v1292
        %v1357 = vunpack.c.l.b16 %v1293
        %v1358 = vunpack.c.l.b16 %v1294
        %v1359 = vunpack.c.l.b16 %v1295
        %v1360 = vunpack.c.l.b16 %v1296
        %v1361 = vunpack.c.l.b16 %v1297
        %v1362 = vunpack.c.l.b16 %v1298
        %v1363 = vunpack.c.l.b16 %v1299
        %v1364 = vunpack.c.l.b16 %v1300
        %v1365 = vunpack.c.l.b16 %v1301
        %v1366 = vunpack.c.l.b16 %v1302
        %v1367 = vunpack.c.l.b16 %v1303
        %v1368 = vunpack.c.l.b16 %v1304
        %v1369 = vunpack.c.l.b16 %v1305
        %v1370 = vpack.c.b16 %v1339, %v1338
        %v1371 = vpack.c.b16 %v1341, %v1340
        %v1372 = vpack.c.b16 %v1343, %v1342
        %v1373 = vpack.c.b16 %v1345, %v1344
        %v1374 = vpack.c.b16 %v1347, %v1346
        %v1375 = vpack.c.b16 %v1349, %v1348
        %v1376 = vpack.c.b16 %v1351, %v1350
        %v1377 = vpack.c.b16 %v1353, %v1352
        %v1378 = vpack.c.b16 %v1355, %v1354
        %v1379 = vpack.c.b16 %v1357, %v1356
        %v1380 = vpack.c.b16 %v1359, %v1358
        %v1381 = vpack.c.b16 %v1361, %v1360
        %v1382 = vpack.c.b16 %v1363, %v1362
        %v1383 = vpack.c.b16 %v1365, %v1364
        %v1384 = vpack.c.b16 %v1367, %v1366
        %v1385 = vpack.c.b16 %v1369, %v1368
        %v1393 = vunpack.c.l.b16 %v1265
        %v1394 = vunpack.c.l.b16 %v1266
        %v1395 = vunpack.c.l.b16 %v1267
        %v1396 = vunpack.c.l.b16 %v1268
        %v1397 = vunpack.c.l.b16 %v1269
        %v1398 = vunpack.c.l.b16 %v1270
        %v1399 = vunpack.c.l.b16 %v1271
        %v1400 = vpack.c.b16 %v1394, %v1393
        %v1401 = vpack.c.b16 %v1396, %v1395
        %v1402 = vpack.c.b16 %v1398, %v1397
        %v1403 = vpack.c.b16 %v1399, %v1399
        %vm1407 = vcmask 457728
        %v1409 = vsel %vm1407, %v1370, 0
        %v1412 = vsel %vm1407, %v1371, 0
        %v1415 = vsel %vm1407, %v1372, 0
        %v1418 = vsel %vm1407, %v1373, 0
        %v1421 = vsel %vm1407, %v1374, 0
        %v1424 = vsel %vm1407, %v1375, 0
        %v1427 = vsel %vm1407, %v1376, 0
        %v1430 = vsel %vm1407, %v1377, 0
        %v1433 = vsel %vm1407, %v1378, 0
        %v1436 = vsel %vm1407, %v1379, 0
        %v1439 = vsel %vm1407, %v1380, 0
        %v1442 = vsel %vm1407, %v1381, 0
        %v1445 = vsel %vm1407, %v1382, 0
        %v1448 = vsel %vm1407, %v1383, 0
        %v1451 = vsel %vm1407, %v1384, 0
        %v1454 = vsel %vm1407, %v1385, 0
        %vm1456 = vcmask 1043456
        %v1458 = vsel %vm1456, %v1403, 0
        %1460 = vmatprep.subr.bf16.mxu0 0
        %1461 = vmatpush1.bf16.msra.mxu0 0
        %1462 = vmatprep.subr.bf16.mxu0 0
        %1463 = vmatpush1.bf16.msra.mxu0 0
        %1464 = vmatprep.subr.bf16.mxu0 0
        %1465 = vmatpush1.bf16.msra.mxu0 0
        %1466 = vmatprep.subr.bf16.mxu0 0
        %1467 = vmatpush1.bf16.msra.mxu0 0
        %1468 = vmatprep.subr.bf16.mxu0 0
        %1469 = vmatpush1.bf16.msra.mxu0 %v1458
        %1470 = vmatprep.subr.bf16.mxu0 0
        %1471 = vmatpush1.bf16.msra.mxu0 %v1402
        %1472 = vmatprep.subr.bf16.mxu0 0
        %1473 = vmatpush1.bf16.msra.mxu0 %v1401
        %1474 = vmatprep.subr.bf16.mxu0 0
        %1475 = vmatpush1.bf16.msra.mxu0 %v1400
        %1476 = vmatprep.subr.bf16.mxu0 0
        %1477 = vmatpush2.bf16.msra.mxu0 0
        %1478 = vmatprep.subr.bf16.mxu0 0
        %1479 = vmatpush2.bf16.msra.mxu0 0
        %1480 = vmatprep.subr.bf16.mxu0 0
        %1481 = vmatpush2.bf16.msra.mxu0 0
        %1482 = vmatprep.subr.bf16.mxu0 0
        %1483 = vmatpush2.bf16.msra.mxu0 0
        %1484 = vmatprep.subr.bf16.mxu0 0
        %1485 = vmatpush2.bf16.msra.mxu0 0
        %1486 = vmatprep.subr.bf16.mxu0 0
        %1487 = vmatpush2.bf16.msra.mxu0 0
        %1488 = vmatprep.subr.bf16.mxu0 0
        %1489 = vmatpush2.bf16.msra.mxu0 0
        %1490 = vmatprep.subr.bf16.mxu0 0
        %1491 = vmatpush2.bf16.msra.mxu0 0
        %1492 = vmatprep.mubr.bf16.mxu0 0
        %1493 = vmatmul.mubr.bf16.gmra.mxu0 %v1409
        %v1494 = vpop.f32.mrf.mxu0
        %v1495 = vadd.f32 0.0, %v1494
        %v1496 = vpop.f32.mrf.mxu0
        %v1497 = vpop.f32.mrf.mxu0
        %v1498 = vadd.f32 0.0, %v1497
        %v1499 = vpop.f32.mrf.mxu0
        %1500 = vmatprep.mubr.bf16.mxu0 0
        %1501 = vmatmul.mubr.bf16.gmra.mxu0 %v1412
        %v1502 = vpop.f32.mrf.mxu0
        %v1503 = vadd.f32 0.0, %v1502
        %v1504 = vpop.f32.mrf.mxu0
        %v1505 = vpop.f32.mrf.mxu0
        %v1506 = vadd.f32 0.0, %v1505
        %v1507 = vpop.f32.mrf.mxu0
        %1508 = vmatprep.mubr.bf16.mxu0 0
        %1509 = vmatmul.mubr.bf16.gmra.mxu0 %v1415
        %v1510 = vpop.f32.mrf.mxu0
        %v1511 = vadd.f32 0.0, %v1510
        %v1512 = vpop.f32.mrf.mxu0
        %v1513 = vpop.f32.mrf.mxu0
        %v1514 = vadd.f32 0.0, %v1513
        %v1515 = vpop.f32.mrf.mxu0
        %1516 = vmatprep.mubr.bf16.mxu0 0
        %1517 = vmatmul.mubr.bf16.gmra.mxu0 %v1418
        %v1518 = vpop.f32.mrf.mxu0
        %v1519 = vadd.f32 0.0, %v1518
        %v1520 = vpop.f32.mrf.mxu0
        %v1521 = vpop.f32.mrf.mxu0
        %v1522 = vadd.f32 0.0, %v1521
        %v1523 = vpop.f32.mrf.mxu0
        %1524 = vmatprep.mubr.bf16.mxu0 0
        %1525 = vmatmul.mubr.bf16.gmra.mxu0 %v1421
        %v1526 = vpop.f32.mrf.mxu0
        %v1527 = vadd.f32 0.0, %v1526
        %v1528 = vpop.f32.mrf.mxu0
        %v1529 = vpop.f32.mrf.mxu0
        %v1530 = vadd.f32 0.0, %v1529
        %v1531 = vpop.f32.mrf.mxu0
        %1532 = vmatprep.mubr.bf16.mxu0 0
        %1533 = vmatmul.mubr.bf16.gmra.mxu0 %v1424
        %v1534 = vpop.f32.mrf.mxu0
        %v1535 = vadd.f32 0.0, %v1534
        %v1536 = vpop.f32.mrf.mxu0
        %v1537 = vpop.f32.mrf.mxu0
        %v1538 = vadd.f32 0.0, %v1537
        %v1539 = vpop.f32.mrf.mxu0
        %1540 = vmatprep.mubr.bf16.mxu0 0
        %1541 = vmatmul.mubr.bf16.gmra.mxu0 %v1427
        %v1542 = vpop.f32.mrf.mxu0
        %v1543 = vadd.f32 0.0, %v1542
        %v1544 = vpop.f32.mrf.mxu0
        %v1545 = vpop.f32.mrf.mxu0
        %v1546 = vadd.f32 0.0, %v1545
        %v1547 = vpop.f32.mrf.mxu0
        %1548 = vmatprep.mubr.bf16.mxu0 0
        %1549 = vmatmul.mubr.bf16.gmra.mxu0 %v1430
        %v1550 = vpop.f32.mrf.mxu0
        %v1551 = vadd.f32 0.0, %v1550
        %v1552 = vpop.f32.mrf.mxu0
        %v1553 = vpop.f32.mrf.mxu0
        %v1554 = vadd.f32 0.0, %v1553
        %v1555 = vpop.f32.mrf.mxu0
        %1556 = vmatprep.mubr.bf16.mxu0 0
        %1557 = vmatmul.mubr.bf16.gmra.mxu0 %v1433
        %v1558 = vpop.f32.mrf.mxu0
        %v1559 = vadd.f32 0.0, %v1558
        %v1560 = vpop.f32.mrf.mxu0
        %v1561 = vpop.f32.mrf.mxu0
        %v1562 = vadd.f32 0.0, %v1561
        %v1563 = vpop.f32.mrf.mxu0
        %1564 = vmatprep.mubr.bf16.mxu0 0
        %1565 = vmatmul.mubr.bf16.gmra.mxu0 %v1436
        %v1566 = vpop.f32.mrf.mxu0
        %v1567 = vadd.f32 0.0, %v1566
        %v1568 = vpop.f32.mrf.mxu0
        %v1569 = vpop.f32.mrf.mxu0
        %v1570 = vadd.f32 0.0, %v1569
        %v1571 = vpop.f32.mrf.mxu0
        %1572 = vmatprep.mubr.bf16.mxu0 0
        %1573 = vmatmul.mubr.bf16.gmra.mxu0 %v1439
        %v1574 = vpop.f32.mrf.mxu0
        %v1575 = vadd.f32 0.0, %v1574
        %v1576 = vpop.f32.mrf.mxu0
        %v1577 = vpop.f32.mrf.mxu0
        %v1578 = vadd.f32 0.0, %v1577
        %v1579 = vpop.f32.mrf.mxu0
        %1580 = vmatprep.mubr.bf16.mxu0 0
        %1581 = vmatmul.mubr.bf16.gmra.mxu0 %v1442
        %v1582 = vpop.f32.mrf.mxu0
        %v1583 = vadd.f32 0.0, %v1582
        %v1584 = vpop.f32.mrf.mxu0
        %v1585 = vpop.f32.mrf.mxu0
        %v1586 = vadd.f32 0.0, %v1585
        %v1587 = vpop.f32.mrf.mxu0
        %1588 = vmatprep.mubr.bf16.mxu0 0
        %1589 = vmatmul.mubr.bf16.gmra.mxu0 %v1445
        %v1590 = vpop.f32.mrf.mxu0
        %v1591 = vadd.f32 0.0, %v1590
        %v1592 = vpop.f32.mrf.mxu0
        %v1593 = vpop.f32.mrf.mxu0
        %v1594 = vadd.f32 0.0, %v1593
        %v1595 = vpop.f32.mrf.mxu0
        %1596 = vmatprep.mubr.bf16.mxu0 0
        %1597 = vmatmul.mubr.bf16.gmra.mxu0 %v1448
        %v1598 = vpop.f32.mrf.mxu0
        %v1599 = vadd.f32 0.0, %v1598
        %v1600 = vpop.f32.mrf.mxu0
        %v1601 = vpop.f32.mrf.mxu0
        %v1602 = vadd.f32 0.0, %v1601
        %v1603 = vpop.f32.mrf.mxu0
        %1604 = vmatprep.mubr.bf16.mxu0 0
        %1605 = vmatmul.mubr.bf16.gmra.mxu0 %v1451
        %v1606 = vpop.f32.mrf.mxu0
        %v1607 = vadd.f32 0.0, %v1606
        %v1608 = vpop.f32.mrf.mxu0
        %v1609 = vpop.f32.mrf.mxu0
        %v1610 = vadd.f32 0.0, %v1609
        %v1611 = vpop.f32.mrf.mxu0
        %1612 = vmatprep.mubr.bf16.mxu0 0
        %1613 = vmatmul.mubr.bf16.gmra.mxu0 %v1454
        %v1614 = vpop.f32.mrf.mxu0
        %v1615 = vadd.f32 0.0, %v1614
        %v1616 = vpop.f32.mrf.mxu0
        %v1617 = vpop.f32.mrf.mxu0
        %v1618 = vadd.f32 0.0, %v1617
        %v1619 = vpop.f32.mrf.mxu0
        %1620 = vdwg.mxu0
        %v1622 = vlaneseq
        %v1623 = vshrl.u32 %v1622, 7
        %v1624 = vsub.s32 0, %v1623
        %v1625 = vrot.slane %v1272, %v1624
        %v1627 = vmul.f32 %v1495, %v1625
        %v1628 = vmul.f32 %v1498, %v1625
        %v1629 = vmul.f32 %v1503, %v1625
        %v1630 = vmul.f32 %v1506, %v1625
        %v1631 = vmul.f32 %v1511, %v1625
        %v1632 = vmul.f32 %v1514, %v1625
        %v1633 = vmul.f32 %v1519, %v1625
        %v1634 = vmul.f32 %v1522, %v1625
        %v1635 = vmul.f32 %v1527, %v1625
        %v1636 = vmul.f32 %v1530, %v1625
        %v1637 = vmul.f32 %v1535, %v1625
        %v1638 = vmul.f32 %v1538, %v1625
        %v1639 = vmul.f32 %v1543, %v1625
        %v1640 = vmul.f32 %v1546, %v1625
        %v1641 = vmul.f32 %v1551, %v1625
        %v1642 = vmul.f32 %v1554, %v1625
        %v1643 = vmul.f32 %v1559, %v1625
        %v1644 = vmul.f32 %v1562, %v1625
        %v1645 = vmul.f32 %v1567, %v1625
        %v1646 = vmul.f32 %v1570, %v1625
        %v1647 = vmul.f32 %v1575, %v1625
        %v1648 = vmul.f32 %v1578, %v1625
        %v1649 = vmul.f32 %v1583, %v1625
        %v1650 = vmul.f32 %v1586, %v1625
        %v1651 = vmul.f32 %v1591, %v1625
        %v1652 = vmul.f32 %v1594, %v1625
        %v1653 = vmul.f32 %v1599, %v1625
        %v1654 = vmul.f32 %v1602, %v1625
        %v1655 = vmul.f32 %v1607, %v1625
        %v1656 = vmul.f32 %v1610, %v1625
        %v1657 = vmul.f32 %v1615, %v1625
        %v1658 = vmul.f32 %v1618, %v1625
        %v1660 = vlaneseq
        %v1661 = vshrl.u32 %v1660, 7
        %v1662 = vsub.s32 0, %v1661
        %v1663 = vrot.slane %v1273, %v1662
        %v1665 = vadd.f32 %v1627, %v1663
        %v1666 = vadd.f32 %v1628, %v1663
        %v1667 = vadd.f32 %v1629, %v1663
        %v1668 = vadd.f32 %v1630, %v1663
        %v1669 = vadd.f32 %v1631, %v1663
        %v1670 = vadd.f32 %v1632, %v1663
        %v1671 = vadd.f32 %v1633, %v1663
        %v1672 = vadd.f32 %v1634, %v1663
        %v1673 = vadd.f32 %v1635, %v1663
        %v1674 = vadd.f32 %v1636, %v1663
        %v1675 = vadd.f32 %v1637, %v1663
        %v1676 = vadd.f32 %v1638, %v1663
        %v1677 = vadd.f32 %v1639, %v1663
        %v1678 = vadd.f32 %v1640, %v1663
        %v1679 = vadd.f32 %v1641, %v1663
        %v1680 = vadd.f32 %v1642, %v1663
        %v1681 = vadd.f32 %v1643, %v1663
        %v1682 = vadd.f32 %v1644, %v1663
        %v1683 = vadd.f32 %v1645, %v1663
        %v1684 = vadd.f32 %v1646, %v1663
        %v1685 = vadd.f32 %v1647, %v1663
        %v1686 = vadd.f32 %v1648, %v1663
        %v1687 = vadd.f32 %v1649, %v1663
        %v1688 = vadd.f32 %v1650, %v1663
        %v1689 = vadd.f32 %v1651, %v1663
        %v1690 = vadd.f32 %v1652, %v1663
        %v1691 = vadd.f32 %v1653, %v1663
        %v1692 = vadd.f32 %v1654, %v1663
        %v1693 = vadd.f32 %v1655, %v1663
        %v1694 = vadd.f32 %v1656, %v1663
        %v1695 = vadd.f32 %v1657, %v1663
        %v1696 = vadd.f32 %v1658, %v1663
        %v1697 = vmax.f32 %v1665, 0.0
        %v1698 = vmax.f32 %v1666, 0.0
        %v1699 = vmax.f32 %v1667, 0.0
        %v1700 = vmax.f32 %v1668, 0.0
        %v1701 = vmax.f32 %v1669, 0.0
        %v1702 = vmax.f32 %v1670, 0.0
        %v1703 = vmax.f32 %v1671, 0.0
        %v1704 = vmax.f32 %v1672, 0.0
        %v1705 = vmax.f32 %v1673, 0.0
        %v1706 = vmax.f32 %v1674, 0.0
        %v1707 = vmax.f32 %v1675, 0.0
        %v1708 = vmax.f32 %v1676, 0.0
        %v1709 = vmax.f32 %v1677, 0.0
        %v1710 = vmax.f32 %v1678, 0.0
        %v1711 = vmax.f32 %v1679, 0.0
        %v1712 = vmax.f32 %v1680, 0.0
        %v1713 = vmax.f32 %v1681, 0.0
        %v1714 = vmax.f32 %v1682, 0.0
        %v1715 = vmax.f32 %v1683, 0.0
        %v1716 = vmax.f32 %v1684, 0.0
        %v1717 = vmax.f32 %v1685, 0.0
        %v1718 = vmax.f32 %v1686, 0.0
        %v1719 = vmax.f32 %v1687, 0.0
        %v1720 = vmax.f32 %v1688, 0.0
        %v1721 = vmax.f32 %v1689, 0.0
        %v1722 = vmax.f32 %v1690, 0.0
        %v1723 = vmax.f32 %v1691, 0.0
        %v1724 = vmax.f32 %v1692, 0.0
        %v1725 = vmax.f32 %v1693, 0.0
        %v1726 = vmax.f32 %v1694, 0.0
        %v1727 = vmax.f32 %v1695, 0.0
        %v1728 = vmax.f32 %v1696, 0.0
        %s1729 = scalar_lea.vmem %s1234, 128 [#allocation2]
        %v1730 = vld [vmem:[%s1729] sm:$0xf]
        %v1731 = vld [vmem:[%s1729 + $0x4] sm:$0xf]
        %v1732 = vld [vmem:[%s1729 + $0x8] sm:$0xf]
        %v1733 = vld [vmem:[%s1729 + $0xc] sm:$0xf]
        %v1734 = vld [vmem:[%s1729 + $0x10] sm:$0xf]
        %v1735 = vld [vmem:[%s1729 + $0x14] sm:$0xf]
        %v1736 = vld [vmem:[%s1729 + $0x18] sm:$0xf]
        %v1737 = vld [vmem:[%s1729 + $0x1c] sm:$0xf]
        %v1738 = vld [vmem:[%s1729 + $0x20] sm:$0xf]
        %v1739 = vld [vmem:[%s1729 + $0x24] sm:$0xf]
        %v1740 = vld [vmem:[%s1729 + $0x28] sm:$0xf]
        %v1741 = vld [vmem:[%s1729 + $0x2c] sm:$0xf]
        %v1742 = vld [vmem:[%s1729 + $0x30] sm:$0xf]
        %v1743 = vld [vmem:[%s1729 + $0x34] sm:$0xf]
        %v1744 = vld [vmem:[%s1729 + $0x38] sm:$0xf]
        %v1745 = vld [vmem:[%s1729 + $0x3c] sm:$0xf]
        %v1746 = vld [vmem:[%s1729 + $0x40] sm:$0xf]
        %v1747 = vld [vmem:[%s1729 + $0x44] sm:$0xf]
        %v1748 = vld [vmem:[%s1729 + $0x48] sm:$0xf]
        %v1749 = vld [vmem:[%s1729 + $0x4c] sm:$0xf]
        %v1750 = vld [vmem:[%s1729 + $0x50] sm:$0xf]
        %v1751 = vld [vmem:[%s1729 + $0x54] sm:$0xf]
        %v1752 = vld [vmem:[%s1729 + $0x58] sm:$0xf]
        %v1753 = vld [vmem:[%s1729 + $0x5c] sm:$0xf]
        %v1754 = vld [vmem:[%s1729 + $0x60] sm:$0xf]
        %v1755 = vld [vmem:[%s1729 + $0x64] sm:$0xf]
        %v1756 = vld [vmem:[%s1729 + $0x68] sm:$0xf]
        %v1757 = vld [vmem:[%s1729 + $0x6c] sm:$0xf]
        %v1758 = vld [vmem:[%s1729 + $0x70] sm:$0xf]
        %v1759 = vld [vmem:[%s1729 + $0x74] sm:$0xf]
        %v1760 = vld [vmem:[%s1729 + $0x78] sm:$0xf]
        %v1761 = vld [vmem:[%s1729 + $0x7c] sm:$0xf]
        %v1794 = vunpack.c.l.b16 %v1730
        %v1795 = vunpack.c.l.b16 %v1731
        %v1796 = vunpack.c.l.b16 %v1732
        %v1797 = vunpack.c.l.b16 %v1733
        %v1798 = vunpack.c.l.b16 %v1734
        %v1799 = vunpack.c.l.b16 %v1735
        %v1800 = vunpack.c.l.b16 %v1736
        %v1801 = vunpack.c.l.b16 %v1737
        %v1802 = vunpack.c.l.b16 %v1738
        %v1803 = vunpack.c.l.b16 %v1739
        %v1804 = vunpack.c.l.b16 %v1740
        %v1805 = vunpack.c.l.b16 %v1741
        %v1806 = vunpack.c.l.b16 %v1742
        %v1807 = vunpack.c.l.b16 %v1743
        %v1808 = vunpack.c.l.b16 %v1744
        %v1809 = vunpack.c.l.b16 %v1745
        %v1810 = vunpack.c.l.b16 %v1746
        %v1811 = vunpack.c.l.b16 %v1747
        %v1812 = vunpack.c.l.b16 %v1748
        %v1813 = vunpack.c.l.b16 %v1749
        %v1814 = vunpack.c.l.b16 %v1750
        %v1815 = vunpack.c.l.b16 %v1751
        %v1816 = vunpack.c.l.b16 %v1752
        %v1817 = vunpack.c.l.b16 %v1753
        %v1818 = vunpack.c.l.b16 %v1754
        %v1819 = vunpack.c.l.b16 %v1755
        %v1820 = vunpack.c.l.b16 %v1756
        %v1821 = vunpack.c.l.b16 %v1757
        %v1822 = vunpack.c.l.b16 %v1758
        %v1823 = vunpack.c.l.b16 %v1759
        %v1824 = vunpack.c.l.b16 %v1760
        %v1825 = vunpack.c.l.b16 %v1761
        %v1826 = vpack.c.b16 %v1795, %v1794
        %v1827 = vpack.c.b16 %v1797, %v1796
        %v1828 = vpack.c.b16 %v1799, %v1798
        %v1829 = vpack.c.b16 %v1801, %v1800
        %v1830 = vpack.c.b16 %v1803, %v1802
        %v1831 = vpack.c.b16 %v1805, %v1804
        %v1832 = vpack.c.b16 %v1807, %v1806
        %v1833 = vpack.c.b16 %v1809, %v1808
        %v1834 = vpack.c.b16 %v1811, %v1810
        %v1835 = vpack.c.b16 %v1813, %v1812
        %v1836 = vpack.c.b16 %v1815, %v1814
        %v1837 = vpack.c.b16 %v1817, %v1816
        %v1838 = vpack.c.b16 %v1819, %v1818
        %v1839 = vpack.c.b16 %v1821, %v1820
        %v1840 = vpack.c.b16 %v1823, %v1822
        %v1841 = vpack.c.b16 %v1825, %v1824
        %v1843 = vsel %vm1407, %v1826, 0
        %v1846 = vsel %vm1407, %v1827, 0
        %v1849 = vsel %vm1407, %v1828, 0
        %v1852 = vsel %vm1407, %v1829, 0
        %v1855 = vsel %vm1407, %v1830, 0
        %v1858 = vsel %vm1407, %v1831, 0
        %v1861 = vsel %vm1407, %v1832, 0
        %v1864 = vsel %vm1407, %v1833, 0
        %v1867 = vsel %vm1407, %v1834, 0
        %v1870 = vsel %vm1407, %v1835, 0
        %v1873 = vsel %vm1407, %v1836, 0
        %v1876 = vsel %vm1407, %v1837, 0
        %v1879 = vsel %vm1407, %v1838, 0
        %v1882 = vsel %vm1407, %v1839, 0
        %v1885 = vsel %vm1407, %v1840, 0
        %v1888 = vsel %vm1407, %v1841, 0
        %1890 = vmatprep.subr.bf16.mxu0 0
        %1891 = vmatpush1.bf16.msra.mxu0 0
        %1892 = vmatprep.subr.bf16.mxu0 0
        %1893 = vmatpush1.bf16.msra.mxu0 0
        %1894 = vmatprep.subr.bf16.mxu0 0
        %1895 = vmatpush1.bf16.msra.mxu0 0
        %1896 = vmatprep.subr.bf16.mxu0 0
        %1897 = vmatpush1.bf16.msra.mxu0 0
        %1898 = vmatprep.subr.bf16.mxu0 0
        %1899 = vmatpush1.bf16.msra.mxu0 %v1458
        %1900 = vmatprep.subr.bf16.mxu0 0
        %1901 = vmatpush1.bf16.msra.mxu0 %v1402
        %1902 = vmatprep.subr.bf16.mxu0 0
        %1903 = vmatpush1.bf16.msra.mxu0 %v1401
        %1904 = vmatprep.subr.bf16.mxu0 0
        %1905 = vmatpush1.bf16.msra.mxu0 %v1400
        %1906 = vmatprep.subr.bf16.mxu0 0
        %1907 = vmatpush2.bf16.msra.mxu0 0
        %1908 = vmatprep.subr.bf16.mxu0 0
        %1909 = vmatpush2.bf16.msra.mxu0 0
        %1910 = vmatprep.subr.bf16.mxu0 0
        %1911 = vmatpush2.bf16.msra.mxu0 0
        %1912 = vmatprep.subr.bf16.mxu0 0
        %1913 = vmatpush2.bf16.msra.mxu0 0
        %1914 = vmatprep.subr.bf16.mxu0 0
        %1915 = vmatpush2.bf16.msra.mxu0 0
        %1916 = vmatprep.subr.bf16.mxu0 0
        %1917 = vmatpush2.bf16.msra.mxu0 0
        %1918 = vmatprep.subr.bf16.mxu0 0
        %1919 = vmatpush2.bf16.msra.mxu0 0
        %1920 = vmatprep.subr.bf16.mxu0 0
        %1921 = vmatpush2.bf16.msra.mxu0 0
        %1922 = vmatprep.mubr.bf16.mxu0 0
        %1923 = vmatmul.mubr.bf16.gmra.mxu0 %v1843
        %v1924 = vpop.f32.mrf.mxu0
        %v1925 = vadd.f32 0.0, %v1924
        %v1926 = vpop.f32.mrf.mxu0
        %v1927 = vpop.f32.mrf.mxu0
        %v1928 = vadd.f32 0.0, %v1927
        %v1929 = vpop.f32.mrf.mxu0
        %1930 = vmatprep.mubr.bf16.mxu0 0
        %1931 = vmatmul.mubr.bf16.gmra.mxu0 %v1846
        %v1932 = vpop.f32.mrf.mxu0
        %v1933 = vadd.f32 0.0, %v1932
        %v1934 = vpop.f32.mrf.mxu0
        %v1935 = vpop.f32.mrf.mxu0
        %v1936 = vadd.f32 0.0, %v1935
        %v1937 = vpop.f32.mrf.mxu0
        %1938 = vmatprep.mubr.bf16.mxu0 0
        %1939 = vmatmul.mubr.bf16.gmra.mxu0 %v1849
        %v1940 = vpop.f32.mrf.mxu0
        %v1941 = vadd.f32 0.0, %v1940
        %v1942 = vpop.f32.mrf.mxu0
        %v1943 = vpop.f32.mrf.mxu0
        %v1944 = vadd.f32 0.0, %v1943
        %v1945 = vpop.f32.mrf.mxu0
        %1946 = vmatprep.mubr.bf16.mxu0 0
        %1947 = vmatmul.mubr.bf16.gmra.mxu0 %v1852
        %v1948 = vpop.f32.mrf.mxu0
        %v1949 = vadd.f32 0.0, %v1948
        %v1950 = vpop.f32.mrf.mxu0
        %v1951 = vpop.f32.mrf.mxu0
        %v1952 = vadd.f32 0.0, %v1951
        %v1953 = vpop.f32.mrf.mxu0
        %1954 = vmatprep.mubr.bf16.mxu0 0
        %1955 = vmatmul.mubr.bf16.gmra.mxu0 %v1855
        %v1956 = vpop.f32.mrf.mxu0
        %v1957 = vadd.f32 0.0, %v1956
        %v1958 = vpop.f32.mrf.mxu0
        %v1959 = vpop.f32.mrf.mxu0
        %v1960 = vadd.f32 0.0, %v1959
        %v1961 = vpop.f32.mrf.mxu0
        %1962 = vmatprep.mubr.bf16.mxu0 0
        %1963 = vmatmul.mubr.bf16.gmra.mxu0 %v1858
        %v1964 = vpop.f32.mrf.mxu0
        %v1965 = vadd.f32 0.0, %v1964
        %v1966 = vpop.f32.mrf.mxu0
        %v1967 = vpop.f32.mrf.mxu0
        %v1968 = vadd.f32 0.0, %v1967
        %v1969 = vpop.f32.mrf.mxu0
        %1970 = vmatprep.mubr.bf16.mxu0 0
        %1971 = vmatmul.mubr.bf16.gmra.mxu0 %v1861
        %v1972 = vpop.f32.mrf.mxu0
        %v1973 = vadd.f32 0.0, %v1972
        %v1974 = vpop.f32.mrf.mxu0
        %v1975 = vpop.f32.mrf.mxu0
        %v1976 = vadd.f32 0.0, %v1975
        %v1977 = vpop.f32.mrf.mxu0
        %1978 = vmatprep.mubr.bf16.mxu0 0
        %1979 = vmatmul.mubr.bf16.gmra.mxu0 %v1864
        %v1980 = vpop.f32.mrf.mxu0
        %v1981 = vadd.f32 0.0, %v1980
        %v1982 = vpop.f32.mrf.mxu0
        %v1983 = vpop.f32.mrf.mxu0
        %v1984 = vadd.f32 0.0, %v1983
        %v1985 = vpop.f32.mrf.mxu0
        %1986 = vmatprep.mubr.bf16.mxu0 0
        %1987 = vmatmul.mubr.bf16.gmra.mxu0 %v1867
        %v1988 = vpop.f32.mrf.mxu0
        %v1989 = vadd.f32 0.0, %v1988
        %v1990 = vpop.f32.mrf.mxu0
        %v1991 = vpop.f32.mrf.mxu0
        %v1992 = vadd.f32 0.0, %v1991
        %v1993 = vpop.f32.mrf.mxu0
        %1994 = vmatprep.mubr.bf16.mxu0 0
        %1995 = vmatmul.mubr.bf16.gmra.mxu0 %v1870
        %v1996 = vpop.f32.mrf.mxu0
        %v1997 = vadd.f32 0.0, %v1996
        %v1998 = vpop.f32.mrf.mxu0
        %v1999 = vpop.f32.mrf.mxu0
        %v2000 = vadd.f32 0.0, %v1999
        %v2001 = vpop.f32.mrf.mxu0
        %2002 = vmatprep.mubr.bf16.mxu0 0
        %2003 = vmatmul.mubr.bf16.gmra.mxu0 %v1873
        %v2004 = vpop.f32.mrf.mxu0
        %v2005 = vadd.f32 0.0, %v2004
        %v2006 = vpop.f32.mrf.mxu0
        %v2007 = vpop.f32.mrf.mxu0
        %v2008 = vadd.f32 0.0, %v2007
        %v2009 = vpop.f32.mrf.mxu0
        %2010 = vmatprep.mubr.bf16.mxu0 0
        %2011 = vmatmul.mubr.bf16.gmra.mxu0 %v1876
        %v2012 = vpop.f32.mrf.mxu0
        %v2013 = vadd.f32 0.0, %v2012
        %v2014 = vpop.f32.mrf.mxu0
        %v2015 = vpop.f32.mrf.mxu0
        %v2016 = vadd.f32 0.0, %v2015
        %v2017 = vpop.f32.mrf.mxu0
        %2018 = vmatprep.mubr.bf16.mxu0 0
        %2019 = vmatmul.mubr.bf16.gmra.mxu0 %v1879
        %v2020 = vpop.f32.mrf.mxu0
        %v2021 = vadd.f32 0.0, %v2020
        %v2022 = vpop.f32.mrf.mxu0
        %v2023 = vpop.f32.mrf.mxu0
        %v2024 = vadd.f32 0.0, %v2023
        %v2025 = vpop.f32.mrf.mxu0
        %2026 = vmatprep.mubr.bf16.mxu0 0
        %2027 = vmatmul.mubr.bf16.gmra.mxu0 %v1882
        %v2028 = vpop.f32.mrf.mxu0
        %v2029 = vadd.f32 0.0, %v2028
        %v2030 = vpop.f32.mrf.mxu0
        %v2031 = vpop.f32.mrf.mxu0
        %v2032 = vadd.f32 0.0, %v2031
        %v2033 = vpop.f32.mrf.mxu0
        %2034 = vmatprep.mubr.bf16.mxu0 0
        %2035 = vmatmul.mubr.bf16.gmra.mxu0 %v1885
        %v2036 = vpop.f32.mrf.mxu0
        %v2037 = vadd.f32 0.0, %v2036
        %v2038 = vpop.f32.mrf.mxu0
        %v2039 = vpop.f32.mrf.mxu0
        %v2040 = vadd.f32 0.0, %v2039
        %v2041 = vpop.f32.mrf.mxu0
        %2042 = vmatprep.mubr.bf16.mxu0 0
        %2043 = vmatmul.mubr.bf16.gmra.mxu0 %v1888
        %v2044 = vpop.f32.mrf.mxu0
        %v2045 = vadd.f32 0.0, %v2044
        %v2046 = vpop.f32.mrf.mxu0
        %v2047 = vpop.f32.mrf.mxu0
        %v2048 = vadd.f32 0.0, %v2047
        %v2049 = vpop.f32.mrf.mxu0
        %2050 = vdwg.mxu0
        %v2051 = vmul.f32 %v1925, %v1625
        %v2052 = vmul.f32 %v1928, %v1625
        %v2053 = vmul.f32 %v1933, %v1625
        %v2054 = vmul.f32 %v1936, %v1625
        %v2055 = vmul.f32 %v1941, %v1625
        %v2056 = vmul.f32 %v1944, %v1625
        %v2057 = vmul.f32 %v1949, %v1625
        %v2058 = vmul.f32 %v1952, %v1625
        %v2059 = vmul.f32 %v1957, %v1625
        %v2060 = vmul.f32 %v1960, %v1625
        %v2061 = vmul.f32 %v1965, %v1625
        %v2062 = vmul.f32 %v1968, %v1625
        %v2063 = vmul.f32 %v1973, %v1625
        %v2064 = vmul.f32 %v1976, %v1625
        %v2065 = vmul.f32 %v1981, %v1625
        %v2066 = vmul.f32 %v1984, %v1625
        %v2067 = vmul.f32 %v1989, %v1625
        %v2068 = vmul.f32 %v1992, %v1625
        %v2069 = vmul.f32 %v1997, %v1625
        %v2070 = vmul.f32 %v2000, %v1625
        %v2071 = vmul.f32 %v2005, %v1625
        %v2072 = vmul.f32 %v2008, %v1625
        %v2073 = vmul.f32 %v2013, %v1625
        %v2074 = vmul.f32 %v2016, %v1625
        %v2075 = vmul.f32 %v2021, %v1625
        %v2076 = vmul.f32 %v2024, %v1625
        %v2077 = vmul.f32 %v2029, %v1625
        %v2078 = vmul.f32 %v2032, %v1625
        %v2079 = vmul.f32 %v2037, %v1625
        %v2080 = vmul.f32 %v2040, %v1625
        %v2081 = vmul.f32 %v2045, %v1625
        %v2082 = vmul.f32 %v2048, %v1625
        %v2083 = vadd.f32 %v2051, %v1663
        %v2084 = vadd.f32 %v2052, %v1663
        %v2085 = vadd.f32 %v2053, %v1663
        %v2086 = vadd.f32 %v2054, %v1663
        %v2087 = vadd.f32 %v2055, %v1663
        %v2088 = vadd.f32 %v2056, %v1663
        %v2089 = vadd.f32 %v2057, %v1663
        %v2090 = vadd.f32 %v2058, %v1663
        %v2091 = vadd.f32 %v2059, %v1663
        %v2092 = vadd.f32 %v2060, %v1663
        %v2093 = vadd.f32 %v2061, %v1663
        %v2094 = vadd.f32 %v2062, %v1663
        %v2095 = vadd.f32 %v2063, %v1663
        %v2096 = vadd.f32 %v2064, %v1663
        %v2097 = vadd.f32 %v2065, %v1663
        %v2098 = vadd.f32 %v2066, %v1663
        %v2099 = vadd.f32 %v2067, %v1663
        %v2100 = vadd.f32 %v2068, %v1663
        %v2101 = vadd.f32 %v2069, %v1663
        %v2102 = vadd.f32 %v2070, %v1663
        %v2103 = vadd.f32 %v2071, %v1663
        %v2104 = vadd.f32 %v2072, %v1663
        %v2105 = vadd.f32 %v2073, %v1663
        %v2106 = vadd.f32 %v2074, %v1663
        %v2107 = vadd.f32 %v2075, %v1663
        %v2108 = vadd.f32 %v2076, %v1663
        %v2109 = vadd.f32 %v2077, %v1663
        %v2110 = vadd.f32 %v2078, %v1663
        %v2111 = vadd.f32 %v2079, %v1663
        %v2112 = vadd.f32 %v2080, %v1663
        %v2113 = vadd.f32 %v2081, %v1663
        %v2114 = vadd.f32 %v2082, %v1663
        %v2115 = vmax.f32 %v2083, 0.0
        %v2116 = vmax.f32 %v2084, 0.0
        %v2117 = vmax.f32 %v2085, 0.0
        %v2118 = vmax.f32 %v2086, 0.0
        %v2119 = vmax.f32 %v2087, 0.0
        %v2120 = vmax.f32 %v2088, 0.0
        %v2121 = vmax.f32 %v2089, 0.0
        %v2122 = vmax.f32 %v2090, 0.0
        %v2123 = vmax.f32 %v2091, 0.0
        %v2124 = vmax.f32 %v2092, 0.0
        %v2125 = vmax.f32 %v2093, 0.0
        %v2126 = vmax.f32 %v2094, 0.0
        %v2127 = vmax.f32 %v2095, 0.0
        %v2128 = vmax.f32 %v2096, 0.0
        %v2129 = vmax.f32 %v2097, 0.0
        %v2130 = vmax.f32 %v2098, 0.0
        %v2131 = vmax.f32 %v2099, 0.0
        %v2132 = vmax.f32 %v2100, 0.0
        %v2133 = vmax.f32 %v2101, 0.0
        %v2134 = vmax.f32 %v2102, 0.0
        %v2135 = vmax.f32 %v2103, 0.0
        %v2136 = vmax.f32 %v2104, 0.0
        %v2137 = vmax.f32 %v2105, 0.0
        %v2138 = vmax.f32 %v2106, 0.0
        %v2139 = vmax.f32 %v2107, 0.0
        %v2140 = vmax.f32 %v2108, 0.0
        %v2141 = vmax.f32 %v2109, 0.0
        %v2142 = vmax.f32 %v2110, 0.0
        %v2143 = vmax.f32 %v2111, 0.0
        %v2144 = vmax.f32 %v2112, 0.0
        %v2145 = vmax.f32 %v2113, 0.0
        %v2146 = vmax.f32 %v2114, 0.0
        %v2147 = vmax.f32 %v1697, %v2115
        %v2148 = vmax.f32 %v1698, %v2116
        %v2149 = vmax.f32 %v1699, %v2117
        %v2150 = vmax.f32 %v1700, %v2118
        %v2151 = vmax.f32 %v1701, %v2119
        %v2152 = vmax.f32 %v1702, %v2120
        %v2153 = vmax.f32 %v1703, %v2121
        %v2154 = vmax.f32 %v1704, %v2122
        %v2155 = vmax.f32 %v1705, %v2123
        %v2156 = vmax.f32 %v1706, %v2124
        %v2157 = vmax.f32 %v1707, %v2125
        %v2158 = vmax.f32 %v1708, %v2126
        %v2159 = vmax.f32 %v1709, %v2127
        %v2160 = vmax.f32 %v1710, %v2128
        %v2161 = vmax.f32 %v1711, %v2129
        %v2162 = vmax.f32 %v1712, %v2130
        %v2163 = vmax.f32 %v1713, %v2131
        %v2164 = vmax.f32 %v1714, %v2132
        %v2165 = vmax.f32 %v1715, %v2133
        %v2166 = vmax.f32 %v1716, %v2134
        %v2167 = vmax.f32 %v1717, %v2135
        %v2168 = vmax.f32 %v1718, %v2136
        %v2169 = vmax.f32 %v1719, %v2137
        %v2170 = vmax.f32 %v1720, %v2138
        %v2171 = vmax.f32 %v1721, %v2139
        %v2172 = vmax.f32 %v1722, %v2140
        %v2173 = vmax.f32 %v1723, %v2141
        %v2174 = vmax.f32 %v1724, %v2142
        %v2175 = vmax.f32 %v1725, %v2143
        %v2176 = vmax.f32 %v1726, %v2144
        %v2177 = vmax.f32 %v1727, %v2145
        %v2178 = vmax.f32 %v1728, %v2146
        %s2179 = scalar_lea.vmem %s1234, 256 [#allocation2]
        %v2180 = vld [vmem:[%s2179] sm:$0xf]
        %v2181 = vld [vmem:[%s2179 + $0x4] sm:$0xf]
        %v2182 = vld [vmem:[%s2179 + $0x8] sm:$0xf]
        %v2183 = vld [vmem:[%s2179 + $0xc] sm:$0xf]
        %v2184 = vld [vmem:[%s2179 + $0x10] sm:$0xf]
        %v2185 = vld [vmem:[%s2179 + $0x14] sm:$0xf]
        %v2186 = vld [vmem:[%s2179 + $0x18] sm:$0xf]
        %v2187 = vld [vmem:[%s2179 + $0x1c] sm:$0xf]
        %v2188 = vld [vmem:[%s2179 + $0x20] sm:$0xf]
        %v2189 = vld [vmem:[%s2179 + $0x24] sm:$0xf]
        %v2190 = vld [vmem:[%s2179 + $0x28] sm:$0xf]
        %v2191 = vld [vmem:[%s2179 + $0x2c] sm:$0xf]
        %v2192 = vld [vmem:[%s2179 + $0x30] sm:$0xf]
        %v2193 = vld [vmem:[%s2179 + $0x34] sm:$0xf]
        %v2194 = vld [vmem:[%s2179 + $0x38] sm:$0xf]
        %v2195 = vld [vmem:[%s2179 + $0x3c] sm:$0xf]
        %v2196 = vld [vmem:[%s2179 + $0x40] sm:$0xf]
        %v2197 = vld [vmem:[%s2179 + $0x44] sm:$0xf]
        %v2198 = vld [vmem:[%s2179 + $0x48] sm:$0xf]
        %v2199 = vld [vmem:[%s2179 + $0x4c] sm:$0xf]
        %v2200 = vld [vmem:[%s2179 + $0x50] sm:$0xf]
        %v2201 = vld [vmem:[%s2179 + $0x54] sm:$0xf]
        %v2202 = vld [vmem:[%s2179 + $0x58] sm:$0xf]
        %v2203 = vld [vmem:[%s2179 + $0x5c] sm:$0xf]
        %v2204 = vld [vmem:[%s2179 + $0x60] sm:$0xf]
        %v2205 = vld [vmem:[%s2179 + $0x64] sm:$0xf]
        %v2206 = vld [vmem:[%s2179 + $0x68] sm:$0xf]
        %v2207 = vld [vmem:[%s2179 + $0x6c] sm:$0xf]
        %v2208 = vld [vmem:[%s2179 + $0x70] sm:$0xf]
        %v2209 = vld [vmem:[%s2179 + $0x74] sm:$0xf]
        %v2210 = vld [vmem:[%s2179 + $0x78] sm:$0xf]
        %v2211 = vld [vmem:[%s2179 + $0x7c] sm:$0xf]
        %v2244 = vunpack.c.l.b16 %v2180
        %v2245 = vunpack.c.l.b16 %v2181
        %v2246 = vunpack.c.l.b16 %v2182
        %v2247 = vunpack.c.l.b16 %v2183
        %v2248 = vunpack.c.l.b16 %v2184
        %v2249 = vunpack.c.l.b16 %v2185
        %v2250 = vunpack.c.l.b16 %v2186
        %v2251 = vunpack.c.l.b16 %v2187
        %v2252 = vunpack.c.l.b16 %v2188
        %v2253 = vunpack.c.l.b16 %v2189
        %v2254 = vunpack.c.l.b16 %v2190
        %v2255 = vunpack.c.l.b16 %v2191
        %v2256 = vunpack.c.l.b16 %v2192
        %v2257 = vunpack.c.l.b16 %v2193
        %v2258 = vunpack.c.l.b16 %v2194
        %v2259 = vunpack.c.l.b16 %v2195
        %v2260 = vunpack.c.l.b16 %v2196
        %v2261 = vunpack.c.l.b16 %v2197
        %v2262 = vunpack.c.l.b16 %v2198
        %v2263 = vunpack.c.l.b16 %v2199
        %v2264 = vunpack.c.l.b16 %v2200
        %v2265 = vunpack.c.l.b16 %v2201
        %v2266 = vunpack.c.l.b16 %v2202
        %v2267 = vunpack.c.l.b16 %v2203
        %v2268 = vunpack.c.l.b16 %v2204
        %v2269 = vunpack.c.l.b16 %v2205
        %v2270 = vunpack.c.l.b16 %v2206
        %v2271 = vunpack.c.l.b16 %v2207
        %v2272 = vunpack.c.l.b16 %v2208
        %v2273 = vunpack.c.l.b16 %v2209
        %v2274 = vunpack.c.l.b16 %v2210
        %v2275 = vunpack.c.l.b16 %v2211
        %v2276 = vpack.c.b16 %v2245, %v2244
        %v2277 = vpack.c.b16 %v2247, %v2246
        %v2278 = vpack.c.b16 %v2249, %v2248
        %v2279 = vpack.c.b16 %v2251, %v2250
        %v2280 = vpack.c.b16 %v2253, %v2252
        %v2281 = vpack.c.b16 %v2255, %v2254
        %v2282 = vpack.c.b16 %v2257, %v2256
        %v2283 = vpack.c.b16 %v2259, %v2258
        %v2284 = vpack.c.b16 %v2261, %v2260
        %v2285 = vpack.c.b16 %v2263, %v2262
        %v2286 = vpack.c.b16 %v2265, %v2264
        %v2287 = vpack.c.b16 %v2267, %v2266
        %v2288 = vpack.c.b16 %v2269, %v2268
        %v2289 = vpack.c.b16 %v2271, %v2270
        %v2290 = vpack.c.b16 %v2273, %v2272
        %v2291 = vpack.c.b16 %v2275, %v2274
        %v2293 = vsel %vm1407, %v2276, 0
        %v2296 = vsel %vm1407, %v2277, 0
        %v2299 = vsel %vm1407, %v2278, 0
        %v2302 = vsel %vm1407, %v2279, 0
        %v2305 = vsel %vm1407, %v2280, 0
        %v2308 = vsel %vm1407, %v2281, 0
        %v2311 = vsel %vm1407, %v2282, 0
        %v2314 = vsel %vm1407, %v2283, 0
        %v2317 = vsel %vm1407, %v2284, 0
        %v2320 = vsel %vm1407, %v2285, 0
        %v2323 = vsel %vm1407, %v2286, 0
        %v2326 = vsel %vm1407, %v2287, 0
        %v2329 = vsel %vm1407, %v2288, 0
        %v2332 = vsel %vm1407, %v2289, 0
        %v2335 = vsel %vm1407, %v2290, 0
        %v2338 = vsel %vm1407, %v2291, 0
        %2340 = vmatprep.subr.bf16.mxu0 0
        %2341 = vmatpush1.bf16.msra.mxu0 0
        %2342 = vmatprep.subr.bf16.mxu0 0
        %2343 = vmatpush1.bf16.msra.mxu0 0
        %2344 = vmatprep.subr.bf16.mxu0 0
        %2345 = vmatpush1.bf16.msra.mxu0 0
        %2346 = vmatprep.subr.bf16.mxu0 0
        %2347 = vmatpush1.bf16.msra.mxu0 0
        %2348 = vmatprep.subr.bf16.mxu0 0
        %2349 = vmatpush1.bf16.msra.mxu0 %v1458
        %2350 = vmatprep.subr.bf16.mxu0 0
        %2351 = vmatpush1.bf16.msra.mxu0 %v1402
        %2352 = vmatprep.subr.bf16.mxu0 0
        %2353 = vmatpush1.bf16.msra.mxu0 %v1401
        %2354 = vmatprep.subr.bf16.mxu0 0
        %2355 = vmatpush1.bf16.msra.mxu0 %v1400
        %2356 = vmatprep.subr.bf16.mxu0 0
        %2357 = vmatpush2.bf16.msra.mxu0 0
        %2358 = vmatprep.subr.bf16.mxu0 0
        %2359 = vmatpush2.bf16.msra.mxu0 0
        %2360 = vmatprep.subr.bf16.mxu0 0
        %2361 = vmatpush2.bf16.msra.mxu0 0
        %2362 = vmatprep.subr.bf16.mxu0 0
        %2363 = vmatpush2.bf16.msra.mxu0 0
        %2364 = vmatprep.subr.bf16.mxu0 0
        %2365 = vmatpush2.bf16.msra.mxu0 0
        %2366 = vmatprep.subr.bf16.mxu0 0
        %2367 = vmatpush2.bf16.msra.mxu0 0
        %2368 = vmatprep.subr.bf16.mxu0 0
        %2369 = vmatpush2.bf16.msra.mxu0 0
        %2370 = vmatprep.subr.bf16.mxu0 0
        %2371 = vmatpush2.bf16.msra.mxu0 0
        %2372 = vmatprep.mubr.bf16.mxu0 0
        %2373 = vmatmul.mubr.bf16.gmra.mxu0 %v2293
        %v2374 = vpop.f32.mrf.mxu0
        %v2375 = vadd.f32 0.0, %v2374
        %v2376 = vpop.f32.mrf.mxu0
        %v2377 = vpop.f32.mrf.mxu0
        %v2378 = vadd.f32 0.0, %v2377
        %v2379 = vpop.f32.mrf.mxu0
        %2380 = vmatprep.mubr.bf16.mxu0 0
        %2381 = vmatmul.mubr.bf16.gmra.mxu0 %v2296
        %v2382 = vpop.f32.mrf.mxu0
        %v2383 = vadd.f32 0.0, %v2382
        %v2384 = vpop.f32.mrf.mxu0
        %v2385 = vpop.f32.mrf.mxu0
        %v2386 = vadd.f32 0.0, %v2385
        %v2387 = vpop.f32.mrf.mxu0
        %2388 = vmatprep.mubr.bf16.mxu0 0
        %2389 = vmatmul.mubr.bf16.gmra.mxu0 %v2299
        %v2390 = vpop.f32.mrf.mxu0
        %v2391 = vadd.f32 0.0, %v2390
        %v2392 = vpop.f32.mrf.mxu0
        %v2393 = vpop.f32.mrf.mxu0
        %v2394 = vadd.f32 0.0, %v2393
        %v2395 = vpop.f32.mrf.mxu0
        %2396 = vmatprep.mubr.bf16.mxu0 0
        %2397 = vmatmul.mubr.bf16.gmra.mxu0 %v2302
        %v2398 = vpop.f32.mrf.mxu0
        %v2399 = vadd.f32 0.0, %v2398
        %v2400 = vpop.f32.mrf.mxu0
        %v2401 = vpop.f32.mrf.mxu0
        %v2402 = vadd.f32 0.0, %v2401
        %v2403 = vpop.f32.mrf.mxu0
        %2404 = vmatprep.mubr.bf16.mxu0 0
        %2405 = vmatmul.mubr.bf16.gmra.mxu0 %v2305
        %v2406 = vpop.f32.mrf.mxu0
        %v2407 = vadd.f32 0.0, %v2406
        %v2408 = vpop.f32.mrf.mxu0
        %v2409 = vpop.f32.mrf.mxu0
        %v2410 = vadd.f32 0.0, %v2409
        %v2411 = vpop.f32.mrf.mxu0
        %2412 = vmatprep.mubr.bf16.mxu0 0
        %2413 = vmatmul.mubr.bf16.gmra.mxu0 %v2308
        %v2414 = vpop.f32.mrf.mxu0
        %v2415 = vadd.f32 0.0, %v2414
        %v2416 = vpop.f32.mrf.mxu0
        %v2417 = vpop.f32.mrf.mxu0
        %v2418 = vadd.f32 0.0, %v2417
        %v2419 = vpop.f32.mrf.mxu0
        %2420 = vmatprep.mubr.bf16.mxu0 0
        %2421 = vmatmul.mubr.bf16.gmra.mxu0 %v2311
        %v2422 = vpop.f32.mrf.mxu0
        %v2423 = vadd.f32 0.0, %v2422
        %v2424 = vpop.f32.mrf.mxu0
        %v2425 = vpop.f32.mrf.mxu0
        %v2426 = vadd.f32 0.0, %v2425
        %v2427 = vpop.f32.mrf.mxu0
        %2428 = vmatprep.mubr.bf16.mxu0 0
        %2429 = vmatmul.mubr.bf16.gmra.mxu0 %v2314
        %v2430 = vpop.f32.mrf.mxu0
        %v2431 = vadd.f32 0.0, %v2430
        %v2432 = vpop.f32.mrf.mxu0
        %v2433 = vpop.f32.mrf.mxu0
        %v2434 = vadd.f32 0.0, %v2433
        %v2435 = vpop.f32.mrf.mxu0
        %2436 = vmatprep.mubr.bf16.mxu0 0
        %2437 = vmatmul.mubr.bf16.gmra.mxu0 %v2317
        %v2438 = vpop.f32.mrf.mxu0
        %v2439 = vadd.f32 0.0, %v2438
        %v2440 = vpop.f32.mrf.mxu0
        %v2441 = vpop.f32.mrf.mxu0
        %v2442 = vadd.f32 0.0, %v2441
        %v2443 = vpop.f32.mrf.mxu0
        %2444 = vmatprep.mubr.bf16.mxu0 0
        %2445 = vmatmul.mubr.bf16.gmra.mxu0 %v2320
        %v2446 = vpop.f32.mrf.mxu0
        %v2447 = vadd.f32 0.0, %v2446
        %v2448 = vpop.f32.mrf.mxu0
        %v2449 = vpop.f32.mrf.mxu0
        %v2450 = vadd.f32 0.0, %v2449
        %v2451 = vpop.f32.mrf.mxu0
        %2452 = vmatprep.mubr.bf16.mxu0 0
        %2453 = vmatmul.mubr.bf16.gmra.mxu0 %v2323
        %v2454 = vpop.f32.mrf.mxu0
        %v2455 = vadd.f32 0.0, %v2454
        %v2456 = vpop.f32.mrf.mxu0
        %v2457 = vpop.f32.mrf.mxu0
        %v2458 = vadd.f32 0.0, %v2457
        %v2459 = vpop.f32.mrf.mxu0
        %2460 = vmatprep.mubr.bf16.mxu0 0
        %2461 = vmatmul.mubr.bf16.gmra.mxu0 %v2326
        %v2462 = vpop.f32.mrf.mxu0
        %v2463 = vadd.f32 0.0, %v2462
        %v2464 = vpop.f32.mrf.mxu0
        %v2465 = vpop.f32.mrf.mxu0
        %v2466 = vadd.f32 0.0, %v2465
        %v2467 = vpop.f32.mrf.mxu0
        %2468 = vmatprep.mubr.bf16.mxu0 0
        %2469 = vmatmul.mubr.bf16.gmra.mxu0 %v2329
        %v2470 = vpop.f32.mrf.mxu0
        %v2471 = vadd.f32 0.0, %v2470
        %v2472 = vpop.f32.mrf.mxu0
        %v2473 = vpop.f32.mrf.mxu0
        %v2474 = vadd.f32 0.0, %v2473
        %v2475 = vpop.f32.mrf.mxu0
        %2476 = vmatprep.mubr.bf16.mxu0 0
        %2477 = vmatmul.mubr.bf16.gmra.mxu0 %v2332
        %v2478 = vpop.f32.mrf.mxu0
        %v2479 = vadd.f32 0.0, %v2478
        %v2480 = vpop.f32.mrf.mxu0
        %v2481 = vpop.f32.mrf.mxu0
        %v2482 = vadd.f32 0.0, %v2481
        %v2483 = vpop.f32.mrf.mxu0
        %2484 = vmatprep.mubr.bf16.mxu0 0
        %2485 = vmatmul.mubr.bf16.gmra.mxu0 %v2335
        %v2486 = vpop.f32.mrf.mxu0
        %v2487 = vadd.f32 0.0, %v2486
        %v2488 = vpop.f32.mrf.mxu0
        %v2489 = vpop.f32.mrf.mxu0
        %v2490 = vadd.f32 0.0, %v2489
        %v2491 = vpop.f32.mrf.mxu0
        %2492 = vmatprep.mubr.bf16.mxu0 0
        %2493 = vmatmul.mubr.bf16.gmra.mxu0 %v2338
        %v2494 = vpop.f32.mrf.mxu0
        %v2495 = vadd.f32 0.0, %v2494
        %v2496 = vpop.f32.mrf.mxu0
        %v2497 = vpop.f32.mrf.mxu0
        %v2498 = vadd.f32 0.0, %v2497
        %v2499 = vpop.f32.mrf.mxu0
        %2500 = vdwg.mxu0
        %v2501 = vmul.f32 %v2375, %v1625
        %v2502 = vmul.f32 %v2378, %v1625
        %v2503 = vmul.f32 %v2383, %v1625
        %v2504 = vmul.f32 %v2386, %v1625
        %v2505 = vmul.f32 %v2391, %v1625
        %v2506 = vmul.f32 %v2394, %v1625
        %v2507 = vmul.f32 %v2399, %v1625
        %v2508 = vmul.f32 %v2402, %v1625
        %v2509 = vmul.f32 %v2407, %v1625
        %v2510 = vmul.f32 %v2410, %v1625
        %v2511 = vmul.f32 %v2415, %v1625
        %v2512 = vmul.f32 %v2418, %v1625
        %v2513 = vmul.f32 %v2423, %v1625
        %v2514 = vmul.f32 %v2426, %v1625
        %v2515 = vmul.f32 %v2431, %v1625
        %v2516 = vmul.f32 %v2434, %v1625
        %v2517 = vmul.f32 %v2439, %v1625
        %v2518 = vmul.f32 %v2442, %v1625
        %v2519 = vmul.f32 %v2447, %v1625
        %v2520 = vmul.f32 %v2450, %v1625
        %v2521 = vmul.f32 %v2455, %v1625
        %v2522 = vmul.f32 %v2458, %v1625
        %v2523 = vmul.f32 %v2463, %v1625
        %v2524 = vmul.f32 %v2466, %v1625
        %v2525 = vmul.f32 %v2471, %v1625
        %v2526 = vmul.f32 %v2474, %v1625
        %v2527 = vmul.f32 %v2479, %v1625
        %v2528 = vmul.f32 %v2482, %v1625
        %v2529 = vmul.f32 %v2487, %v1625
        %v2530 = vmul.f32 %v2490, %v1625
        %v2531 = vmul.f32 %v2495, %v1625
        %v2532 = vmul.f32 %v2498, %v1625
        %v2533 = vadd.f32 %v2501, %v1663
        %v2534 = vadd.f32 %v2502, %v1663
        %v2535 = vadd.f32 %v2503, %v1663
        %v2536 = vadd.f32 %v2504, %v1663
        %v2537 = vadd.f32 %v2505, %v1663
        %v2538 = vadd.f32 %v2506, %v1663
        %v2539 = vadd.f32 %v2507, %v1663
        %v2540 = vadd.f32 %v2508, %v1663
        %v2541 = vadd.f32 %v2509, %v1663
        %v2542 = vadd.f32 %v2510, %v1663
        %v2543 = vadd.f32 %v2511, %v1663
        %v2544 = vadd.f32 %v2512, %v1663
        %v2545 = vadd.f32 %v2513, %v1663
        %v2546 = vadd.f32 %v2514, %v1663
        %v2547 = vadd.f32 %v2515, %v1663
        %v2548 = vadd.f32 %v2516, %v1663
        %v2549 = vadd.f32 %v2517, %v1663
        %v2550 = vadd.f32 %v2518, %v1663
        %v2551 = vadd.f32 %v2519, %v1663
        %v2552 = vadd.f32 %v2520, %v1663
        %v2553 = vadd.f32 %v2521, %v1663
        %v2554 = vadd.f32 %v2522, %v1663
        %v2555 = vadd.f32 %v2523, %v1663
        %v2556 = vadd.f32 %v2524, %v1663
        %v2557 = vadd.f32 %v2525, %v1663
        %v2558 = vadd.f32 %v2526, %v1663
        %v2559 = vadd.f32 %v2527, %v1663
        %v2560 = vadd.f32 %v2528, %v1663
        %v2561 = vadd.f32 %v2529, %v1663
        %v2562 = vadd.f32 %v2530, %v1663
        %v2563 = vadd.f32 %v2531, %v1663
        %v2564 = vadd.f32 %v2532, %v1663
        %v2565 = vmax.f32 %v2533, 0.0
        %v2566 = vmax.f32 %v2534, 0.0
        %v2567 = vmax.f32 %v2535, 0.0
        %v2568 = vmax.f32 %v2536, 0.0
        %v2569 = vmax.f32 %v2537, 0.0
        %v2570 = vmax.f32 %v2538, 0.0
        %v2571 = vmax.f32 %v2539, 0.0
        %v2572 = vmax.f32 %v2540, 0.0
        %v2573 = vmax.f32 %v2541, 0.0
        %v2574 = vmax.f32 %v2542, 0.0
        %v2575 = vmax.f32 %v2543, 0.0
        %v2576 = vmax.f32 %v2544, 0.0
        %v2577 = vmax.f32 %v2545, 0.0
        %v2578 = vmax.f32 %v2546, 0.0
        %v2579 = vmax.f32 %v2547, 0.0
        %v2580 = vmax.f32 %v2548, 0.0
        %v2581 = vmax.f32 %v2549, 0.0
        %v2582 = vmax.f32 %v2550, 0.0
        %v2583 = vmax.f32 %v2551, 0.0
        %v2584 = vmax.f32 %v2552, 0.0
        %v2585 = vmax.f32 %v2553, 0.0
        %v2586 = vmax.f32 %v2554, 0.0
        %v2587 = vmax.f32 %v2555, 0.0
        %v2588 = vmax.f32 %v2556, 0.0
        %v2589 = vmax.f32 %v2557, 0.0
        %v2590 = vmax.f32 %v2558, 0.0
        %v2591 = vmax.f32 %v2559, 0.0
        %v2592 = vmax.f32 %v2560, 0.0
        %v2593 = vmax.f32 %v2561, 0.0
        %v2594 = vmax.f32 %v2562, 0.0
        %v2595 = vmax.f32 %v2563, 0.0
        %v2596 = vmax.f32 %v2564, 0.0
        %v2597 = vmax.f32 %v2147, %v2565
        %v2598 = vmax.f32 %v2148, %v2566
        %v2599 = vmax.f32 %v2149, %v2567
        %v2600 = vmax.f32 %v2150, %v2568
        %v2601 = vmax.f32 %v2151, %v2569
        %v2602 = vmax.f32 %v2152, %v2570
        %v2603 = vmax.f32 %v2153, %v2571
        %v2604 = vmax.f32 %v2154, %v2572
        %v2605 = vmax.f32 %v2155, %v2573
        %v2606 = vmax.f32 %v2156, %v2574
        %v2607 = vmax.f32 %v2157, %v2575
        %v2608 = vmax.f32 %v2158, %v2576
        %v2609 = vmax.f32 %v2159, %v2577
        %v2610 = vmax.f32 %v2160, %v2578
        %v2611 = vmax.f32 %v2161, %v2579
        %v2612 = vmax.f32 %v2162, %v2580
        %v2613 = vmax.f32 %v2163, %v2581
        %v2614 = vmax.f32 %v2164, %v2582
        %v2615 = vmax.f32 %v2165, %v2583
        %v2616 = vmax.f32 %v2166, %v2584
        %v2617 = vmax.f32 %v2167, %v2585
        %v2618 = vmax.f32 %v2168, %v2586
        %v2619 = vmax.f32 %v2169, %v2587
        %v2620 = vmax.f32 %v2170, %v2588
        %v2621 = vmax.f32 %v2171, %v2589
        %v2622 = vmax.f32 %v2172, %v2590
        %v2623 = vmax.f32 %v2173, %v2591
        %v2624 = vmax.f32 %v2174, %v2592
        %v2625 = vmax.f32 %v2175, %v2593
        %v2626 = vmax.f32 %v2176, %v2594
        %v2627 = vmax.f32 %v2177, %v2595
        %v2628 = vmax.f32 %v2178, %v2596
        %s2629 = scalar_lea.vmem %s1234, 384 [#allocation2]
        %v2630 = vld [vmem:[%s2629] sm:$0xf]
        %v2631 = vld [vmem:[%s2629 + $0x4] sm:$0xf]
        %v2632 = vld [vmem:[%s2629 + $0x8] sm:$0xf]
        %v2633 = vld [vmem:[%s2629 + $0xc] sm:$0xf]
        %v2634 = vld [vmem:[%s2629 + $0x10] sm:$0xf]
        %v2635 = vld [vmem:[%s2629 + $0x14] sm:$0xf]
        %v2636 = vld [vmem:[%s2629 + $0x18] sm:$0xf]
        %v2637 = vld [vmem:[%s2629 + $0x1c] sm:$0xf]
        %v2638 = vld [vmem:[%s2629 + $0x20] sm:$0xf]
        %v2639 = vld [vmem:[%s2629 + $0x24] sm:$0xf]
        %v2640 = vld [vmem:[%s2629 + $0x28] sm:$0xf]
        %v2641 = vld [vmem:[%s2629 + $0x2c] sm:$0xf]
        %v2642 = vld [vmem:[%s2629 + $0x30] sm:$0xf]
        %v2643 = vld [vmem:[%s2629 + $0x34] sm:$0xf]
        %v2644 = vld [vmem:[%s2629 + $0x38] sm:$0xf]
        %v2645 = vld [vmem:[%s2629 + $0x3c] sm:$0xf]
        %v2646 = vld [vmem:[%s2629 + $0x40] sm:$0xf]
        %v2647 = vld [vmem:[%s2629 + $0x44] sm:$0xf]
        %v2648 = vld [vmem:[%s2629 + $0x48] sm:$0xf]
        %v2649 = vld [vmem:[%s2629 + $0x4c] sm:$0xf]
        %v2650 = vld [vmem:[%s2629 + $0x50] sm:$0xf]
        %v2651 = vld [vmem:[%s2629 + $0x54] sm:$0xf]
        %v2652 = vld [vmem:[%s2629 + $0x58] sm:$0xf]
        %v2653 = vld [vmem:[%s2629 + $0x5c] sm:$0xf]
        %v2654 = vld [vmem:[%s2629 + $0x60] sm:$0xf]
        %v2655 = vld [vmem:[%s2629 + $0x64] sm:$0xf]
        %v2656 = vld [vmem:[%s2629 + $0x68] sm:$0xf]
        %v2657 = vld [vmem:[%s2629 + $0x6c] sm:$0xf]
        %v2658 = vld [vmem:[%s2629 + $0x70] sm:$0xf]
        %v2659 = vld [vmem:[%s2629 + $0x74] sm:$0xf]
        %v2660 = vld [vmem:[%s2629 + $0x78] sm:$0xf]
        %v2661 = vld [vmem:[%s2629 + $0x7c] sm:$0xf]
        %v2694 = vunpack.c.l.b16 %v2630
        %v2695 = vunpack.c.l.b16 %v2631
        %v2696 = vunpack.c.l.b16 %v2632
        %v2697 = vunpack.c.l.b16 %v2633
        %v2698 = vunpack.c.l.b16 %v2634
        %v2699 = vunpack.c.l.b16 %v2635
        %v2700 = vunpack.c.l.b16 %v2636
        %v2701 = vunpack.c.l.b16 %v2637
        %v2702 = vunpack.c.l.b16 %v2638
        %v2703 = vunpack.c.l.b16 %v2639
        %v2704 = vunpack.c.l.b16 %v2640
        %v2705 = vunpack.c.l.b16 %v2641
        %v2706 = vunpack.c.l.b16 %v2642
        %v2707 = vunpack.c.l.b16 %v2643
        %v2708 = vunpack.c.l.b16 %v2644
        %v2709 = vunpack.c.l.b16 %v2645
        %v2710 = vunpack.c.l.b16 %v2646
        %v2711 = vunpack.c.l.b16 %v2647
        %v2712 = vunpack.c.l.b16 %v2648
        %v2713 = vunpack.c.l.b16 %v2649
        %v2714 = vunpack.c.l.b16 %v2650
        %v2715 = vunpack.c.l.b16 %v2651
        %v2716 = vunpack.c.l.b16 %v2652
        %v2717 = vunpack.c.l.b16 %v2653
        %v2718 = vunpack.c.l.b16 %v2654
        %v2719 = vunpack.c.l.b16 %v2655
        %v2720 = vunpack.c.l.b16 %v2656
        %v2721 = vunpack.c.l.b16 %v2657
        %v2722 = vunpack.c.l.b16 %v2658
        %v2723 = vunpack.c.l.b16 %v2659
        %v2724 = vunpack.c.l.b16 %v2660
        %v2725 = vunpack.c.l.b16 %v2661
        %v2726 = vpack.c.b16 %v2695, %v2694
        %v2727 = vpack.c.b16 %v2697, %v2696
        %v2728 = vpack.c.b16 %v2699, %v2698
        %v2729 = vpack.c.b16 %v2701, %v2700
        %v2730 = vpack.c.b16 %v2703, %v2702
        %v2731 = vpack.c.b16 %v2705, %v2704
        %v2732 = vpack.c.b16 %v2707, %v2706
        %v2733 = vpack.c.b16 %v2709, %v2708
        %v2734 = vpack.c.b16 %v2711, %v2710
        %v2735 = vpack.c.b16 %v2713, %v2712
        %v2736 = vpack.c.b16 %v2715, %v2714
        %v2737 = vpack.c.b16 %v2717, %v2716
        %v2738 = vpack.c.b16 %v2719, %v2718
        %v2739 = vpack.c.b16 %v2721, %v2720
        %v2740 = vpack.c.b16 %v2723, %v2722
        %v2741 = vpack.c.b16 %v2725, %v2724
        %v2743 = vsel %vm1407, %v2726, 0
        %v2746 = vsel %vm1407, %v2727, 0
        %v2749 = vsel %vm1407, %v2728, 0
        %v2752 = vsel %vm1407, %v2729, 0
        %v2755 = vsel %vm1407, %v2730, 0
        %v2758 = vsel %vm1407, %v2731, 0
        %v2761 = vsel %vm1407, %v2732, 0
        %v2764 = vsel %vm1407, %v2733, 0
        %v2767 = vsel %vm1407, %v2734, 0
        %v2770 = vsel %vm1407, %v2735, 0
        %v2773 = vsel %vm1407, %v2736, 0
        %v2776 = vsel %vm1407, %v2737, 0
        %v2779 = vsel %vm1407, %v2738, 0
        %v2782 = vsel %vm1407, %v2739, 0
        %v2785 = vsel %vm1407, %v2740, 0
        %v2788 = vsel %vm1407, %v2741, 0
        %2790 = vmatprep.subr.bf16.mxu0 0
        %2791 = vmatpush1.bf16.msra.mxu0 0
        %2792 = vmatprep.subr.bf16.mxu0 0
        %2793 = vmatpush1.bf16.msra.mxu0 0
        %2794 = vmatprep.subr.bf16.mxu0 0
        %2795 = vmatpush1.bf16.msra.mxu0 0
        %2796 = vmatprep.subr.bf16.mxu0 0
        %2797 = vmatpush1.bf16.msra.mxu0 0
        %2798 = vmatprep.subr.bf16.mxu0 0
        %2799 = vmatpush1.bf16.msra.mxu0 %v1458
        %2800 = vmatprep.subr.bf16.mxu0 0
        %2801 = vmatpush1.bf16.msra.mxu0 %v1402
        %2802 = vmatprep.subr.bf16.mxu0 0
        %2803 = vmatpush1.bf16.msra.mxu0 %v1401
        %2804 = vmatprep.subr.bf16.mxu0 0
        %2805 = vmatpush1.bf16.msra.mxu0 %v1400
        %2806 = vmatprep.subr.bf16.mxu0 0
        %2807 = vmatpush2.bf16.msra.mxu0 0
        %2808 = vmatprep.subr.bf16.mxu0 0
        %2809 = vmatpush2.bf16.msra.mxu0 0
        %2810 = vmatprep.subr.bf16.mxu0 0
        %2811 = vmatpush2.bf16.msra.mxu0 0
        %2812 = vmatprep.subr.bf16.mxu0 0
        %2813 = vmatpush2.bf16.msra.mxu0 0
        %2814 = vmatprep.subr.bf16.mxu0 0
        %2815 = vmatpush2.bf16.msra.mxu0 0
        %2816 = vmatprep.subr.bf16.mxu0 0
        %2817 = vmatpush2.bf16.msra.mxu0 0
        %2818 = vmatprep.subr.bf16.mxu0 0
        %2819 = vmatpush2.bf16.msra.mxu0 0
        %2820 = vmatprep.subr.bf16.mxu0 0
        %2821 = vmatpush2.bf16.msra.mxu0 0
        %2822 = vmatprep.mubr.bf16.mxu0 0
        %2823 = vmatmul.mubr.bf16.gmra.mxu0 %v2743
        %v2824 = vpop.f32.mrf.mxu0
        %v2825 = vadd.f32 0.0, %v2824
        %v2826 = vpop.f32.mrf.mxu0
        %v2827 = vpop.f32.mrf.mxu0
        %v2828 = vadd.f32 0.0, %v2827
        %v2829 = vpop.f32.mrf.mxu0
        %2830 = vmatprep.mubr.bf16.mxu0 0
        %2831 = vmatmul.mubr.bf16.gmra.mxu0 %v2746
        %v2832 = vpop.f32.mrf.mxu0
        %v2833 = vadd.f32 0.0, %v2832
        %v2834 = vpop.f32.mrf.mxu0
        %v2835 = vpop.f32.mrf.mxu0
        %v2836 = vadd.f32 0.0, %v2835
        %v2837 = vpop.f32.mrf.mxu0
        %2838 = vmatprep.mubr.bf16.mxu0 0
        %2839 = vmatmul.mubr.bf16.gmra.mxu0 %v2749
        %v2840 = vpop.f32.mrf.mxu0
        %v2841 = vadd.f32 0.0, %v2840
        %v2842 = vpop.f32.mrf.mxu0
        %v2843 = vpop.f32.mrf.mxu0
        %v2844 = vadd.f32 0.0, %v2843
        %v2845 = vpop.f32.mrf.mxu0
        %2846 = vmatprep.mubr.bf16.mxu0 0
        %2847 = vmatmul.mubr.bf16.gmra.mxu0 %v2752
        %v2848 = vpop.f32.mrf.mxu0
        %v2849 = vadd.f32 0.0, %v2848
        %v2850 = vpop.f32.mrf.mxu0
        %v2851 = vpop.f32.mrf.mxu0
        %v2852 = vadd.f32 0.0, %v2851
        %v2853 = vpop.f32.mrf.mxu0
        %2854 = vmatprep.mubr.bf16.mxu0 0
        %2855 = vmatmul.mubr.bf16.gmra.mxu0 %v2755
        %v2856 = vpop.f32.mrf.mxu0
        %v2857 = vadd.f32 0.0, %v2856
        %v2858 = vpop.f32.mrf.mxu0
        %v2859 = vpop.f32.mrf.mxu0
        %v2860 = vadd.f32 0.0, %v2859
        %v2861 = vpop.f32.mrf.mxu0
        %2862 = vmatprep.mubr.bf16.mxu0 0
        %2863 = vmatmul.mubr.bf16.gmra.mxu0 %v2758
        %v2864 = vpop.f32.mrf.mxu0
        %v2865 = vadd.f32 0.0, %v2864
        %v2866 = vpop.f32.mrf.mxu0
        %v2867 = vpop.f32.mrf.mxu0
        %v2868 = vadd.f32 0.0, %v2867
        %v2869 = vpop.f32.mrf.mxu0
        %2870 = vmatprep.mubr.bf16.mxu0 0
        %2871 = vmatmul.mubr.bf16.gmra.mxu0 %v2761
        %v2872 = vpop.f32.mrf.mxu0
        %v2873 = vadd.f32 0.0, %v2872
        %v2874 = vpop.f32.mrf.mxu0
        %v2875 = vpop.f32.mrf.mxu0
        %v2876 = vadd.f32 0.0, %v2875
        %v2877 = vpop.f32.mrf.mxu0
        %2878 = vmatprep.mubr.bf16.mxu0 0
        %2879 = vmatmul.mubr.bf16.gmra.mxu0 %v2764
        %v2880 = vpop.f32.mrf.mxu0
        %v2881 = vadd.f32 0.0, %v2880
        %v2882 = vpop.f32.mrf.mxu0
        %v2883 = vpop.f32.mrf.mxu0
        %v2884 = vadd.f32 0.0, %v2883
        %v2885 = vpop.f32.mrf.mxu0
        %2886 = vmatprep.mubr.bf16.mxu0 0
        %2887 = vmatmul.mubr.bf16.gmra.mxu0 %v2767
        %v2888 = vpop.f32.mrf.mxu0
        %v2889 = vadd.f32 0.0, %v2888
        %v2890 = vpop.f32.mrf.mxu0
        %v2891 = vpop.f32.mrf.mxu0
        %v2892 = vadd.f32 0.0, %v2891
        %v2893 = vpop.f32.mrf.mxu0
        %2894 = vmatprep.mubr.bf16.mxu0 0
        %2895 = vmatmul.mubr.bf16.gmra.mxu0 %v2770
        %v2896 = vpop.f32.mrf.mxu0
        %v2897 = vadd.f32 0.0, %v2896
        %v2898 = vpop.f32.mrf.mxu0
        %v2899 = vpop.f32.mrf.mxu0
        %v2900 = vadd.f32 0.0, %v2899
        %v2901 = vpop.f32.mrf.mxu0
        %2902 = vmatprep.mubr.bf16.mxu0 0
        %2903 = vmatmul.mubr.bf16.gmra.mxu0 %v2773
        %v2904 = vpop.f32.mrf.mxu0
        %v2905 = vadd.f32 0.0, %v2904
        %v2906 = vpop.f32.mrf.mxu0
        %v2907 = vpop.f32.mrf.mxu0
        %v2908 = vadd.f32 0.0, %v2907
        %v2909 = vpop.f32.mrf.mxu0
        %2910 = vmatprep.mubr.bf16.mxu0 0
        %2911 = vmatmul.mubr.bf16.gmra.mxu0 %v2776
        %v2912 = vpop.f32.mrf.mxu0
        %v2913 = vadd.f32 0.0, %v2912
        %v2914 = vpop.f32.mrf.mxu0
        %v2915 = vpop.f32.mrf.mxu0
        %v2916 = vadd.f32 0.0, %v2915
        %v2917 = vpop.f32.mrf.mxu0
        %2918 = vmatprep.mubr.bf16.mxu0 0
        %2919 = vmatmul.mubr.bf16.gmra.mxu0 %v2779
        %v2920 = vpop.f32.mrf.mxu0
        %v2921 = vadd.f32 0.0, %v2920
        %v2922 = vpop.f32.mrf.mxu0
        %v2923 = vpop.f32.mrf.mxu0
        %v2924 = vadd.f32 0.0, %v2923
        %v2925 = vpop.f32.mrf.mxu0
        %2926 = vmatprep.mubr.bf16.mxu0 0
        %2927 = vmatmul.mubr.bf16.gmra.mxu0 %v2782
        %v2928 = vpop.f32.mrf.mxu0
        %v2929 = vadd.f32 0.0, %v2928
        %v2930 = vpop.f32.mrf.mxu0
        %v2931 = vpop.f32.mrf.mxu0
        %v2932 = vadd.f32 0.0, %v2931
        %v2933 = vpop.f32.mrf.mxu0
        %2934 = vmatprep.mubr.bf16.mxu0 0
        %2935 = vmatmul.mubr.bf16.gmra.mxu0 %v2785
        %v2936 = vpop.f32.mrf.mxu0
        %v2937 = vadd.f32 0.0, %v2936
        %v2938 = vpop.f32.mrf.mxu0
        %v2939 = vpop.f32.mrf.mxu0
        %v2940 = vadd.f32 0.0, %v2939
        %v2941 = vpop.f32.mrf.mxu0
        %2942 = vmatprep.mubr.bf16.mxu0 0
        %2943 = vmatmul.mubr.bf16.gmra.mxu0 %v2788
        %v2944 = vpop.f32.mrf.mxu0
        %v2945 = vadd.f32 0.0, %v2944
        %v2946 = vpop.f32.mrf.mxu0
        %v2947 = vpop.f32.mrf.mxu0
        %v2948 = vadd.f32 0.0, %v2947
        %v2949 = vpop.f32.mrf.mxu0
        %2950 = vdwg.mxu0
        %v2951 = vmul.f32 %v2825, %v1625
        %v2952 = vmul.f32 %v2828, %v1625
        %v2953 = vmul.f32 %v2833, %v1625
        %v2954 = vmul.f32 %v2836, %v1625
        %v2955 = vmul.f32 %v2841, %v1625
        %v2956 = vmul.f32 %v2844, %v1625
        %v2957 = vmul.f32 %v2849, %v1625
        %v2958 = vmul.f32 %v2852, %v1625
        %v2959 = vmul.f32 %v2857, %v1625
        %v2960 = vmul.f32 %v2860, %v1625
        %v2961 = vmul.f32 %v2865, %v1625
        %v2962 = vmul.f32 %v2868, %v1625
        %v2963 = vmul.f32 %v2873, %v1625
        %v2964 = vmul.f32 %v2876, %v1625
        %v2965 = vmul.f32 %v2881, %v1625
        %v2966 = vmul.f32 %v2884, %v1625
        %v2967 = vmul.f32 %v2889, %v1625
        %v2968 = vmul.f32 %v2892, %v1625
        %v2969 = vmul.f32 %v2897, %v1625
        %v2970 = vmul.f32 %v2900, %v1625
        %v2971 = vmul.f32 %v2905, %v1625
        %v2972 = vmul.f32 %v2908, %v1625
        %v2973 = vmul.f32 %v2913, %v1625
        %v2974 = vmul.f32 %v2916, %v1625
        %v2975 = vmul.f32 %v2921, %v1625
        %v2976 = vmul.f32 %v2924, %v1625
        %v2977 = vmul.f32 %v2929, %v1625
        %v2978 = vmul.f32 %v2932, %v1625
        %v2979 = vmul.f32 %v2937, %v1625
        %v2980 = vmul.f32 %v2940, %v1625
        %v2981 = vmul.f32 %v2945, %v1625
        %v2982 = vmul.f32 %v2948, %v1625
        %v2983 = vadd.f32 %v2951, %v1663
        %v2984 = vadd.f32 %v2952, %v1663
        %v2985 = vadd.f32 %v2953, %v1663
        %v2986 = vadd.f32 %v2954, %v1663
        %v2987 = vadd.f32 %v2955, %v1663
        %v2988 = vadd.f32 %v2956, %v1663
        %v2989 = vadd.f32 %v2957, %v1663
        %v2990 = vadd.f32 %v2958, %v1663
        %v2991 = vadd.f32 %v2959, %v1663
        %v2992 = vadd.f32 %v2960, %v1663
        %v2993 = vadd.f32 %v2961, %v1663
        %v2994 = vadd.f32 %v2962, %v1663
        %v2995 = vadd.f32 %v2963, %v1663
        %v2996 = vadd.f32 %v2964, %v1663
        %v2997 = vadd.f32 %v2965, %v1663
        %v2998 = vadd.f32 %v2966, %v1663
        %v2999 = vadd.f32 %v2967, %v1663
        %v3000 = vadd.f32 %v2968, %v1663
        %v3001 = vadd.f32 %v2969, %v1663
        %v3002 = vadd.f32 %v2970, %v1663
        %v3003 = vadd.f32 %v2971, %v1663
        %v3004 = vadd.f32 %v2972, %v1663
        %v3005 = vadd.f32 %v2973, %v1663
        %v3006 = vadd.f32 %v2974, %v1663
        %v3007 = vadd.f32 %v2975, %v1663
        %v3008 = vadd.f32 %v2976, %v1663
        %v3009 = vadd.f32 %v2977, %v1663
        %v3010 = vadd.f32 %v2978, %v1663
        %v3011 = vadd.f32 %v2979, %v1663
        %v3012 = vadd.f32 %v2980, %v1663
        %v3013 = vadd.f32 %v2981, %v1663
        %v3014 = vadd.f32 %v2982, %v1663
        %v3015 = vmax.f32 %v2983, 0.0
        %v3016 = vmax.f32 %v2984, 0.0
        %v3017 = vmax.f32 %v2985, 0.0
        %v3018 = vmax.f32 %v2986, 0.0
        %v3019 = vmax.f32 %v2987, 0.0
        %v3020 = vmax.f32 %v2988, 0.0
        %v3021 = vmax.f32 %v2989, 0.0
        %v3022 = vmax.f32 %v2990, 0.0
        %v3023 = vmax.f32 %v2991, 0.0
        %v3024 = vmax.f32 %v2992, 0.0
        %v3025 = vmax.f32 %v2993, 0.0
        %v3026 = vmax.f32 %v2994, 0.0
        %v3027 = vmax.f32 %v2995, 0.0
        %v3028 = vmax.f32 %v2996, 0.0
        %v3029 = vmax.f32 %v2997, 0.0
        %v3030 = vmax.f32 %v2998, 0.0
        %v3031 = vmax.f32 %v2999, 0.0
        %v3032 = vmax.f32 %v3000, 0.0
        %v3033 = vmax.f32 %v3001, 0.0
        %v3034 = vmax.f32 %v3002, 0.0
        %v3035 = vmax.f32 %v3003, 0.0
        %v3036 = vmax.f32 %v3004, 0.0
        %v3037 = vmax.f32 %v3005, 0.0
        %v3038 = vmax.f32 %v3006, 0.0
        %v3039 = vmax.f32 %v3007, 0.0
        %v3040 = vmax.f32 %v3008, 0.0
        %v3041 = vmax.f32 %v3009, 0.0
        %v3042 = vmax.f32 %v3010, 0.0
        %v3043 = vmax.f32 %v3011, 0.0
        %v3044 = vmax.f32 %v3012, 0.0
        %v3045 = vmax.f32 %v3013, 0.0
        %v3046 = vmax.f32 %v3014, 0.0
        %v3047 = vmax.f32 %v2597, %v3015
        %v3048 = vmax.f32 %v2598, %v3016
        %v3049 = vmax.f32 %v2599, %v3017
        %v3050 = vmax.f32 %v2600, %v3018
        %v3051 = vmax.f32 %v2601, %v3019
        %v3052 = vmax.f32 %v2602, %v3020
        %v3053 = vmax.f32 %v2603, %v3021
        %v3054 = vmax.f32 %v2604, %v3022
        %v3055 = vmax.f32 %v2605, %v3023
        %v3056 = vmax.f32 %v2606, %v3024
        %v3057 = vmax.f32 %v2607, %v3025
        %v3058 = vmax.f32 %v2608, %v3026
        %v3059 = vmax.f32 %v2609, %v3027
        %v3060 = vmax.f32 %v2610, %v3028
        %v3061 = vmax.f32 %v2611, %v3029
        %v3062 = vmax.f32 %v2612, %v3030
        %v3063 = vmax.f32 %v2613, %v3031
        %v3064 = vmax.f32 %v2614, %v3032
        %v3065 = vmax.f32 %v2615, %v3033
        %v3066 = vmax.f32 %v2616, %v3034
        %v3067 = vmax.f32 %v2617, %v3035
        %v3068 = vmax.f32 %v2618, %v3036
        %v3069 = vmax.f32 %v2619, %v3037
        %v3070 = vmax.f32 %v2620, %v3038
        %v3071 = vmax.f32 %v2621, %v3039
        %v3072 = vmax.f32 %v2622, %v3040
        %v3073 = vmax.f32 %v2623, %v3041
        %v3074 = vmax.f32 %v2624, %v3042
        %v3075 = vmax.f32 %v2625, %v3043
        %v3076 = vmax.f32 %v2626, %v3044
        %v3077 = vmax.f32 %v2627, %v3045
        %v3078 = vmax.f32 %v2628, %v3046
        %s3079 = scalar_lea.vmem %s1234, 512 [#allocation2]
        %v3080 = vld [vmem:[%s3079] sm:$0xf]
        %v3081 = vld [vmem:[%s3079 + $0x4] sm:$0xf]
        %v3082 = vld [vmem:[%s3079 + $0x8] sm:$0xf]
        %v3083 = vld [vmem:[%s3079 + $0xc] sm:$0xf]
        %v3084 = vld [vmem:[%s3079 + $0x10] sm:$0xf]
        %v3085 = vld [vmem:[%s3079 + $0x14] sm:$0xf]
        %v3086 = vld [vmem:[%s3079 + $0x18] sm:$0xf]
        %v3087 = vld [vmem:[%s3079 + $0x1c] sm:$0xf]
        %v3088 = vld [vmem:[%s3079 + $0x20] sm:$0xf]
        %v3089 = vld [vmem:[%s3079 + $0x24] sm:$0xf]
        %v3090 = vld [vmem:[%s3079 + $0x28] sm:$0xf]
        %v3091 = vld [vmem:[%s3079 + $0x2c] sm:$0xf]
        %v3092 = vld [vmem:[%s3079 + $0x30] sm:$0xf]
        %v3093 = vld [vmem:[%s3079 + $0x34] sm:$0xf]
        %v3094 = vld [vmem:[%s3079 + $0x38] sm:$0xf]
        %v3095 = vld [vmem:[%s3079 + $0x3c] sm:$0xf]
        %v3096 = vld [vmem:[%s3079 + $0x40] sm:$0xf]
        %v3097 = vld [vmem:[%s3079 + $0x44] sm:$0xf]
        %v3098 = vld [vmem:[%s3079 + $0x48] sm:$0xf]
        %v3099 = vld [vmem:[%s3079 + $0x4c] sm:$0xf]
        %v3100 = vld [vmem:[%s3079 + $0x50] sm:$0xf]
        %v3101 = vld [vmem:[%s3079 + $0x54] sm:$0xf]
        %v3102 = vld [vmem:[%s3079 + $0x58] sm:$0xf]
        %v3103 = vld [vmem:[%s3079 + $0x5c] sm:$0xf]
        %v3104 = vld [vmem:[%s3079 + $0x60] sm:$0xf]
        %v3105 = vld [vmem:[%s3079 + $0x64] sm:$0xf]
        %v3106 = vld [vmem:[%s3079 + $0x68] sm:$0xf]
        %v3107 = vld [vmem:[%s3079 + $0x6c] sm:$0xf]
        %v3108 = vld [vmem:[%s3079 + $0x70] sm:$0xf]
        %v3109 = vld [vmem:[%s3079 + $0x74] sm:$0xf]
        %v3110 = vld [vmem:[%s3079 + $0x78] sm:$0xf]
        %v3111 = vld [vmem:[%s3079 + $0x7c] sm:$0xf]
        %v3144 = vunpack.c.l.b16 %v3080
        %v3145 = vunpack.c.l.b16 %v3081
        %v3146 = vunpack.c.l.b16 %v3082
        %v3147 = vunpack.c.l.b16 %v3083
        %v3148 = vunpack.c.l.b16 %v3084
        %v3149 = vunpack.c.l.b16 %v3085
        %v3150 = vunpack.c.l.b16 %v3086
        %v3151 = vunpack.c.l.b16 %v3087
        %v3152 = vunpack.c.l.b16 %v3088
        %v3153 = vunpack.c.l.b16 %v3089
        %v3154 = vunpack.c.l.b16 %v3090
        %v3155 = vunpack.c.l.b16 %v3091
        %v3156 = vunpack.c.l.b16 %v3092
        %v3157 = vunpack.c.l.b16 %v3093
        %v3158 = vunpack.c.l.b16 %v3094
        %v3159 = vunpack.c.l.b16 %v3095
        %v3160 = vunpack.c.l.b16 %v3096
        %v3161 = vunpack.c.l.b16 %v3097
        %v3162 = vunpack.c.l.b16 %v3098
        %v3163 = vunpack.c.l.b16 %v3099
        %v3164 = vunpack.c.l.b16 %v3100
        %v3165 = vunpack.c.l.b16 %v3101
        %v3166 = vunpack.c.l.b16 %v3102
        %v3167 = vunpack.c.l.b16 %v3103
        %v3168 = vunpack.c.l.b16 %v3104
        %v3169 = vunpack.c.l.b16 %v3105
        %v3170 = vunpack.c.l.b16 %v3106
        %v3171 = vunpack.c.l.b16 %v3107
        %v3172 = vunpack.c.l.b16 %v3108
        %v3173 = vunpack.c.l.b16 %v3109
        %v3174 = vunpack.c.l.b16 %v3110
        %v3175 = vunpack.c.l.b16 %v3111
        %v3176 = vpack.c.b16 %v3145, %v3144
        %v3177 = vpack.c.b16 %v3147, %v3146
        %v3178 = vpack.c.b16 %v3149, %v3148
        %v3179 = vpack.c.b16 %v3151, %v3150
        %v3180 = vpack.c.b16 %v3153, %v3152
        %v3181 = vpack.c.b16 %v3155, %v3154
        %v3182 = vpack.c.b16 %v3157, %v3156
        %v3183 = vpack.c.b16 %v3159, %v3158
        %v3184 = vpack.c.b16 %v3161, %v3160
        %v3185 = vpack.c.b16 %v3163, %v3162
        %v3186 = vpack.c.b16 %v3165, %v3164
        %v3187 = vpack.c.b16 %v3167, %v3166
        %v3188 = vpack.c.b16 %v3169, %v3168
        %v3189 = vpack.c.b16 %v3171, %v3170
        %v3190 = vpack.c.b16 %v3173, %v3172
        %v3191 = vpack.c.b16 %v3175, %v3174
        %v3193 = vsel %vm1407, %v3176, 0
        %v3196 = vsel %vm1407, %v3177, 0
        %v3199 = vsel %vm1407, %v3178, 0
        %v3202 = vsel %vm1407, %v3179, 0
        %v3205 = vsel %vm1407, %v3180, 0
        %v3208 = vsel %vm1407, %v3181, 0
        %v3211 = vsel %vm1407, %v3182, 0
        %v3214 = vsel %vm1407, %v3183, 0
        %v3217 = vsel %vm1407, %v3184, 0
        %v3220 = vsel %vm1407, %v3185, 0
        %v3223 = vsel %vm1407, %v3186, 0
        %v3226 = vsel %vm1407, %v3187, 0
        %v3229 = vsel %vm1407, %v3188, 0
        %v3232 = vsel %vm1407, %v3189, 0
        %v3235 = vsel %vm1407, %v3190, 0
        %v3238 = vsel %vm1407, %v3191, 0
        %3240 = vmatprep.subr.bf16.mxu0 0
        %3241 = vmatpush1.bf16.msra.mxu0 0
        %3242 = vmatprep.subr.bf16.mxu0 0
        %3243 = vmatpush1.bf16.msra.mxu0 0
        %3244 = vmatprep.subr.bf16.mxu0 0
        %3245 = vmatpush1.bf16.msra.mxu0 0
        %3246 = vmatprep.subr.bf16.mxu0 0
        %3247 = vmatpush1.bf16.msra.mxu0 0
        %3248 = vmatprep.subr.bf16.mxu0 0
        %3249 = vmatpush1.bf16.msra.mxu0 %v1458
        %3250 = vmatprep.subr.bf16.mxu0 0
        %3251 = vmatpush1.bf16.msra.mxu0 %v1402
        %3252 = vmatprep.subr.bf16.mxu0 0
        %3253 = vmatpush1.bf16.msra.mxu0 %v1401
        %3254 = vmatprep.subr.bf16.mxu0 0
        %3255 = vmatpush1.bf16.msra.mxu0 %v1400
        %3256 = vmatprep.subr.bf16.mxu0 0
        %3257 = vmatpush2.bf16.msra.mxu0 0
        %3258 = vmatprep.subr.bf16.mxu0 0
        %3259 = vmatpush2.bf16.msra.mxu0 0
        %3260 = vmatprep.subr.bf16.mxu0 0
        %3261 = vmatpush2.bf16.msra.mxu0 0
        %3262 = vmatprep.subr.bf16.mxu0 0
        %3263 = vmatpush2.bf16.msra.mxu0 0
        %3264 = vmatprep.subr.bf16.mxu0 0
        %3265 = vmatpush2.bf16.msra.mxu0 0
        %3266 = vmatprep.subr.bf16.mxu0 0
        %3267 = vmatpush2.bf16.msra.mxu0 0
        %3268 = vmatprep.subr.bf16.mxu0 0
        %3269 = vmatpush2.bf16.msra.mxu0 0
        %3270 = vmatprep.subr.bf16.mxu0 0
        %3271 = vmatpush2.bf16.msra.mxu0 0
        %3272 = vmatprep.mubr.bf16.mxu0 0
        %3273 = vmatmul.mubr.bf16.gmra.mxu0 %v3193
        %v3274 = vpop.f32.mrf.mxu0
        %v3275 = vadd.f32 0.0, %v3274
        %v3276 = vpop.f32.mrf.mxu0
        %v3277 = vpop.f32.mrf.mxu0
        %v3278 = vadd.f32 0.0, %v3277
        %v3279 = vpop.f32.mrf.mxu0
        %3280 = vmatprep.mubr.bf16.mxu0 0
        %3281 = vmatmul.mubr.bf16.gmra.mxu0 %v3196
        %v3282 = vpop.f32.mrf.mxu0
        %v3283 = vadd.f32 0.0, %v3282
        %v3284 = vpop.f32.mrf.mxu0
        %v3285 = vpop.f32.mrf.mxu0
        %v3286 = vadd.f32 0.0, %v3285
        %v3287 = vpop.f32.mrf.mxu0
        %3288 = vmatprep.mubr.bf16.mxu0 0
        %3289 = vmatmul.mubr.bf16.gmra.mxu0 %v3199
        %v3290 = vpop.f32.mrf.mxu0
        %v3291 = vadd.f32 0.0, %v3290
        %v3292 = vpop.f32.mrf.mxu0
        %v3293 = vpop.f32.mrf.mxu0
        %v3294 = vadd.f32 0.0, %v3293
        %v3295 = vpop.f32.mrf.mxu0
        %3296 = vmatprep.mubr.bf16.mxu0 0
        %3297 = vmatmul.mubr.bf16.gmra.mxu0 %v3202
        %v3298 = vpop.f32.mrf.mxu0
        %v3299 = vadd.f32 0.0, %v3298
        %v3300 = vpop.f32.mrf.mxu0
        %v3301 = vpop.f32.mrf.mxu0
        %v3302 = vadd.f32 0.0, %v3301
        %v3303 = vpop.f32.mrf.mxu0
        %3304 = vmatprep.mubr.bf16.mxu0 0
        %3305 = vmatmul.mubr.bf16.gmra.mxu0 %v3205
        %v3306 = vpop.f32.mrf.mxu0
        %v3307 = vadd.f32 0.0, %v3306
        %v3308 = vpop.f32.mrf.mxu0
        %v3309 = vpop.f32.mrf.mxu0
        %v3310 = vadd.f32 0.0, %v3309
        %v3311 = vpop.f32.mrf.mxu0
        %3312 = vmatprep.mubr.bf16.mxu0 0
        %3313 = vmatmul.mubr.bf16.gmra.mxu0 %v3208
        %v3314 = vpop.f32.mrf.mxu0
        %v3315 = vadd.f32 0.0, %v3314
        %v3316 = vpop.f32.mrf.mxu0
        %v3317 = vpop.f32.mrf.mxu0
        %v3318 = vadd.f32 0.0, %v3317
        %v3319 = vpop.f32.mrf.mxu0
        %3320 = vmatprep.mubr.bf16.mxu0 0
        %3321 = vmatmul.mubr.bf16.gmra.mxu0 %v3211
        %v3322 = vpop.f32.mrf.mxu0
        %v3323 = vadd.f32 0.0, %v3322
        %v3324 = vpop.f32.mrf.mxu0
        %v3325 = vpop.f32.mrf.mxu0
        %v3326 = vadd.f32 0.0, %v3325
        %v3327 = vpop.f32.mrf.mxu0
        %3328 = vmatprep.mubr.bf16.mxu0 0
        %3329 = vmatmul.mubr.bf16.gmra.mxu0 %v3214
        %v3330 = vpop.f32.mrf.mxu0
        %v3331 = vadd.f32 0.0, %v3330
        %v3332 = vpop.f32.mrf.mxu0
        %v3333 = vpop.f32.mrf.mxu0
        %v3334 = vadd.f32 0.0, %v3333
        %v3335 = vpop.f32.mrf.mxu0
        %3336 = vmatprep.mubr.bf16.mxu0 0
        %3337 = vmatmul.mubr.bf16.gmra.mxu0 %v3217
        %v3338 = vpop.f32.mrf.mxu0
        %v3339 = vadd.f32 0.0, %v3338
        %v3340 = vpop.f32.mrf.mxu0
        %v3341 = vpop.f32.mrf.mxu0
        %v3342 = vadd.f32 0.0, %v3341
        %v3343 = vpop.f32.mrf.mxu0
        %3344 = vmatprep.mubr.bf16.mxu0 0
        %3345 = vmatmul.mubr.bf16.gmra.mxu0 %v3220
        %v3346 = vpop.f32.mrf.mxu0
        %v3347 = vadd.f32 0.0, %v3346
        %v3348 = vpop.f32.mrf.mxu0
        %v3349 = vpop.f32.mrf.mxu0
        %v3350 = vadd.f32 0.0, %v3349
        %v3351 = vpop.f32.mrf.mxu0
        %3352 = vmatprep.mubr.bf16.mxu0 0
        %3353 = vmatmul.mubr.bf16.gmra.mxu0 %v3223
        %v3354 = vpop.f32.mrf.mxu0
        %v3355 = vadd.f32 0.0, %v3354
        %v3356 = vpop.f32.mrf.mxu0
        %v3357 = vpop.f32.mrf.mxu0
        %v3358 = vadd.f32 0.0, %v3357
        %v3359 = vpop.f32.mrf.mxu0
        %3360 = vmatprep.mubr.bf16.mxu0 0
        %3361 = vmatmul.mubr.bf16.gmra.mxu0 %v3226
        %v3362 = vpop.f32.mrf.mxu0
        %v3363 = vadd.f32 0.0, %v3362
        %v3364 = vpop.f32.mrf.mxu0
        %v3365 = vpop.f32.mrf.mxu0
        %v3366 = vadd.f32 0.0, %v3365
        %v3367 = vpop.f32.mrf.mxu0
        %3368 = vmatprep.mubr.bf16.mxu0 0
        %3369 = vmatmul.mubr.bf16.gmra.mxu0 %v3229
        %v3370 = vpop.f32.mrf.mxu0
        %v3371 = vadd.f32 0.0, %v3370
        %v3372 = vpop.f32.mrf.mxu0
        %v3373 = vpop.f32.mrf.mxu0
        %v3374 = vadd.f32 0.0, %v3373
        %v3375 = vpop.f32.mrf.mxu0
        %3376 = vmatprep.mubr.bf16.mxu0 0
        %3377 = vmatmul.mubr.bf16.gmra.mxu0 %v3232
        %v3378 = vpop.f32.mrf.mxu0
        %v3379 = vadd.f32 0.0, %v3378
        %v3380 = vpop.f32.mrf.mxu0
        %v3381 = vpop.f32.mrf.mxu0
        %v3382 = vadd.f32 0.0, %v3381
        %v3383 = vpop.f32.mrf.mxu0
        %3384 = vmatprep.mubr.bf16.mxu0 0
        %3385 = vmatmul.mubr.bf16.gmra.mxu0 %v3235
        %v3386 = vpop.f32.mrf.mxu0
        %v3387 = vadd.f32 0.0, %v3386
        %v3388 = vpop.f32.mrf.mxu0
        %v3389 = vpop.f32.mrf.mxu0
        %v3390 = vadd.f32 0.0, %v3389
        %v3391 = vpop.f32.mrf.mxu0
        %3392 = vmatprep.mubr.bf16.mxu0 0
        %3393 = vmatmul.mubr.bf16.gmra.mxu0 %v3238
        %v3394 = vpop.f32.mrf.mxu0
        %v3395 = vadd.f32 0.0, %v3394
        %v3396 = vpop.f32.mrf.mxu0
        %v3397 = vpop.f32.mrf.mxu0
        %v3398 = vadd.f32 0.0, %v3397
        %v3399 = vpop.f32.mrf.mxu0
        %3400 = vdwg.mxu0
        %v3401 = vmul.f32 %v3275, %v1625
        %v3402 = vmul.f32 %v3278, %v1625
        %v3403 = vmul.f32 %v3283, %v1625
        %v3404 = vmul.f32 %v3286, %v1625
        %v3405 = vmul.f32 %v3291, %v1625
        %v3406 = vmul.f32 %v3294, %v1625
        %v3407 = vmul.f32 %v3299, %v1625
        %v3408 = vmul.f32 %v3302, %v1625
        %v3409 = vmul.f32 %v3307, %v1625
        %v3410 = vmul.f32 %v3310, %v1625
        %v3411 = vmul.f32 %v3315, %v1625
        %v3412 = vmul.f32 %v3318, %v1625
        %v3413 = vmul.f32 %v3323, %v1625
        %v3414 = vmul.f32 %v3326, %v1625
        %v3415 = vmul.f32 %v3331, %v1625
        %v3416 = vmul.f32 %v3334, %v1625
        %v3417 = vmul.f32 %v3339, %v1625
        %v3418 = vmul.f32 %v3342, %v1625
        %v3419 = vmul.f32 %v3347, %v1625
        %v3420 = vmul.f32 %v3350, %v1625
        %v3421 = vmul.f32 %v3355, %v1625
        %v3422 = vmul.f32 %v3358, %v1625
        %v3423 = vmul.f32 %v3363, %v1625
        %v3424 = vmul.f32 %v3366, %v1625
        %v3425 = vmul.f32 %v3371, %v1625
        %v3426 = vmul.f32 %v3374, %v1625
        %v3427 = vmul.f32 %v3379, %v1625
        %v3428 = vmul.f32 %v3382, %v1625
        %v3429 = vmul.f32 %v3387, %v1625
        %v3430 = vmul.f32 %v3390, %v1625
        %v3431 = vmul.f32 %v3395, %v1625
        %v3432 = vmul.f32 %v3398, %v1625
        %v3433 = vadd.f32 %v3401, %v1663
        %v3434 = vadd.f32 %v3402, %v1663
        %v3435 = vadd.f32 %v3403, %v1663
        %v3436 = vadd.f32 %v3404, %v1663
        %v3437 = vadd.f32 %v3405, %v1663
        %v3438 = vadd.f32 %v3406, %v1663
        %v3439 = vadd.f32 %v3407, %v1663
        %v3440 = vadd.f32 %v3408, %v1663
        %v3441 = vadd.f32 %v3409, %v1663
        %v3442 = vadd.f32 %v3410, %v1663
        %v3443 = vadd.f32 %v3411, %v1663
        %v3444 = vadd.f32 %v3412, %v1663
        %v3445 = vadd.f32 %v3413, %v1663
        %v3446 = vadd.f32 %v3414, %v1663
        %v3447 = vadd.f32 %v3415, %v1663
        %v3448 = vadd.f32 %v3416, %v1663
        %v3449 = vadd.f32 %v3417, %v1663
        %v3450 = vadd.f32 %v3418, %v1663
        %v3451 = vadd.f32 %v3419, %v1663
        %v3452 = vadd.f32 %v3420, %v1663
        %v3453 = vadd.f32 %v3421, %v1663
        %v3454 = vadd.f32 %v3422, %v1663
        %v3455 = vadd.f32 %v3423, %v1663
        %v3456 = vadd.f32 %v3424, %v1663
        %v3457 = vadd.f32 %v3425, %v1663
        %v3458 = vadd.f32 %v3426, %v1663
        %v3459 = vadd.f32 %v3427, %v1663
        %v3460 = vadd.f32 %v3428, %v1663
        %v3461 = vadd.f32 %v3429, %v1663
        %v3462 = vadd.f32 %v3430, %v1663
        %v3463 = vadd.f32 %v3431, %v1663
        %v3464 = vadd.f32 %v3432, %v1663
        %v3465 = vmax.f32 %v3433, 0.0
        %v3466 = vmax.f32 %v3434, 0.0
        %v3467 = vmax.f32 %v3435, 0.0
        %v3468 = vmax.f32 %v3436, 0.0
        %v3469 = vmax.f32 %v3437, 0.0
        %v3470 = vmax.f32 %v3438, 0.0
        %v3471 = vmax.f32 %v3439, 0.0
        %v3472 = vmax.f32 %v3440, 0.0
        %v3473 = vmax.f32 %v3441, 0.0
        %v3474 = vmax.f32 %v3442, 0.0
        %v3475 = vmax.f32 %v3443, 0.0
        %v3476 = vmax.f32 %v3444, 0.0
        %v3477 = vmax.f32 %v3445, 0.0
        %v3478 = vmax.f32 %v3446, 0.0
        %v3479 = vmax.f32 %v3447, 0.0
        %v3480 = vmax.f32 %v3448, 0.0
        %v3481 = vmax.f32 %v3449, 0.0
        %v3482 = vmax.f32 %v3450, 0.0
        %v3483 = vmax.f32 %v3451, 0.0
        %v3484 = vmax.f32 %v3452, 0.0
        %v3485 = vmax.f32 %v3453, 0.0
        %v3486 = vmax.f32 %v3454, 0.0
        %v3487 = vmax.f32 %v3455, 0.0
        %v3488 = vmax.f32 %v3456, 0.0
        %v3489 = vmax.f32 %v3457, 0.0
        %v3490 = vmax.f32 %v3458, 0.0
        %v3491 = vmax.f32 %v3459, 0.0
        %v3492 = vmax.f32 %v3460, 0.0
        %v3493 = vmax.f32 %v3461, 0.0
        %v3494 = vmax.f32 %v3462, 0.0
        %v3495 = vmax.f32 %v3463, 0.0
        %v3496 = vmax.f32 %v3464, 0.0
        %v3497 = vmax.f32 %v3047, %v3465
        %v3498 = vmax.f32 %v3048, %v3466
        %v3499 = vmax.f32 %v3049, %v3467
        %v3500 = vmax.f32 %v3050, %v3468
        %v3501 = vmax.f32 %v3051, %v3469
        %v3502 = vmax.f32 %v3052, %v3470
        %v3503 = vmax.f32 %v3053, %v3471
        %v3504 = vmax.f32 %v3054, %v3472
        %v3505 = vmax.f32 %v3055, %v3473
        %v3506 = vmax.f32 %v3056, %v3474
        %v3507 = vmax.f32 %v3057, %v3475
        %v3508 = vmax.f32 %v3058, %v3476
        %v3509 = vmax.f32 %v3059, %v3477
        %v3510 = vmax.f32 %v3060, %v3478
        %v3511 = vmax.f32 %v3061, %v3479
        %v3512 = vmax.f32 %v3062, %v3480
        %v3513 = vmax.f32 %v3063, %v3481
        %v3514 = vmax.f32 %v3064, %v3482
        %v3515 = vmax.f32 %v3065, %v3483
        %v3516 = vmax.f32 %v3066, %v3484
        %v3517 = vmax.f32 %v3067, %v3485
        %v3518 = vmax.f32 %v3068, %v3486
        %v3519 = vmax.f32 %v3069, %v3487
        %v3520 = vmax.f32 %v3070, %v3488
        %v3521 = vmax.f32 %v3071, %v3489
        %v3522 = vmax.f32 %v3072, %v3490
        %v3523 = vmax.f32 %v3073, %v3491
        %v3524 = vmax.f32 %v3074, %v3492
        %v3525 = vmax.f32 %v3075, %v3493
        %v3526 = vmax.f32 %v3076, %v3494
        %v3527 = vmax.f32 %v3077, %v3495
        %v3528 = vmax.f32 %v3078, %v3496
        %s3529 = scalar_lea.vmem %s1234, 640 [#allocation2]
        %v3530 = vld [vmem:[%s3529] sm:$0xf]
        %v3531 = vld [vmem:[%s3529 + $0x4] sm:$0xf]
        %v3532 = vld [vmem:[%s3529 + $0x8] sm:$0xf]
        %v3533 = vld [vmem:[%s3529 + $0xc] sm:$0xf]
        %v3534 = vld [vmem:[%s3529 + $0x10] sm:$0xf]
        %v3535 = vld [vmem:[%s3529 + $0x14] sm:$0xf]
        %v3536 = vld [vmem:[%s3529 + $0x18] sm:$0xf]
        %v3537 = vld [vmem:[%s3529 + $0x1c] sm:$0xf]
        %v3538 = vld [vmem:[%s3529 + $0x20] sm:$0xf]
        %v3539 = vld [vmem:[%s3529 + $0x24] sm:$0xf]
        %v3540 = vld [vmem:[%s3529 + $0x28] sm:$0xf]
        %v3541 = vld [vmem:[%s3529 + $0x2c] sm:$0xf]
        %v3542 = vld [vmem:[%s3529 + $0x30] sm:$0xf]
        %v3543 = vld [vmem:[%s3529 + $0x34] sm:$0xf]
        %v3544 = vld [vmem:[%s3529 + $0x38] sm:$0xf]
        %v3545 = vld [vmem:[%s3529 + $0x3c] sm:$0xf]
        %v3546 = vld [vmem:[%s3529 + $0x40] sm:$0xf]
        %v3547 = vld [vmem:[%s3529 + $0x44] sm:$0xf]
        %v3548 = vld [vmem:[%s3529 + $0x48] sm:$0xf]
        %v3549 = vld [vmem:[%s3529 + $0x4c] sm:$0xf]
        %v3550 = vld [vmem:[%s3529 + $0x50] sm:$0xf]
        %v3551 = vld [vmem:[%s3529 + $0x54] sm:$0xf]
        %v3552 = vld [vmem:[%s3529 + $0x58] sm:$0xf]
        %v3553 = vld [vmem:[%s3529 + $0x5c] sm:$0xf]
        %v3554 = vld [vmem:[%s3529 + $0x60] sm:$0xf]
        %v3555 = vld [vmem:[%s3529 + $0x64] sm:$0xf]
        %v3556 = vld [vmem:[%s3529 + $0x68] sm:$0xf]
        %v3557 = vld [vmem:[%s3529 + $0x6c] sm:$0xf]
        %v3558 = vld [vmem:[%s3529 + $0x70] sm:$0xf]
        %v3559 = vld [vmem:[%s3529 + $0x74] sm:$0xf]
        %v3560 = vld [vmem:[%s3529 + $0x78] sm:$0xf]
        %v3561 = vld [vmem:[%s3529 + $0x7c] sm:$0xf]
        %v3594 = vunpack.c.l.b16 %v3530
        %v3595 = vunpack.c.l.b16 %v3531
        %v3596 = vunpack.c.l.b16 %v3532
        %v3597 = vunpack.c.l.b16 %v3533
        %v3598 = vunpack.c.l.b16 %v3534
        %v3599 = vunpack.c.l.b16 %v3535
        %v3600 = vunpack.c.l.b16 %v3536
        %v3601 = vunpack.c.l.b16 %v3537
        %v3602 = vunpack.c.l.b16 %v3538
        %v3603 = vunpack.c.l.b16 %v3539
        %v3604 = vunpack.c.l.b16 %v3540
        %v3605 = vunpack.c.l.b16 %v3541
        %v3606 = vunpack.c.l.b16 %v3542
        %v3607 = vunpack.c.l.b16 %v3543
        %v3608 = vunpack.c.l.b16 %v3544
        %v3609 = vunpack.c.l.b16 %v3545
        %v3610 = vunpack.c.l.b16 %v3546
        %v3611 = vunpack.c.l.b16 %v3547
        %v3612 = vunpack.c.l.b16 %v3548
        %v3613 = vunpack.c.l.b16 %v3549
        %v3614 = vunpack.c.l.b16 %v3550
        %v3615 = vunpack.c.l.b16 %v3551
        %v3616 = vunpack.c.l.b16 %v3552
        %v3617 = vunpack.c.l.b16 %v3553
        %v3618 = vunpack.c.l.b16 %v3554
        %v3619 = vunpack.c.l.b16 %v3555
        %v3620 = vunpack.c.l.b16 %v3556
        %v3621 = vunpack.c.l.b16 %v3557
        %v3622 = vunpack.c.l.b16 %v3558
        %v3623 = vunpack.c.l.b16 %v3559
        %v3624 = vunpack.c.l.b16 %v3560
        %v3625 = vunpack.c.l.b16 %v3561
        %v3626 = vpack.c.b16 %v3595, %v3594
        %v3627 = vpack.c.b16 %v3597, %v3596
        %v3628 = vpack.c.b16 %v3599, %v3598
        %v3629 = vpack.c.b16 %v3601, %v3600
        %v3630 = vpack.c.b16 %v3603, %v3602
        %v3631 = vpack.c.b16 %v3605, %v3604
        %v3632 = vpack.c.b16 %v3607, %v3606
        %v3633 = vpack.c.b16 %v3609, %v3608
        %v3634 = vpack.c.b16 %v3611, %v3610
        %v3635 = vpack.c.b16 %v3613, %v3612
        %v3636 = vpack.c.b16 %v3615, %v3614
        %v3637 = vpack.c.b16 %v3617, %v3616
        %v3638 = vpack.c.b16 %v3619, %v3618
        %v3639 = vpack.c.b16 %v3621, %v3620
        %v3640 = vpack.c.b16 %v3623, %v3622
        %v3641 = vpack.c.b16 %v3625, %v3624
        %v3643 = vsel %vm1407, %v3626, 0
        %v3646 = vsel %vm1407, %v3627, 0
        %v3649 = vsel %vm1407, %v3628, 0
        %v3652 = vsel %vm1407, %v3629, 0
        %v3655 = vsel %vm1407, %v3630, 0
        %v3658 = vsel %vm1407, %v3631, 0
        %v3661 = vsel %vm1407, %v3632, 0
        %v3664 = vsel %vm1407, %v3633, 0
        %v3667 = vsel %vm1407, %v3634, 0
        %v3670 = vsel %vm1407, %v3635, 0
        %v3673 = vsel %vm1407, %v3636, 0
        %v3676 = vsel %vm1407, %v3637, 0
        %v3679 = vsel %vm1407, %v3638, 0
        %v3682 = vsel %vm1407, %v3639, 0
        %v3685 = vsel %vm1407, %v3640, 0
        %v3688 = vsel %vm1407, %v3641, 0
        %3690 = vmatprep.subr.bf16.mxu0 0
        %3691 = vmatpush1.bf16.msra.mxu0 0
        %3692 = vmatprep.subr.bf16.mxu0 0
        %3693 = vmatpush1.bf16.msra.mxu0 0
        %3694 = vmatprep.subr.bf16.mxu0 0
        %3695 = vmatpush1.bf16.msra.mxu0 0
        %3696 = vmatprep.subr.bf16.mxu0 0
        %3697 = vmatpush1.bf16.msra.mxu0 0
        %3698 = vmatprep.subr.bf16.mxu0 0
        %3699 = vmatpush1.bf16.msra.mxu0 %v1458
        %3700 = vmatprep.subr.bf16.mxu0 0
        %3701 = vmatpush1.bf16.msra.mxu0 %v1402
        %3702 = vmatprep.subr.bf16.mxu0 0
        %3703 = vmatpush1.bf16.msra.mxu0 %v1401
        %3704 = vmatprep.subr.bf16.mxu0 0
        %3705 = vmatpush1.bf16.msra.mxu0 %v1400
        %3706 = vmatprep.subr.bf16.mxu0 0
        %3707 = vmatpush2.bf16.msra.mxu0 0
        %3708 = vmatprep.subr.bf16.mxu0 0
        %3709 = vmatpush2.bf16.msra.mxu0 0
        %3710 = vmatprep.subr.bf16.mxu0 0
        %3711 = vmatpush2.bf16.msra.mxu0 0
        %3712 = vmatprep.subr.bf16.mxu0 0
        %3713 = vmatpush2.bf16.msra.mxu0 0
        %3714 = vmatprep.subr.bf16.mxu0 0
        %3715 = vmatpush2.bf16.msra.mxu0 0
        %3716 = vmatprep.subr.bf16.mxu0 0
        %3717 = vmatpush2.bf16.msra.mxu0 0
        %3718 = vmatprep.subr.bf16.mxu0 0
        %3719 = vmatpush2.bf16.msra.mxu0 0
        %3720 = vmatprep.subr.bf16.mxu0 0
        %3721 = vmatpush2.bf16.msra.mxu0 0
        %3722 = vmatprep.mubr.bf16.mxu0 0
        %3723 = vmatmul.mubr.bf16.gmra.mxu0 %v3643
        %v3724 = vpop.f32.mrf.mxu0
        %v3725 = vadd.f32 0.0, %v3724
        %v3726 = vpop.f32.mrf.mxu0
        %v3727 = vpop.f32.mrf.mxu0
        %v3728 = vadd.f32 0.0, %v3727
        %v3729 = vpop.f32.mrf.mxu0
        %3730 = vmatprep.mubr.bf16.mxu0 0
        %3731 = vmatmul.mubr.bf16.gmra.mxu0 %v3646
        %v3732 = vpop.f32.mrf.mxu0
        %v3733 = vadd.f32 0.0, %v3732
        %v3734 = vpop.f32.mrf.mxu0
        %v3735 = vpop.f32.mrf.mxu0
        %v3736 = vadd.f32 0.0, %v3735
        %v3737 = vpop.f32.mrf.mxu0
        %3738 = vmatprep.mubr.bf16.mxu0 0
        %3739 = vmatmul.mubr.bf16.gmra.mxu0 %v3649
        %v3740 = vpop.f32.mrf.mxu0
        %v3741 = vadd.f32 0.0, %v3740
        %v3742 = vpop.f32.mrf.mxu0
        %v3743 = vpop.f32.mrf.mxu0
        %v3744 = vadd.f32 0.0, %v3743
        %v3745 = vpop.f32.mrf.mxu0
        %3746 = vmatprep.mubr.bf16.mxu0 0
        %3747 = vmatmul.mubr.bf16.gmra.mxu0 %v3652
        %v3748 = vpop.f32.mrf.mxu0
        %v3749 = vadd.f32 0.0, %v3748
        %v3750 = vpop.f32.mrf.mxu0
        %v3751 = vpop.f32.mrf.mxu0
        %v3752 = vadd.f32 0.0, %v3751
        %v3753 = vpop.f32.mrf.mxu0
        %3754 = vmatprep.mubr.bf16.mxu0 0
        %3755 = vmatmul.mubr.bf16.gmra.mxu0 %v3655
        %v3756 = vpop.f32.mrf.mxu0
        %v3757 = vadd.f32 0.0, %v3756
        %v3758 = vpop.f32.mrf.mxu0
        %v3759 = vpop.f32.mrf.mxu0
        %v3760 = vadd.f32 0.0, %v3759
        %v3761 = vpop.f32.mrf.mxu0
        %3762 = vmatprep.mubr.bf16.mxu0 0
        %3763 = vmatmul.mubr.bf16.gmra.mxu0 %v3658
        %v3764 = vpop.f32.mrf.mxu0
        %v3765 = vadd.f32 0.0, %v3764
        %v3766 = vpop.f32.mrf.mxu0
        %v3767 = vpop.f32.mrf.mxu0
        %v3768 = vadd.f32 0.0, %v3767
        %v3769 = vpop.f32.mrf.mxu0
        %3770 = vmatprep.mubr.bf16.mxu0 0
        %3771 = vmatmul.mubr.bf16.gmra.mxu0 %v3661
        %v3772 = vpop.f32.mrf.mxu0
        %v3773 = vadd.f32 0.0, %v3772
        %v3774 = vpop.f32.mrf.mxu0
        %v3775 = vpop.f32.mrf.mxu0
        %v3776 = vadd.f32 0.0, %v3775
        %v3777 = vpop.f32.mrf.mxu0
        %3778 = vmatprep.mubr.bf16.mxu0 0
        %3779 = vmatmul.mubr.bf16.gmra.mxu0 %v3664
        %v3780 = vpop.f32.mrf.mxu0
        %v3781 = vadd.f32 0.0, %v3780
        %v3782 = vpop.f32.mrf.mxu0
        %v3783 = vpop.f32.mrf.mxu0
        %v3784 = vadd.f32 0.0, %v3783
        %v3785 = vpop.f32.mrf.mxu0
        %3786 = vmatprep.mubr.bf16.mxu0 0
        %3787 = vmatmul.mubr.bf16.gmra.mxu0 %v3667
        %v3788 = vpop.f32.mrf.mxu0
        %v3789 = vadd.f32 0.0, %v3788
        %v3790 = vpop.f32.mrf.mxu0
        %v3791 = vpop.f32.mrf.mxu0
        %v3792 = vadd.f32 0.0, %v3791
        %v3793 = vpop.f32.mrf.mxu0
        %3794 = vmatprep.mubr.bf16.mxu0 0
        %3795 = vmatmul.mubr.bf16.gmra.mxu0 %v3670
        %v3796 = vpop.f32.mrf.mxu0
        %v3797 = vadd.f32 0.0, %v3796
        %v3798 = vpop.f32.mrf.mxu0
        %v3799 = vpop.f32.mrf.mxu0
        %v3800 = vadd.f32 0.0, %v3799
        %v3801 = vpop.f32.mrf.mxu0
        %3802 = vmatprep.mubr.bf16.mxu0 0
        %3803 = vmatmul.mubr.bf16.gmra.mxu0 %v3673
        %v3804 = vpop.f32.mrf.mxu0
        %v3805 = vadd.f32 0.0, %v3804
        %v3806 = vpop.f32.mrf.mxu0
        %v3807 = vpop.f32.mrf.mxu0
        %v3808 = vadd.f32 0.0, %v3807
        %v3809 = vpop.f32.mrf.mxu0
        %3810 = vmatprep.mubr.bf16.mxu0 0
        %3811 = vmatmul.mubr.bf16.gmra.mxu0 %v3676
        %v3812 = vpop.f32.mrf.mxu0
        %v3813 = vadd.f32 0.0, %v3812
        %v3814 = vpop.f32.mrf.mxu0
        %v3815 = vpop.f32.mrf.mxu0
        %v3816 = vadd.f32 0.0, %v3815
        %v3817 = vpop.f32.mrf.mxu0
        %3818 = vmatprep.mubr.bf16.mxu0 0
        %3819 = vmatmul.mubr.bf16.gmra.mxu0 %v3679
        %v3820 = vpop.f32.mrf.mxu0
        %v3821 = vadd.f32 0.0, %v3820
        %v3822 = vpop.f32.mrf.mxu0
        %v3823 = vpop.f32.mrf.mxu0
        %v3824 = vadd.f32 0.0, %v3823
        %v3825 = vpop.f32.mrf.mxu0
        %3826 = vmatprep.mubr.bf16.mxu0 0
        %3827 = vmatmul.mubr.bf16.gmra.mxu0 %v3682
        %v3828 = vpop.f32.mrf.mxu0
        %v3829 = vadd.f32 0.0, %v3828
        %v3830 = vpop.f32.mrf.mxu0
        %v3831 = vpop.f32.mrf.mxu0
        %v3832 = vadd.f32 0.0, %v3831
        %v3833 = vpop.f32.mrf.mxu0
        %3834 = vmatprep.mubr.bf16.mxu0 0
        %3835 = vmatmul.mubr.bf16.gmra.mxu0 %v3685
        %v3836 = vpop.f32.mrf.mxu0
        %v3837 = vadd.f32 0.0, %v3836
        %v3838 = vpop.f32.mrf.mxu0
        %v3839 = vpop.f32.mrf.mxu0
        %v3840 = vadd.f32 0.0, %v3839
        %v3841 = vpop.f32.mrf.mxu0
        %3842 = vmatprep.mubr.bf16.mxu0 0
        %3843 = vmatmul.mubr.bf16.gmra.mxu0 %v3688
        %v3844 = vpop.f32.mrf.mxu0
        %v3845 = vadd.f32 0.0, %v3844
        %v3846 = vpop.f32.mrf.mxu0
        %v3847 = vpop.f32.mrf.mxu0
        %v3848 = vadd.f32 0.0, %v3847
        %v3849 = vpop.f32.mrf.mxu0
        %3850 = vdwg.mxu0
        %v3851 = vmul.f32 %v3725, %v1625
        %v3852 = vmul.f32 %v3728, %v1625
        %v3853 = vmul.f32 %v3733, %v1625
        %v3854 = vmul.f32 %v3736, %v1625
        %v3855 = vmul.f32 %v3741, %v1625
        %v3856 = vmul.f32 %v3744, %v1625
        %v3857 = vmul.f32 %v3749, %v1625
        %v3858 = vmul.f32 %v3752, %v1625
        %v3859 = vmul.f32 %v3757, %v1625
        %v3860 = vmul.f32 %v3760, %v1625
        %v3861 = vmul.f32 %v3765, %v1625
        %v3862 = vmul.f32 %v3768, %v1625
        %v3863 = vmul.f32 %v3773, %v1625
        %v3864 = vmul.f32 %v3776, %v1625
        %v3865 = vmul.f32 %v3781, %v1625
        %v3866 = vmul.f32 %v3784, %v1625
        %v3867 = vmul.f32 %v3789, %v1625
        %v3868 = vmul.f32 %v3792, %v1625
        %v3869 = vmul.f32 %v3797, %v1625
        %v3870 = vmul.f32 %v3800, %v1625
        %v3871 = vmul.f32 %v3805, %v1625
        %v3872 = vmul.f32 %v3808, %v1625
        %v3873 = vmul.f32 %v3813, %v1625
        %v3874 = vmul.f32 %v3816, %v1625
        %v3875 = vmul.f32 %v3821, %v1625
        %v3876 = vmul.f32 %v3824, %v1625
        %v3877 = vmul.f32 %v3829, %v1625
        %v3878 = vmul.f32 %v3832, %v1625
        %v3879 = vmul.f32 %v3837, %v1625
        %v3880 = vmul.f32 %v3840, %v1625
        %v3881 = vmul.f32 %v3845, %v1625
        %v3882 = vmul.f32 %v3848, %v1625
        %v3883 = vadd.f32 %v3851, %v1663
        %v3884 = vadd.f32 %v3852, %v1663
        %v3885 = vadd.f32 %v3853, %v1663
        %v3886 = vadd.f32 %v3854, %v1663
        %v3887 = vadd.f32 %v3855, %v1663
        %v3888 = vadd.f32 %v3856, %v1663
        %v3889 = vadd.f32 %v3857, %v1663
        %v3890 = vadd.f32 %v3858, %v1663
        %v3891 = vadd.f32 %v3859, %v1663
        %v3892 = vadd.f32 %v3860, %v1663
        %v3893 = vadd.f32 %v3861, %v1663
        %v3894 = vadd.f32 %v3862, %v1663
        %v3895 = vadd.f32 %v3863, %v1663
        %v3896 = vadd.f32 %v3864, %v1663
        %v3897 = vadd.f32 %v3865, %v1663
        %v3898 = vadd.f32 %v3866, %v1663
        %v3899 = vadd.f32 %v3867, %v1663
        %v3900 = vadd.f32 %v3868, %v1663
        %v3901 = vadd.f32 %v3869, %v1663
        %v3902 = vadd.f32 %v3870, %v1663
        %v3903 = vadd.f32 %v3871, %v1663
        %v3904 = vadd.f32 %v3872, %v1663
        %v3905 = vadd.f32 %v3873, %v1663
        %v3906 = vadd.f32 %v3874, %v1663
        %v3907 = vadd.f32 %v3875, %v1663
        %v3908 = vadd.f32 %v3876, %v1663
        %v3909 = vadd.f32 %v3877, %v1663
        %v3910 = vadd.f32 %v3878, %v1663
        %v3911 = vadd.f32 %v3879, %v1663
        %v3912 = vadd.f32 %v3880, %v1663
        %v3913 = vadd.f32 %v3881, %v1663
        %v3914 = vadd.f32 %v3882, %v1663
        %v3915 = vmax.f32 %v3883, 0.0
        %v3916 = vmax.f32 %v3884, 0.0
        %v3917 = vmax.f32 %v3885, 0.0
        %v3918 = vmax.f32 %v3886, 0.0
        %v3919 = vmax.f32 %v3887, 0.0
        %v3920 = vmax.f32 %v3888, 0.0
        %v3921 = vmax.f32 %v3889, 0.0
        %v3922 = vmax.f32 %v3890, 0.0
        %v3923 = vmax.f32 %v3891, 0.0
        %v3924 = vmax.f32 %v3892, 0.0
        %v3925 = vmax.f32 %v3893, 0.0
        %v3926 = vmax.f32 %v3894, 0.0
        %v3927 = vmax.f32 %v3895, 0.0
        %v3928 = vmax.f32 %v3896, 0.0
        %v3929 = vmax.f32 %v3897, 0.0
        %v3930 = vmax.f32 %v3898, 0.0
        %v3931 = vmax.f32 %v3899, 0.0
        %v3932 = vmax.f32 %v3900, 0.0
        %v3933 = vmax.f32 %v3901, 0.0
        %v3934 = vmax.f32 %v3902, 0.0
        %v3935 = vmax.f32 %v3903, 0.0
        %v3936 = vmax.f32 %v3904, 0.0
        %v3937 = vmax.f32 %v3905, 0.0
        %v3938 = vmax.f32 %v3906, 0.0
        %v3939 = vmax.f32 %v3907, 0.0
        %v3940 = vmax.f32 %v3908, 0.0
        %v3941 = vmax.f32 %v3909, 0.0
        %v3942 = vmax.f32 %v3910, 0.0
        %v3943 = vmax.f32 %v3911, 0.0
        %v3944 = vmax.f32 %v3912, 0.0
        %v3945 = vmax.f32 %v3913, 0.0
        %v3946 = vmax.f32 %v3914, 0.0
        %v3947 = vmax.f32 %v3497, %v3915
        %v3948 = vmax.f32 %v3498, %v3916
        %v3949 = vmax.f32 %v3499, %v3917
        %v3950 = vmax.f32 %v3500, %v3918
        %v3951 = vmax.f32 %v3501, %v3919
        %v3952 = vmax.f32 %v3502, %v3920
        %v3953 = vmax.f32 %v3503, %v3921
        %v3954 = vmax.f32 %v3504, %v3922
        %v3955 = vmax.f32 %v3505, %v3923
        %v3956 = vmax.f32 %v3506, %v3924
        %v3957 = vmax.f32 %v3507, %v3925
        %v3958 = vmax.f32 %v3508, %v3926
        %v3959 = vmax.f32 %v3509, %v3927
        %v3960 = vmax.f32 %v3510, %v3928
        %v3961 = vmax.f32 %v3511, %v3929
        %v3962 = vmax.f32 %v3512, %v3930
        %v3963 = vmax.f32 %v3513, %v3931
        %v3964 = vmax.f32 %v3514, %v3932
        %v3965 = vmax.f32 %v3515, %v3933
        %v3966 = vmax.f32 %v3516, %v3934
        %v3967 = vmax.f32 %v3517, %v3935
        %v3968 = vmax.f32 %v3518, %v3936
        %v3969 = vmax.f32 %v3519, %v3937
        %v3970 = vmax.f32 %v3520, %v3938
        %v3971 = vmax.f32 %v3521, %v3939
        %v3972 = vmax.f32 %v3522, %v3940
        %v3973 = vmax.f32 %v3523, %v3941
        %v3974 = vmax.f32 %v3524, %v3942
        %v3975 = vmax.f32 %v3525, %v3943
        %v3976 = vmax.f32 %v3526, %v3944
        %v3977 = vmax.f32 %v3527, %v3945
        %v3978 = vmax.f32 %v3528, %v3946
        %s3979 = scalar_lea.vmem %s1234, 768 [#allocation2]
        %v3980 = vld [vmem:[%s3979] sm:$0xf]
        %v3981 = vld [vmem:[%s3979 + $0x4] sm:$0xf]
        %v3982 = vld [vmem:[%s3979 + $0x8] sm:$0xf]
        %v3983 = vld [vmem:[%s3979 + $0xc] sm:$0xf]
        %v3984 = vld [vmem:[%s3979 + $0x10] sm:$0xf]
        %v3985 = vld [vmem:[%s3979 + $0x14] sm:$0xf]
        %v3986 = vld [vmem:[%s3979 + $0x18] sm:$0xf]
        %v3987 = vld [vmem:[%s3979 + $0x1c] sm:$0xf]
        %v3988 = vld [vmem:[%s3979 + $0x20] sm:$0xf]
        %v3989 = vld [vmem:[%s3979 + $0x24] sm:$0xf]
        %v3990 = vld [vmem:[%s3979 + $0x28] sm:$0xf]
        %v3991 = vld [vmem:[%s3979 + $0x2c] sm:$0xf]
        %v3992 = vld [vmem:[%s3979 + $0x30] sm:$0xf]
        %v3993 = vld [vmem:[%s3979 + $0x34] sm:$0xf]
        %v3994 = vld [vmem:[%s3979 + $0x38] sm:$0xf]
        %v3995 = vld [vmem:[%s3979 + $0x3c] sm:$0xf]
        %v3996 = vld [vmem:[%s3979 + $0x40] sm:$0xf]
        %v3997 = vld [vmem:[%s3979 + $0x44] sm:$0xf]
        %v3998 = vld [vmem:[%s3979 + $0x48] sm:$0xf]
        %v3999 = vld [vmem:[%s3979 + $0x4c] sm:$0xf]
        %v4000 = vld [vmem:[%s3979 + $0x50] sm:$0xf]
        %v4001 = vld [vmem:[%s3979 + $0x54] sm:$0xf]
        %v4002 = vld [vmem:[%s3979 + $0x58] sm:$0xf]
        %v4003 = vld [vmem:[%s3979 + $0x5c] sm:$0xf]
        %v4004 = vld [vmem:[%s3979 + $0x60] sm:$0xf]
        %v4005 = vld [vmem:[%s3979 + $0x64] sm:$0xf]
        %v4006 = vld [vmem:[%s3979 + $0x68] sm:$0xf]
        %v4007 = vld [vmem:[%s3979 + $0x6c] sm:$0xf]
        %v4008 = vld [vmem:[%s3979 + $0x70] sm:$0xf]
        %v4009 = vld [vmem:[%s3979 + $0x74] sm:$0xf]
        %v4010 = vld [vmem:[%s3979 + $0x78] sm:$0xf]
        %v4011 = vld [vmem:[%s3979 + $0x7c] sm:$0xf]
        %v4044 = vunpack.c.l.b16 %v3980
        %v4045 = vunpack.c.l.b16 %v3981
        %v4046 = vunpack.c.l.b16 %v3982
        %v4047 = vunpack.c.l.b16 %v3983
        %v4048 = vunpack.c.l.b16 %v3984
        %v4049 = vunpack.c.l.b16 %v3985
        %v4050 = vunpack.c.l.b16 %v3986
        %v4051 = vunpack.c.l.b16 %v3987
        %v4052 = vunpack.c.l.b16 %v3988
        %v4053 = vunpack.c.l.b16 %v3989
        %v4054 = vunpack.c.l.b16 %v3990
        %v4055 = vunpack.c.l.b16 %v3991
        %v4056 = vunpack.c.l.b16 %v3992
        %v4057 = vunpack.c.l.b16 %v3993
        %v4058 = vunpack.c.l.b16 %v3994
        %v4059 = vunpack.c.l.b16 %v3995
        %v4060 = vunpack.c.l.b16 %v3996
        %v4061 = vunpack.c.l.b16 %v3997
        %v4062 = vunpack.c.l.b16 %v3998
        %v4063 = vunpack.c.l.b16 %v3999
        %v4064 = vunpack.c.l.b16 %v4000
        %v4065 = vunpack.c.l.b16 %v4001
        %v4066 = vunpack.c.l.b16 %v4002
        %v4067 = vunpack.c.l.b16 %v4003
        %v4068 = vunpack.c.l.b16 %v4004
        %v4069 = vunpack.c.l.b16 %v4005
        %v4070 = vunpack.c.l.b16 %v4006
        %v4071 = vunpack.c.l.b16 %v4007
        %v4072 = vunpack.c.l.b16 %v4008
        %v4073 = vunpack.c.l.b16 %v4009
        %v4074 = vunpack.c.l.b16 %v4010
        %v4075 = vunpack.c.l.b16 %v4011
        %v4076 = vpack.c.b16 %v4045, %v4044
        %v4077 = vpack.c.b16 %v4047, %v4046
        %v4078 = vpack.c.b16 %v4049, %v4048
        %v4079 = vpack.c.b16 %v4051, %v4050
        %v4080 = vpack.c.b16 %v4053, %v4052
        %v4081 = vpack.c.b16 %v4055, %v4054
        %v4082 = vpack.c.b16 %v4057, %v4056
        %v4083 = vpack.c.b16 %v4059, %v4058
        %v4084 = vpack.c.b16 %v4061, %v4060
        %v4085 = vpack.c.b16 %v4063, %v4062
        %v4086 = vpack.c.b16 %v4065, %v4064
        %v4087 = vpack.c.b16 %v4067, %v4066
        %v4088 = vpack.c.b16 %v4069, %v4068
        %v4089 = vpack.c.b16 %v4071, %v4070
        %v4090 = vpack.c.b16 %v4073, %v4072
        %v4091 = vpack.c.b16 %v4075, %v4074
        %v4093 = vsel %vm1407, %v4076, 0
        %v4096 = vsel %vm1407, %v4077, 0
        %v4099 = vsel %vm1407, %v4078, 0
        %v4102 = vsel %vm1407, %v4079, 0
        %v4105 = vsel %vm1407, %v4080, 0
        %v4108 = vsel %vm1407, %v4081, 0
        %v4111 = vsel %vm1407, %v4082, 0
        %v4114 = vsel %vm1407, %v4083, 0
        %v4117 = vsel %vm1407, %v4084, 0
        %v4120 = vsel %vm1407, %v4085, 0
        %v4123 = vsel %vm1407, %v4086, 0
        %v4126 = vsel %vm1407, %v4087, 0
        %v4129 = vsel %vm1407, %v4088, 0
        %v4132 = vsel %vm1407, %v4089, 0
        %v4135 = vsel %vm1407, %v4090, 0
        %v4138 = vsel %vm1407, %v4091, 0
        %4140 = vmatprep.subr.bf16.mxu0 0
        %4141 = vmatpush1.bf16.msra.mxu0 0
        %4142 = vmatprep.subr.bf16.mxu0 0
        %4143 = vmatpush1.bf16.msra.mxu0 0
        %4144 = vmatprep.subr.bf16.mxu0 0
        %4145 = vmatpush1.bf16.msra.mxu0 0
        %4146 = vmatprep.subr.bf16.mxu0 0
        %4147 = vmatpush1.bf16.msra.mxu0 0
        %4148 = vmatprep.subr.bf16.mxu0 0
        %4149 = vmatpush1.bf16.msra.mxu0 %v1458
        %4150 = vmatprep.subr.bf16.mxu0 0
        %4151 = vmatpush1.bf16.msra.mxu0 %v1402
        %4152 = vmatprep.subr.bf16.mxu0 0
        %4153 = vmatpush1.bf16.msra.mxu0 %v1401
        %4154 = vmatprep.subr.bf16.mxu0 0
        %4155 = vmatpush1.bf16.msra.mxu0 %v1400
        %4156 = vmatprep.subr.bf16.mxu0 0
        %4157 = vmatpush2.bf16.msra.mxu0 0
        %4158 = vmatprep.subr.bf16.mxu0 0
        %4159 = vmatpush2.bf16.msra.mxu0 0
        %4160 = vmatprep.subr.bf16.mxu0 0
        %4161 = vmatpush2.bf16.msra.mxu0 0
        %4162 = vmatprep.subr.bf16.mxu0 0
        %4163 = vmatpush2.bf16.msra.mxu0 0
        %4164 = vmatprep.subr.bf16.mxu0 0
        %4165 = vmatpush2.bf16.msra.mxu0 0
        %4166 = vmatprep.subr.bf16.mxu0 0
        %4167 = vmatpush2.bf16.msra.mxu0 0
        %4168 = vmatprep.subr.bf16.mxu0 0
        %4169 = vmatpush2.bf16.msra.mxu0 0
        %4170 = vmatprep.subr.bf16.mxu0 0
        %4171 = vmatpush2.bf16.msra.mxu0 0
        %4172 = vmatprep.mubr.bf16.mxu0 0
        %4173 = vmatmul.mubr.bf16.gmra.mxu0 %v4093
        %v4174 = vpop.f32.mrf.mxu0
        %v4175 = vadd.f32 0.0, %v4174
        %v4176 = vpop.f32.mrf.mxu0
        %v4177 = vpop.f32.mrf.mxu0
        %v4178 = vadd.f32 0.0, %v4177
        %v4179 = vpop.f32.mrf.mxu0
        %4180 = vmatprep.mubr.bf16.mxu0 0
        %4181 = vmatmul.mubr.bf16.gmra.mxu0 %v4096
        %v4182 = vpop.f32.mrf.mxu0
        %v4183 = vadd.f32 0.0, %v4182
        %v4184 = vpop.f32.mrf.mxu0
        %v4185 = vpop.f32.mrf.mxu0
        %v4186 = vadd.f32 0.0, %v4185
        %v4187 = vpop.f32.mrf.mxu0
        %4188 = vmatprep.mubr.bf16.mxu0 0
        %4189 = vmatmul.mubr.bf16.gmra.mxu0 %v4099
        %v4190 = vpop.f32.mrf.mxu0
        %v4191 = vadd.f32 0.0, %v4190
        %v4192 = vpop.f32.mrf.mxu0
        %v4193 = vpop.f32.mrf.mxu0
        %v4194 = vadd.f32 0.0, %v4193
        %v4195 = vpop.f32.mrf.mxu0
        %4196 = vmatprep.mubr.bf16.mxu0 0
        %4197 = vmatmul.mubr.bf16.gmra.mxu0 %v4102
        %v4198 = vpop.f32.mrf.mxu0
        %v4199 = vadd.f32 0.0, %v4198
        %v4200 = vpop.f32.mrf.mxu0
        %v4201 = vpop.f32.mrf.mxu0
        %v4202 = vadd.f32 0.0, %v4201
        %v4203 = vpop.f32.mrf.mxu0
        %4204 = vmatprep.mubr.bf16.mxu0 0
        %4205 = vmatmul.mubr.bf16.gmra.mxu0 %v4105
        %v4206 = vpop.f32.mrf.mxu0
        %v4207 = vadd.f32 0.0, %v4206
        %v4208 = vpop.f32.mrf.mxu0
        %v4209 = vpop.f32.mrf.mxu0
        %v4210 = vadd.f32 0.0, %v4209
        %v4211 = vpop.f32.mrf.mxu0
        %4212 = vmatprep.mubr.bf16.mxu0 0
        %4213 = vmatmul.mubr.bf16.gmra.mxu0 %v4108
        %v4214 = vpop.f32.mrf.mxu0
        %v4215 = vadd.f32 0.0, %v4214
        %v4216 = vpop.f32.mrf.mxu0
        %v4217 = vpop.f32.mrf.mxu0
        %v4218 = vadd.f32 0.0, %v4217
        %v4219 = vpop.f32.mrf.mxu0
        %4220 = vmatprep.mubr.bf16.mxu0 0
        %4221 = vmatmul.mubr.bf16.gmra.mxu0 %v4111
        %v4222 = vpop.f32.mrf.mxu0
        %v4223 = vadd.f32 0.0, %v4222
        %v4224 = vpop.f32.mrf.mxu0
        %v4225 = vpop.f32.mrf.mxu0
        %v4226 = vadd.f32 0.0, %v4225
        %v4227 = vpop.f32.mrf.mxu0
        %4228 = vmatprep.mubr.bf16.mxu0 0
        %4229 = vmatmul.mubr.bf16.gmra.mxu0 %v4114
        %v4230 = vpop.f32.mrf.mxu0
        %v4231 = vadd.f32 0.0, %v4230
        %v4232 = vpop.f32.mrf.mxu0
        %v4233 = vpop.f32.mrf.mxu0
        %v4234 = vadd.f32 0.0, %v4233
        %v4235 = vpop.f32.mrf.mxu0
        %4236 = vmatprep.mubr.bf16.mxu0 0
        %4237 = vmatmul.mubr.bf16.gmra.mxu0 %v4117
        %v4238 = vpop.f32.mrf.mxu0
        %v4239 = vadd.f32 0.0, %v4238
        %v4240 = vpop.f32.mrf.mxu0
        %v4241 = vpop.f32.mrf.mxu0
        %v4242 = vadd.f32 0.0, %v4241
        %v4243 = vpop.f32.mrf.mxu0
        %4244 = vmatprep.mubr.bf16.mxu0 0
        %4245 = vmatmul.mubr.bf16.gmra.mxu0 %v4120
        %v4246 = vpop.f32.mrf.mxu0
        %v4247 = vadd.f32 0.0, %v4246
        %v4248 = vpop.f32.mrf.mxu0
        %v4249 = vpop.f32.mrf.mxu0
        %v4250 = vadd.f32 0.0, %v4249
        %v4251 = vpop.f32.mrf.mxu0
        %4252 = vmatprep.mubr.bf16.mxu0 0
        %4253 = vmatmul.mubr.bf16.gmra.mxu0 %v4123
        %v4254 = vpop.f32.mrf.mxu0
        %v4255 = vadd.f32 0.0, %v4254
        %v4256 = vpop.f32.mrf.mxu0
        %v4257 = vpop.f32.mrf.mxu0
        %v4258 = vadd.f32 0.0, %v4257
        %v4259 = vpop.f32.mrf.mxu0
        %4260 = vmatprep.mubr.bf16.mxu0 0
        %4261 = vmatmul.mubr.bf16.gmra.mxu0 %v4126
        %v4262 = vpop.f32.mrf.mxu0
        %v4263 = vadd.f32 0.0, %v4262
        %v4264 = vpop.f32.mrf.mxu0
        %v4265 = vpop.f32.mrf.mxu0
        %v4266 = vadd.f32 0.0, %v4265
        %v4267 = vpop.f32.mrf.mxu0
        %4268 = vmatprep.mubr.bf16.mxu0 0
        %4269 = vmatmul.mubr.bf16.gmra.mxu0 %v4129
        %v4270 = vpop.f32.mrf.mxu0
        %v4271 = vadd.f32 0.0, %v4270
        %v4272 = vpop.f32.mrf.mxu0
        %v4273 = vpop.f32.mrf.mxu0
        %v4274 = vadd.f32 0.0, %v4273
        %v4275 = vpop.f32.mrf.mxu0
        %4276 = vmatprep.mubr.bf16.mxu0 0
        %4277 = vmatmul.mubr.bf16.gmra.mxu0 %v4132
        %v4278 = vpop.f32.mrf.mxu0
        %v4279 = vadd.f32 0.0, %v4278
        %v4280 = vpop.f32.mrf.mxu0
        %v4281 = vpop.f32.mrf.mxu0
        %v4282 = vadd.f32 0.0, %v4281
        %v4283 = vpop.f32.mrf.mxu0
        %4284 = vmatprep.mubr.bf16.mxu0 0
        %4285 = vmatmul.mubr.bf16.gmra.mxu0 %v4135
        %v4286 = vpop.f32.mrf.mxu0
        %v4287 = vadd.f32 0.0, %v4286
        %v4288 = vpop.f32.mrf.mxu0
        %v4289 = vpop.f32.mrf.mxu0
        %v4290 = vadd.f32 0.0, %v4289
        %v4291 = vpop.f32.mrf.mxu0
        %4292 = vmatprep.mubr.bf16.mxu0 0
        %4293 = vmatmul.mubr.bf16.gmra.mxu0 %v4138
        %v4294 = vpop.f32.mrf.mxu0
        %v4295 = vadd.f32 0.0, %v4294
        %v4296 = vpop.f32.mrf.mxu0
        %v4297 = vpop.f32.mrf.mxu0
        %v4298 = vadd.f32 0.0, %v4297
        %v4299 = vpop.f32.mrf.mxu0
        %4300 = vdwg.mxu0
        %v4301 = vmul.f32 %v4175, %v1625
        %v4302 = vmul.f32 %v4178, %v1625
        %v4303 = vmul.f32 %v4183, %v1625
        %v4304 = vmul.f32 %v4186, %v1625
        %v4305 = vmul.f32 %v4191, %v1625
        %v4306 = vmul.f32 %v4194, %v1625
        %v4307 = vmul.f32 %v4199, %v1625
        %v4308 = vmul.f32 %v4202, %v1625
        %v4309 = vmul.f32 %v4207, %v1625
        %v4310 = vmul.f32 %v4210, %v1625
        %v4311 = vmul.f32 %v4215, %v1625
        %v4312 = vmul.f32 %v4218, %v1625
        %v4313 = vmul.f32 %v4223, %v1625
        %v4314 = vmul.f32 %v4226, %v1625
        %v4315 = vmul.f32 %v4231, %v1625
        %v4316 = vmul.f32 %v4234, %v1625
        %v4317 = vmul.f32 %v4239, %v1625
        %v4318 = vmul.f32 %v4242, %v1625
        %v4319 = vmul.f32 %v4247, %v1625
        %v4320 = vmul.f32 %v4250, %v1625
        %v4321 = vmul.f32 %v4255, %v1625
        %v4322 = vmul.f32 %v4258, %v1625
        %v4323 = vmul.f32 %v4263, %v1625
        %v4324 = vmul.f32 %v4266, %v1625
        %v4325 = vmul.f32 %v4271, %v1625
        %v4326 = vmul.f32 %v4274, %v1625
        %v4327 = vmul.f32 %v4279, %v1625
        %v4328 = vmul.f32 %v4282, %v1625
        %v4329 = vmul.f32 %v4287, %v1625
        %v4330 = vmul.f32 %v4290, %v1625
        %v4331 = vmul.f32 %v4295, %v1625
        %v4332 = vmul.f32 %v4298, %v1625
        %v4333 = vadd.f32 %v4301, %v1663
        %v4334 = vadd.f32 %v4302, %v1663
        %v4335 = vadd.f32 %v4303, %v1663
        %v4336 = vadd.f32 %v4304, %v1663
        %v4337 = vadd.f32 %v4305, %v1663
        %v4338 = vadd.f32 %v4306, %v1663
        %v4339 = vadd.f32 %v4307, %v1663
        %v4340 = vadd.f32 %v4308, %v1663
        %v4341 = vadd.f32 %v4309, %v1663
        %v4342 = vadd.f32 %v4310, %v1663
        %v4343 = vadd.f32 %v4311, %v1663
        %v4344 = vadd.f32 %v4312, %v1663
        %v4345 = vadd.f32 %v4313, %v1663
        %v4346 = vadd.f32 %v4314, %v1663
        %v4347 = vadd.f32 %v4315, %v1663
        %v4348 = vadd.f32 %v4316, %v1663
        %v4349 = vadd.f32 %v4317, %v1663
        %v4350 = vadd.f32 %v4318, %v1663
        %v4351 = vadd.f32 %v4319, %v1663
        %v4352 = vadd.f32 %v4320, %v1663
        %v4353 = vadd.f32 %v4321, %v1663
        %v4354 = vadd.f32 %v4322, %v1663
        %v4355 = vadd.f32 %v4323, %v1663
        %v4356 = vadd.f32 %v4324, %v1663
        %v4357 = vadd.f32 %v4325, %v1663
        %v4358 = vadd.f32 %v4326, %v1663
        %v4359 = vadd.f32 %v4327, %v1663
        %v4360 = vadd.f32 %v4328, %v1663
        %v4361 = vadd.f32 %v4329, %v1663
        %v4362 = vadd.f32 %v4330, %v1663
        %v4363 = vadd.f32 %v4331, %v1663
        %v4364 = vadd.f32 %v4332, %v1663
        %v4365 = vmax.f32 %v4333, 0.0
        %v4366 = vmax.f32 %v4334, 0.0
        %v4367 = vmax.f32 %v4335, 0.0
        %v4368 = vmax.f32 %v4336, 0.0
        %v4369 = vmax.f32 %v4337, 0.0
        %v4370 = vmax.f32 %v4338, 0.0
        %v4371 = vmax.f32 %v4339, 0.0
        %v4372 = vmax.f32 %v4340, 0.0
        %v4373 = vmax.f32 %v4341, 0.0
        %v4374 = vmax.f32 %v4342, 0.0
        %v4375 = vmax.f32 %v4343, 0.0
        %v4376 = vmax.f32 %v4344, 0.0
        %v4377 = vmax.f32 %v4345, 0.0
        %v4378 = vmax.f32 %v4346, 0.0
        %v4379 = vmax.f32 %v4347, 0.0
        %v4380 = vmax.f32 %v4348, 0.0
        %v4381 = vmax.f32 %v4349, 0.0
        %v4382 = vmax.f32 %v4350, 0.0
        %v4383 = vmax.f32 %v4351, 0.0
        %v4384 = vmax.f32 %v4352, 0.0
        %v4385 = vmax.f32 %v4353, 0.0
        %v4386 = vmax.f32 %v4354, 0.0
        %v4387 = vmax.f32 %v4355, 0.0
        %v4388 = vmax.f32 %v4356, 0.0
        %v4389 = vmax.f32 %v4357, 0.0
        %v4390 = vmax.f32 %v4358, 0.0
        %v4391 = vmax.f32 %v4359, 0.0
        %v4392 = vmax.f32 %v4360, 0.0
        %v4393 = vmax.f32 %v4361, 0.0
        %v4394 = vmax.f32 %v4362, 0.0
        %v4395 = vmax.f32 %v4363, 0.0
        %v4396 = vmax.f32 %v4364, 0.0
        %v4397 = vmax.f32 %v3947, %v4365
        %v4398 = vmax.f32 %v3948, %v4366
        %v4399 = vmax.f32 %v3949, %v4367
        %v4400 = vmax.f32 %v3950, %v4368
        %v4401 = vmax.f32 %v3951, %v4369
        %v4402 = vmax.f32 %v3952, %v4370
        %v4403 = vmax.f32 %v3953, %v4371
        %v4404 = vmax.f32 %v3954, %v4372
        %v4405 = vmax.f32 %v3955, %v4373
        %v4406 = vmax.f32 %v3956, %v4374
        %v4407 = vmax.f32 %v3957, %v4375
        %v4408 = vmax.f32 %v3958, %v4376
        %v4409 = vmax.f32 %v3959, %v4377
        %v4410 = vmax.f32 %v3960, %v4378
        %v4411 = vmax.f32 %v3961, %v4379
        %v4412 = vmax.f32 %v3962, %v4380
        %v4413 = vmax.f32 %v3963, %v4381
        %v4414 = vmax.f32 %v3964, %v4382
        %v4415 = vmax.f32 %v3965, %v4383
        %v4416 = vmax.f32 %v3966, %v4384
        %v4417 = vmax.f32 %v3967, %v4385
        %v4418 = vmax.f32 %v3968, %v4386
        %v4419 = vmax.f32 %v3969, %v4387
        %v4420 = vmax.f32 %v3970, %v4388
        %v4421 = vmax.f32 %v3971, %v4389
        %v4422 = vmax.f32 %v3972, %v4390
        %v4423 = vmax.f32 %v3973, %v4391
        %v4424 = vmax.f32 %v3974, %v4392
        %v4425 = vmax.f32 %v3975, %v4393
        %v4426 = vmax.f32 %v3976, %v4394
        %v4427 = vmax.f32 %v3977, %v4395
        %v4428 = vmax.f32 %v3978, %v4396
        %s4429 = scalar_lea.vmem %s1234, 896 [#allocation2]
        %v4430 = vld [vmem:[%s4429] sm:$0xf]
        %v4431 = vld [vmem:[%s4429 + $0x4] sm:$0xf]
        %v4432 = vld [vmem:[%s4429 + $0x8] sm:$0xf]
        %v4433 = vld [vmem:[%s4429 + $0xc] sm:$0xf]
        %v4434 = vld [vmem:[%s4429 + $0x10] sm:$0xf]
        %v4435 = vld [vmem:[%s4429 + $0x14] sm:$0xf]
        %v4436 = vld [vmem:[%s4429 + $0x18] sm:$0xf]
        %v4437 = vld [vmem:[%s4429 + $0x1c] sm:$0xf]
        %v4438 = vld [vmem:[%s4429 + $0x20] sm:$0xf]
        %v4439 = vld [vmem:[%s4429 + $0x24] sm:$0xf]
        %v4440 = vld [vmem:[%s4429 + $0x28] sm:$0xf]
        %v4441 = vld [vmem:[%s4429 + $0x2c] sm:$0xf]
        %v4442 = vld [vmem:[%s4429 + $0x30] sm:$0xf]
        %v4443 = vld [vmem:[%s4429 + $0x34] sm:$0xf]
        %v4444 = vld [vmem:[%s4429 + $0x38] sm:$0xf]
        %v4445 = vld [vmem:[%s4429 + $0x3c] sm:$0xf]
        %v4446 = vld [vmem:[%s4429 + $0x40] sm:$0xf]
        %v4447 = vld [vmem:[%s4429 + $0x44] sm:$0xf]
        %v4448 = vld [vmem:[%s4429 + $0x48] sm:$0xf]
        %v4449 = vld [vmem:[%s4429 + $0x4c] sm:$0xf]
        %v4450 = vld [vmem:[%s4429 + $0x50] sm:$0xf]
        %v4451 = vld [vmem:[%s4429 + $0x54] sm:$0xf]
        %v4452 = vld [vmem:[%s4429 + $0x58] sm:$0xf]
        %v4453 = vld [vmem:[%s4429 + $0x5c] sm:$0xf]
        %v4454 = vld [vmem:[%s4429 + $0x60] sm:$0xf]
        %v4455 = vld [vmem:[%s4429 + $0x64] sm:$0xf]
        %v4456 = vld [vmem:[%s4429 + $0x68] sm:$0xf]
        %v4457 = vld [vmem:[%s4429 + $0x6c] sm:$0xf]
        %v4458 = vld [vmem:[%s4429 + $0x70] sm:$0xf]
        %v4459 = vld [vmem:[%s4429 + $0x74] sm:$0xf]
        %v4460 = vld [vmem:[%s4429 + $0x78] sm:$0xf]
        %v4461 = vld [vmem:[%s4429 + $0x7c] sm:$0xf]
        %v4494 = vunpack.c.l.b16 %v4430
        %v4495 = vunpack.c.l.b16 %v4431
        %v4496 = vunpack.c.l.b16 %v4432
        %v4497 = vunpack.c.l.b16 %v4433
        %v4498 = vunpack.c.l.b16 %v4434
        %v4499 = vunpack.c.l.b16 %v4435
        %v4500 = vunpack.c.l.b16 %v4436
        %v4501 = vunpack.c.l.b16 %v4437
        %v4502 = vunpack.c.l.b16 %v4438
        %v4503 = vunpack.c.l.b16 %v4439
        %v4504 = vunpack.c.l.b16 %v4440
        %v4505 = vunpack.c.l.b16 %v4441
        %v4506 = vunpack.c.l.b16 %v4442
        %v4507 = vunpack.c.l.b16 %v4443
        %v4508 = vunpack.c.l.b16 %v4444
        %v4509 = vunpack.c.l.b16 %v4445
        %v4510 = vunpack.c.l.b16 %v4446
        %v4511 = vunpack.c.l.b16 %v4447
        %v4512 = vunpack.c.l.b16 %v4448
        %v4513 = vunpack.c.l.b16 %v4449
        %v4514 = vunpack.c.l.b16 %v4450
        %v4515 = vunpack.c.l.b16 %v4451
        %v4516 = vunpack.c.l.b16 %v4452
        %v4517 = vunpack.c.l.b16 %v4453
        %v4518 = vunpack.c.l.b16 %v4454
        %v4519 = vunpack.c.l.b16 %v4455
        %v4520 = vunpack.c.l.b16 %v4456
        %v4521 = vunpack.c.l.b16 %v4457
        %v4522 = vunpack.c.l.b16 %v4458
        %v4523 = vunpack.c.l.b16 %v4459
        %v4524 = vunpack.c.l.b16 %v4460
        %v4525 = vunpack.c.l.b16 %v4461
        %v4526 = vpack.c.b16 %v4495, %v4494
        %v4527 = vpack.c.b16 %v4497, %v4496
        %v4528 = vpack.c.b16 %v4499, %v4498
        %v4529 = vpack.c.b16 %v4501, %v4500
        %v4530 = vpack.c.b16 %v4503, %v4502
        %v4531 = vpack.c.b16 %v4505, %v4504
        %v4532 = vpack.c.b16 %v4507, %v4506
        %v4533 = vpack.c.b16 %v4509, %v4508
        %v4534 = vpack.c.b16 %v4511, %v4510
        %v4535 = vpack.c.b16 %v4513, %v4512
        %v4536 = vpack.c.b16 %v4515, %v4514
        %v4537 = vpack.c.b16 %v4517, %v4516
        %v4538 = vpack.c.b16 %v4519, %v4518
        %v4539 = vpack.c.b16 %v4521, %v4520
        %v4540 = vpack.c.b16 %v4523, %v4522
        %v4541 = vpack.c.b16 %v4525, %v4524
        %v4543 = vsel %vm1407, %v4526, 0
        %v4546 = vsel %vm1407, %v4527, 0
        %v4549 = vsel %vm1407, %v4528, 0
        %v4552 = vsel %vm1407, %v4529, 0
        %v4555 = vsel %vm1407, %v4530, 0
        %v4558 = vsel %vm1407, %v4531, 0
        %v4561 = vsel %vm1407, %v4532, 0
        %v4564 = vsel %vm1407, %v4533, 0
        %v4567 = vsel %vm1407, %v4534, 0
        %v4570 = vsel %vm1407, %v4535, 0
        %v4573 = vsel %vm1407, %v4536, 0
        %v4576 = vsel %vm1407, %v4537, 0
        %v4579 = vsel %vm1407, %v4538, 0
        %v4582 = vsel %vm1407, %v4539, 0
        %v4585 = vsel %vm1407, %v4540, 0
        %v4588 = vsel %vm1407, %v4541, 0
        %4590 = vmatprep.subr.bf16.mxu0 0
        %4591 = vmatpush1.bf16.msra.mxu0 0
        %4592 = vmatprep.subr.bf16.mxu0 0
        %4593 = vmatpush1.bf16.msra.mxu0 0
        %4594 = vmatprep.subr.bf16.mxu0 0
        %4595 = vmatpush1.bf16.msra.mxu0 0
        %4596 = vmatprep.subr.bf16.mxu0 0
        %4597 = vmatpush1.bf16.msra.mxu0 0
        %4598 = vmatprep.subr.bf16.mxu0 0
        %4599 = vmatpush1.bf16.msra.mxu0 %v1458
        %4600 = vmatprep.subr.bf16.mxu0 0
        %4601 = vmatpush1.bf16.msra.mxu0 %v1402
        %4602 = vmatprep.subr.bf16.mxu0 0
        %4603 = vmatpush1.bf16.msra.mxu0 %v1401
        %4604 = vmatprep.subr.bf16.mxu0 0
        %4605 = vmatpush1.bf16.msra.mxu0 %v1400
        %4606 = vmatprep.subr.bf16.mxu0 0
        %4607 = vmatpush2.bf16.msra.mxu0 0
        %4608 = vmatprep.subr.bf16.mxu0 0
        %4609 = vmatpush2.bf16.msra.mxu0 0
        %4610 = vmatprep.subr.bf16.mxu0 0
        %4611 = vmatpush2.bf16.msra.mxu0 0
        %4612 = vmatprep.subr.bf16.mxu0 0
        %4613 = vmatpush2.bf16.msra.mxu0 0
        %4614 = vmatprep.subr.bf16.mxu0 0
        %4615 = vmatpush2.bf16.msra.mxu0 0
        %4616 = vmatprep.subr.bf16.mxu0 0
        %4617 = vmatpush2.bf16.msra.mxu0 0
        %4618 = vmatprep.subr.bf16.mxu0 0
        %4619 = vmatpush2.bf16.msra.mxu0 0
        %4620 = vmatprep.subr.bf16.mxu0 0
        %4621 = vmatpush2.bf16.msra.mxu0 0
        %4622 = vmatprep.mubr.bf16.mxu0 0
        %4623 = vmatmul.mubr.bf16.gmra.mxu0 %v4543
        %v4624 = vpop.f32.mrf.mxu0
        %v4625 = vadd.f32 0.0, %v4624
        %v4626 = vpop.f32.mrf.mxu0
        %v4627 = vpop.f32.mrf.mxu0
        %v4628 = vadd.f32 0.0, %v4627
        %v4629 = vpop.f32.mrf.mxu0
        %4630 = vmatprep.mubr.bf16.mxu0 0
        %4631 = vmatmul.mubr.bf16.gmra.mxu0 %v4546
        %v4632 = vpop.f32.mrf.mxu0
        %v4633 = vadd.f32 0.0, %v4632
        %v4634 = vpop.f32.mrf.mxu0
        %v4635 = vpop.f32.mrf.mxu0
        %v4636 = vadd.f32 0.0, %v4635
        %v4637 = vpop.f32.mrf.mxu0
        %4638 = vmatprep.mubr.bf16.mxu0 0
        %4639 = vmatmul.mubr.bf16.gmra.mxu0 %v4549
        %v4640 = vpop.f32.mrf.mxu0
        %v4641 = vadd.f32 0.0, %v4640
        %v4642 = vpop.f32.mrf.mxu0
        %v4643 = vpop.f32.mrf.mxu0
        %v4644 = vadd.f32 0.0, %v4643
        %v4645 = vpop.f32.mrf.mxu0
        %4646 = vmatprep.mubr.bf16.mxu0 0
        %4647 = vmatmul.mubr.bf16.gmra.mxu0 %v4552
        %v4648 = vpop.f32.mrf.mxu0
        %v4649 = vadd.f32 0.0, %v4648
        %v4650 = vpop.f32.mrf.mxu0
        %v4651 = vpop.f32.mrf.mxu0
        %v4652 = vadd.f32 0.0, %v4651
        %v4653 = vpop.f32.mrf.mxu0
        %4654 = vmatprep.mubr.bf16.mxu0 0
        %4655 = vmatmul.mubr.bf16.gmra.mxu0 %v4555
        %v4656 = vpop.f32.mrf.mxu0
        %v4657 = vadd.f32 0.0, %v4656
        %v4658 = vpop.f32.mrf.mxu0
        %v4659 = vpop.f32.mrf.mxu0
        %v4660 = vadd.f32 0.0, %v4659
        %v4661 = vpop.f32.mrf.mxu0
        %4662 = vmatprep.mubr.bf16.mxu0 0
        %4663 = vmatmul.mubr.bf16.gmra.mxu0 %v4558
        %v4664 = vpop.f32.mrf.mxu0
        %v4665 = vadd.f32 0.0, %v4664
        %v4666 = vpop.f32.mrf.mxu0
        %v4667 = vpop.f32.mrf.mxu0
        %v4668 = vadd.f32 0.0, %v4667
        %v4669 = vpop.f32.mrf.mxu0
        %4670 = vmatprep.mubr.bf16.mxu0 0
        %4671 = vmatmul.mubr.bf16.gmra.mxu0 %v4561
        %v4672 = vpop.f32.mrf.mxu0
        %v4673 = vadd.f32 0.0, %v4672
        %v4674 = vpop.f32.mrf.mxu0
        %v4675 = vpop.f32.mrf.mxu0
        %v4676 = vadd.f32 0.0, %v4675
        %v4677 = vpop.f32.mrf.mxu0
        %4678 = vmatprep.mubr.bf16.mxu0 0
        %4679 = vmatmul.mubr.bf16.gmra.mxu0 %v4564
        %v4680 = vpop.f32.mrf.mxu0
        %v4681 = vadd.f32 0.0, %v4680
        %v4682 = vpop.f32.mrf.mxu0
        %v4683 = vpop.f32.mrf.mxu0
        %v4684 = vadd.f32 0.0, %v4683
        %v4685 = vpop.f32.mrf.mxu0
        %4686 = vmatprep.mubr.bf16.mxu0 0
        %4687 = vmatmul.mubr.bf16.gmra.mxu0 %v4567
        %v4688 = vpop.f32.mrf.mxu0
        %v4689 = vadd.f32 0.0, %v4688
        %v4690 = vpop.f32.mrf.mxu0
        %v4691 = vpop.f32.mrf.mxu0
        %v4692 = vadd.f32 0.0, %v4691
        %v4693 = vpop.f32.mrf.mxu0
        %4694 = vmatprep.mubr.bf16.mxu0 0
        %4695 = vmatmul.mubr.bf16.gmra.mxu0 %v4570
        %v4696 = vpop.f32.mrf.mxu0
        %v4697 = vadd.f32 0.0, %v4696
        %v4698 = vpop.f32.mrf.mxu0
        %v4699 = vpop.f32.mrf.mxu0
        %v4700 = vadd.f32 0.0, %v4699
        %v4701 = vpop.f32.mrf.mxu0
        %4702 = vmatprep.mubr.bf16.mxu0 0
        %4703 = vmatmul.mubr.bf16.gmra.mxu0 %v4573
        %v4704 = vpop.f32.mrf.mxu0
        %v4705 = vadd.f32 0.0, %v4704
        %v4706 = vpop.f32.mrf.mxu0
        %v4707 = vpop.f32.mrf.mxu0
        %v4708 = vadd.f32 0.0, %v4707
        %v4709 = vpop.f32.mrf.mxu0
        %4710 = vmatprep.mubr.bf16.mxu0 0
        %4711 = vmatmul.mubr.bf16.gmra.mxu0 %v4576
        %v4712 = vpop.f32.mrf.mxu0
        %v4713 = vadd.f32 0.0, %v4712
        %v4714 = vpop.f32.mrf.mxu0
        %v4715 = vpop.f32.mrf.mxu0
        %v4716 = vadd.f32 0.0, %v4715
        %v4717 = vpop.f32.mrf.mxu0
        %4718 = vmatprep.mubr.bf16.mxu0 0
        %4719 = vmatmul.mubr.bf16.gmra.mxu0 %v4579
        %v4720 = vpop.f32.mrf.mxu0
        %v4721 = vadd.f32 0.0, %v4720
        %v4722 = vpop.f32.mrf.mxu0
        %v4723 = vpop.f32.mrf.mxu0
        %v4724 = vadd.f32 0.0, %v4723
        %v4725 = vpop.f32.mrf.mxu0
        %4726 = vmatprep.mubr.bf16.mxu0 0
        %4727 = vmatmul.mubr.bf16.gmra.mxu0 %v4582
        %v4728 = vpop.f32.mrf.mxu0
        %v4729 = vadd.f32 0.0, %v4728
        %v4730 = vpop.f32.mrf.mxu0
        %v4731 = vpop.f32.mrf.mxu0
        %v4732 = vadd.f32 0.0, %v4731
        %v4733 = vpop.f32.mrf.mxu0
        %4734 = vmatprep.mubr.bf16.mxu0 0
        %4735 = vmatmul.mubr.bf16.gmra.mxu0 %v4585
        %v4736 = vpop.f32.mrf.mxu0
        %v4737 = vadd.f32 0.0, %v4736
        %v4738 = vpop.f32.mrf.mxu0
        %v4739 = vpop.f32.mrf.mxu0
        %v4740 = vadd.f32 0.0, %v4739
        %v4741 = vpop.f32.mrf.mxu0
        %4742 = vmatprep.mubr.bf16.mxu0 0
        %4743 = vmatmul.mubr.bf16.gmra.mxu0 %v4588
        %v4744 = vpop.f32.mrf.mxu0
        %v4745 = vadd.f32 0.0, %v4744
        %v4746 = vpop.f32.mrf.mxu0
        %v4747 = vpop.f32.mrf.mxu0
        %v4748 = vadd.f32 0.0, %v4747
        %v4749 = vpop.f32.mrf.mxu0
        %4750 = vdwg.mxu0
        %v4751 = vmul.f32 %v4625, %v1625
        %v4752 = vmul.f32 %v4628, %v1625
        %v4753 = vmul.f32 %v4633, %v1625
        %v4754 = vmul.f32 %v4636, %v1625
        %v4755 = vmul.f32 %v4641, %v1625
        %v4756 = vmul.f32 %v4644, %v1625
        %v4757 = vmul.f32 %v4649, %v1625
        %v4758 = vmul.f32 %v4652, %v1625
        %v4759 = vmul.f32 %v4657, %v1625
        %v4760 = vmul.f32 %v4660, %v1625
        %v4761 = vmul.f32 %v4665, %v1625
        %v4762 = vmul.f32 %v4668, %v1625
        %v4763 = vmul.f32 %v4673, %v1625
        %v4764 = vmul.f32 %v4676, %v1625
        %v4765 = vmul.f32 %v4681, %v1625
        %v4766 = vmul.f32 %v4684, %v1625
        %v4767 = vmul.f32 %v4689, %v1625
        %v4768 = vmul.f32 %v4692, %v1625
        %v4769 = vmul.f32 %v4697, %v1625
        %v4770 = vmul.f32 %v4700, %v1625
        %v4771 = vmul.f32 %v4705, %v1625
        %v4772 = vmul.f32 %v4708, %v1625
        %v4773 = vmul.f32 %v4713, %v1625
        %v4774 = vmul.f32 %v4716, %v1625
        %v4775 = vmul.f32 %v4721, %v1625
        %v4776 = vmul.f32 %v4724, %v1625
        %v4777 = vmul.f32 %v4729, %v1625
        %v4778 = vmul.f32 %v4732, %v1625
        %v4779 = vmul.f32 %v4737, %v1625
        %v4780 = vmul.f32 %v4740, %v1625
        %v4781 = vmul.f32 %v4745, %v1625
        %v4782 = vmul.f32 %v4748, %v1625
        %v4783 = vadd.f32 %v4751, %v1663
        %v4784 = vadd.f32 %v4752, %v1663
        %v4785 = vadd.f32 %v4753, %v1663
        %v4786 = vadd.f32 %v4754, %v1663
        %v4787 = vadd.f32 %v4755, %v1663
        %v4788 = vadd.f32 %v4756, %v1663
        %v4789 = vadd.f32 %v4757, %v1663
        %v4790 = vadd.f32 %v4758, %v1663
        %v4791 = vadd.f32 %v4759, %v1663
        %v4792 = vadd.f32 %v4760, %v1663
        %v4793 = vadd.f32 %v4761, %v1663
        %v4794 = vadd.f32 %v4762, %v1663
        %v4795 = vadd.f32 %v4763, %v1663
        %v4796 = vadd.f32 %v4764, %v1663
        %v4797 = vadd.f32 %v4765, %v1663
        %v4798 = vadd.f32 %v4766, %v1663
        %v4799 = vadd.f32 %v4767, %v1663
        %v4800 = vadd.f32 %v4768, %v1663
        %v4801 = vadd.f32 %v4769, %v1663
        %v4802 = vadd.f32 %v4770, %v1663
        %v4803 = vadd.f32 %v4771, %v1663
        %v4804 = vadd.f32 %v4772, %v1663
        %v4805 = vadd.f32 %v4773, %v1663
        %v4806 = vadd.f32 %v4774, %v1663
        %v4807 = vadd.f32 %v4775, %v1663
        %v4808 = vadd.f32 %v4776, %v1663
        %v4809 = vadd.f32 %v4777, %v1663
        %v4810 = vadd.f32 %v4778, %v1663
        %v4811 = vadd.f32 %v4779, %v1663
        %v4812 = vadd.f32 %v4780, %v1663
        %v4813 = vadd.f32 %v4781, %v1663
        %v4814 = vadd.f32 %v4782, %v1663
        %v4815 = vmax.f32 %v4783, 0.0
        %v4816 = vmax.f32 %v4784, 0.0
        %v4817 = vmax.f32 %v4785, 0.0
        %v4818 = vmax.f32 %v4786, 0.0
        %v4819 = vmax.f32 %v4787, 0.0
        %v4820 = vmax.f32 %v4788, 0.0
        %v4821 = vmax.f32 %v4789, 0.0
        %v4822 = vmax.f32 %v4790, 0.0
        %v4823 = vmax.f32 %v4791, 0.0
        %v4824 = vmax.f32 %v4792, 0.0
        %v4825 = vmax.f32 %v4793, 0.0
        %v4826 = vmax.f32 %v4794, 0.0
        %v4827 = vmax.f32 %v4795, 0.0
        %v4828 = vmax.f32 %v4796, 0.0
        %v4829 = vmax.f32 %v4797, 0.0
        %v4830 = vmax.f32 %v4798, 0.0
        %v4831 = vmax.f32 %v4799, 0.0
        %v4832 = vmax.f32 %v4800, 0.0
        %v4833 = vmax.f32 %v4801, 0.0
        %v4834 = vmax.f32 %v4802, 0.0
        %v4835 = vmax.f32 %v4803, 0.0
        %v4836 = vmax.f32 %v4804, 0.0
        %v4837 = vmax.f32 %v4805, 0.0
        %v4838 = vmax.f32 %v4806, 0.0
        %v4839 = vmax.f32 %v4807, 0.0
        %v4840 = vmax.f32 %v4808, 0.0
        %v4841 = vmax.f32 %v4809, 0.0
        %v4842 = vmax.f32 %v4810, 0.0
        %v4843 = vmax.f32 %v4811, 0.0
        %v4844 = vmax.f32 %v4812, 0.0
        %v4845 = vmax.f32 %v4813, 0.0
        %v4846 = vmax.f32 %v4814, 0.0
        %v4847 = vmax.f32 %v4397, %v4815
        %v4848 = vmax.f32 %v4398, %v4816
        %v4849 = vmax.f32 %v4399, %v4817
        %v4850 = vmax.f32 %v4400, %v4818
        %v4851 = vmax.f32 %v4401, %v4819
        %v4852 = vmax.f32 %v4402, %v4820
        %v4853 = vmax.f32 %v4403, %v4821
        %v4854 = vmax.f32 %v4404, %v4822
        %v4855 = vmax.f32 %v4405, %v4823
        %v4856 = vmax.f32 %v4406, %v4824
        %v4857 = vmax.f32 %v4407, %v4825
        %v4858 = vmax.f32 %v4408, %v4826
        %v4859 = vmax.f32 %v4409, %v4827
        %v4860 = vmax.f32 %v4410, %v4828
        %v4861 = vmax.f32 %v4411, %v4829
        %v4862 = vmax.f32 %v4412, %v4830
        %v4863 = vmax.f32 %v4413, %v4831
        %v4864 = vmax.f32 %v4414, %v4832
        %v4865 = vmax.f32 %v4415, %v4833
        %v4866 = vmax.f32 %v4416, %v4834
        %v4867 = vmax.f32 %v4417, %v4835
        %v4868 = vmax.f32 %v4418, %v4836
        %v4869 = vmax.f32 %v4419, %v4837
        %v4870 = vmax.f32 %v4420, %v4838
        %v4871 = vmax.f32 %v4421, %v4839
        %v4872 = vmax.f32 %v4422, %v4840
        %v4873 = vmax.f32 %v4423, %v4841
        %v4874 = vmax.f32 %v4424, %v4842
        %v4875 = vmax.f32 %v4425, %v4843
        %v4876 = vmax.f32 %v4426, %v4844
        %v4877 = vmax.f32 %v4427, %v4845
        %v4878 = vmax.f32 %v4428, %v4846
        %vm4879 = vcmask 261120
        %4880 = vst.msk [vmem:[%s1262] sm:$0xff] %vm4879, %v4847
        %4881 = vst.msk [vmem:[%s1262 + $0x8] sm:$0xff] %vm4879, %v4848
        %4882 = vst.msk [vmem:[%s1262 + $0x10] sm:$0xff] %vm4879, %v4849
        %4883 = vst.msk [vmem:[%s1262 + $0x18] sm:$0xff] %vm4879, %v4850
        %4884 = vst.msk [vmem:[%s1262 + $0x20] sm:$0xff] %vm4879, %v4851
        %4885 = vst.msk [vmem:[%s1262 + $0x28] sm:$0xff] %vm4879, %v4852
        %4886 = vst.msk [vmem:[%s1262 + $0x30] sm:$0xff] %vm4879, %v4853
        %4887 = vst.msk [vmem:[%s1262 + $0x38] sm:$0xff] %vm4879, %v4854
        %4888 = vst.msk [vmem:[%s1262 + $0x40] sm:$0xff] %vm4879, %v4855
        %4889 = vst.msk [vmem:[%s1262 + $0x48] sm:$0xff] %vm4879, %v4856
        %4890 = vst.msk [vmem:[%s1262 + $0x50] sm:$0xff] %vm4879, %v4857
        %4891 = vst.msk [vmem:[%s1262 + $0x58] sm:$0xff] %vm4879, %v4858
        %4892 = vst.msk [vmem:[%s1262 + $0x60] sm:$0xff] %vm4879, %v4859
        %4893 = vst.msk [vmem:[%s1262 + $0x68] sm:$0xff] %vm4879, %v4860
        %4894 = vst.msk [vmem:[%s1262 + $0x70] sm:$0xff] %vm4879, %v4861
        %4895 = vst.msk [vmem:[%s1262 + $0x78] sm:$0xff] %vm4879, %v4862
        %4896 = vst.msk [vmem:[%s1262 + $0x80] sm:$0xff] %vm4879, %v4863
        %4897 = vst.msk [vmem:[%s1262 + $0x88] sm:$0xff] %vm4879, %v4864
        %4898 = vst.msk [vmem:[%s1262 + $0x90] sm:$0xff] %vm4879, %v4865
        %4899 = vst.msk [vmem:[%s1262 + $0x98] sm:$0xff] %vm4879, %v4866
        %4900 = vst.msk [vmem:[%s1262 + $0xa0] sm:$0xff] %vm4879, %v4867
        %4901 = vst.msk [vmem:[%s1262 + $0xa8] sm:$0xff] %vm4879, %v4868
        %4902 = vst.msk [vmem:[%s1262 + $0xb0] sm:$0xff] %vm4879, %v4869
        %4903 = vst.msk [vmem:[%s1262 + $0xb8] sm:$0xff] %vm4879, %v4870
        %4904 = vst.msk [vmem:[%s1262 + $0xc0] sm:$0xff] %vm4879, %v4871
        %4905 = vst.msk [vmem:[%s1262 + $0xc8] sm:$0xff] %vm4879, %v4872
        %4906 = vst.msk [vmem:[%s1262 + $0xd0] sm:$0xff] %vm4879, %v4873
        %4907 = vst.msk [vmem:[%s1262 + $0xd8] sm:$0xff] %vm4879, %v4874
        %4908 = vst.msk [vmem:[%s1262 + $0xe0] sm:$0xff] %vm4879, %v4875
        %4909 = vst.msk [vmem:[%s1262 + $0xe8] sm:$0xff] %vm4879, %v4876
        %4910 = vst.msk [vmem:[%s1262 + $0xf0] sm:$0xff] %vm4879, %v4877
        %4911 = vst.msk [vmem:[%s1262 + $0xf8] sm:$0xff] %vm4879, %v4878
        %s4912 = smul.u32 32, %s15
        %p4913 = scmp.lt.s32.totalorder %s4912, 63
        %s4914 = scalar_select %p4913, %s4912, 63
        %s4915 = smul.addr %s4914, 8
        %s4916 = scalar_lea.vmem %s4, %s4915
        // Predicated region
        $region78: #{tpu_custom_call.1} parent=72 // pred_check
          %p4917 = pneg %p122
        $region79: #{tpu_custom_call.1} parent=72 // pred_check_branch
          %4919 = sbr.rel (%p4917) target = $region81
        $region80: #{tpu_custom_call.1} parent=72 // pred_region
          %s4920 = smul.u32 32, %s15
        $region81: #{tpu_custom_call.1} parent=72 // pred_fallthru
          _
      $region73: #{tpu_custom_call.1} parent=5 // pred_fallthru
        _
      %p4921 = scmp.le.s32.totalorder 2, %s10
      // Predicated region
      $region82: #{tpu_custom_call.1} parent=5 // pred_check
        %p4922 = pneg %p4921
      $region83: #{tpu_custom_call.1} parent=5 // pred_check_branch
        %4924 = sbr.rel (%p4922) target = $region85
      $region84: #{tpu_custom_call.1} parent=5 // pred_region
        %s4925 = ssub.s32 %s10, 2
        // Predicated region
        $region86: #{tpu_custom_call.1} parent=84 // pred_check
          %p4926 = pneg %p128
        $region87: #{tpu_custom_call.1} parent=84 // pred_check_branch
          %4928 = sbr.rel (%p4926) target = $region89
        $region88: #{tpu_custom_call.1} parent=84 // pred_region
          %s4929 = smul.u32 32, %s16
          %p4930 = scmp.lt.s32.totalorder %s4929, 63
          %s4931 = scalar_select %p4930, %s4929, 63
          %s4932 = smul.addr %s4931, 8
          %s4933 = scalar_lea.vmem %s4, %s4932
        $region89: #{tpu_custom_call.1} parent=84 // pred_fallthru
          _
      $region85: #{tpu_custom_call.1} parent=5 // pred_fallthru
        _
    $region6: #{tpu_custom_call.1} parent=1 // loop_footer
      %s14 = sadd.s32 1, %s10
    $region7: #{tpu_custom_call.1} parent=1 // loop_footer_branch
      %9 = sbr.rel target = $region3
    $region8: #{tpu_custom_call.1} parent=1 // loop_exit
      _

</llo_original>
